<compile_context>
chip_gen: v7x
topology: tpu7x:2x2x1
jax: 0.10.0
libtpu: 0.0.40
codegen_flags: <defaults>
</compile_context>

<pallas_src>
import functools

import jax
import jax.numpy as jnp
from jax.experimental import pallas as pl
from jax.experimental.pallas import tpu as pltpu


# -----------------------------------------------------------------------------
# Pallas kernel: single invocation, fully-unrolled time recurrence.
# -----------------------------------------------------------------------------
def team_model2_kernel(gate_ref, lin_ref, sc_ref, result_ref, hp_s, ht_s,
                       *, T, P, F, TGT):
    TP = T * P
    bf16 = jnp.bfloat16

    def mm(a, b):
        # b is already bf16 (weight slabs); cast the activation at the dot only,
        # accumulate in f32 on the MXU.
        return jnp.dot(a.astype(bf16), b, preferred_element_type=jnp.float32)

    def lstm_cell(gates, c_prev):
        # i/f/o gate pre-activations were pre-scaled by 0.5 in the wrapper, so
        # sigmoid(z) == 0.5*tanh(z/2)+0.5 needs only ONE tanh over the 4F lanes.
        th = jnp.tanh(gates)
        sg = 0.5 * th + 0.5
        i = sg[:, 0 * F:1 * F]
        f = sg[:, 1 * F:2 * F]
        g = th[:, 2 * F:3 * F]          # g columns were NOT pre-scaled
        o = sg[:, 3 * F:4 * F]
        c = f * c_prev + i * g
        h = o * jnp.tanh(c)
        return h, c

    # ---- slab slices: LSTM gate weights (bf16, i/f/o columns pre-scaled) ----
    p_wih = gate_ref[0 * F:1 * F, :]
    p_whh = gate_ref[1 * F:2 * F, :]
    t_wih = gate_ref[2 * F:3 * F, :]
    t_whh = gate_ref[3 * F:4 * F, :]

    # ---- slab slices: input + F-wide linear weights (bf16) ----
    r = 0
    xb = lin_ref[r:r + TP, :]; r += TP
    w1t = lin_ref[r:r + F, :]; r += F
    w2t = lin_ref[r:r + F, :]; r += F
    w3t = lin_ref[r:r + F, :]; r += F
    wtp_top = lin_ref[r:r + F, :]; r += F
    wtp_bot = lin_ref[r:r + F, :]; r += F

    # ---- slab slices: f32 biases + initial states ----
    p_bias = sc_ref[0:1, :]             # (1, 4F), i/f/o lanes pre-scaled
    t_bias = sc_ref[1:2, :]             # (1, 4F), i/f/o lanes pre-scaled
    b1 = sc_ref[2:3, 0:F]
    b2 = sc_ref[3:4, 0:F]
    b3 = sc_ref[4:5, 0:F]
    btp = sc_ref[5:6, 0:F]
    h_p = sc_ref[8:10, 0:F]             # (P, F)
    c_p = sc_ref[10:12, 0:F]
    h_t = sc_ref[12:13, 0:F]            # (1, F)
    c_t = sc_ref[13:14, 0:F]

    # ---- hoisted non-recurrent prefix (batched over all T*P rows) ----
    p1 = jnp.maximum(mm(xb, w1t) + b1, 0.0)        # dropout(p=0) == identity
    p2 = jnp.maximum(mm(p1, w2t) + b2, 0.0)
    p3 = jnp.maximum(mm(p2, w3t) + b3, 0.0)
    pg_x = mm(p3, p_wih) + p_bias                  # (TP, 4F)
    # pre-split per-step tiles so the recurrence only does (add after h@Whh dot)
    pg_tiles = [pg_x[t * P:(t + 1) * P, :] for t in range(T)]

    # ---- fully unrolled serial recurrence (T is small & static) ----
    for t in range(T):
        # team h@Whh depends only on the previous h_t -> issue early so it can
        # overlap the personal cell on the MXU.
        tg_h = mm(h_t, t_whh)                                      # (1, 4F)

        # personal LSTM cell
        pg = pg_tiles[t] + mm(h_p, p_whh)                          # (P, 4F)
        h_p, c_p = lstm_cell(pg, c_p)
        hp_s[t * P:(t + 1) * P, :] = h_p                           # off-chain store

        # team_pool: split dots instead of a lane-concat of the two persons.
        pooled = jnp.maximum(
            mm(h_p[0:1, :], wtp_top) + mm(h_p[1:2, :], wtp_bot) + btp, 0.0)

        # team LSTM cell
        tg = mm(pooled, t_wih) + tg_h + t_bias                     # (1, 4F)
        h_t, c_t = lstm_cell(tg, c_t)
        ht_s[t * P:(t + 1) * P, :] = jnp.broadcast_to(h_t, (P, F)) # off-chain store

    # ---- deferred tail: combine + out, batched over all rows ----
    wc_top = lin_ref[r:r + F, :]; r += F
    wc_bot = lin_ref[r:r + F, :]; r += F
    wo_t = lin_ref[r:r + F, :]; r += F             # lane-padded to F (zeros past TGT)
    bc = sc_ref[6:7, 0:F]
    bo = sc_ref[7:8, 0:F]                          # lanes TGT:F are zero

    comb = jnp.maximum(mm(hp_s[...], wc_top) + mm(ht_s[...], wc_bot) + bc, 0.0)
    res = jnp.maximum(mm(comb, wo_t) + bo, 0.0)    # (TP, F); lanes TGT:F are zero
    result_ref[...] = res[:, 0:TGT]


# -----------------------------------------------------------------------------
# Wrapper: slab packing / weight pre-scaling (free, one-time wrapper work).
# -----------------------------------------------------------------------------
def team_model2_pallas(x, prm):
    T, P, F = x.shape
    assert P == 2, "TeamModel2 semantics require person_count == 2"
    TGT = prm["Wo"].shape[0]
    TP = T * P
    f32, bf16 = jnp.float32, jnp.bfloat16

    # sigmoid-elimination: scale i/f/o gate columns (PyTorch order i,f,g,o) by 0.5
    gate_scale = jnp.concatenate([
        jnp.full((2 * F,), 0.5, f32),   # i, f
        jnp.ones((F,), f32),            # g
        jnp.full((F,), 0.5, f32),       # o
    ])

    def gate_w(w):                      # (4F, in) torch weight -> scaled (in, 4F)
        return w.T * gate_scale[None, :]

    # Slab 1: 4F-wide LSTM weights (bf16, 128x128)
    gate_slab = jnp.concatenate([
        gate_w(prm["p_Wih"]), gate_w(prm["p_Whh"]),
        gate_w(prm["t_Wih"]), gate_w(prm["t_Whh"]),
    ], axis=0).astype(bf16)

    # Slab 2: input + all F-wide linear weights (bf16, (TP+8F) x F)
    WtpT = prm["Wtp"].T                                   # (2F, F)
    WcT = prm["Wc"].T                                     # (2F, F)
    WoT = jnp.zeros((F, F), f32).at[:, :TGT].set(prm["Wo"].T)   # lane-pad to F
    lin_slab = jnp.concatenate([
        x.reshape(TP, F),
        prm["W1"].T, prm["W2"].T, prm["W3"].T,
        WtpT[:F], WtpT[F:], WcT[:F], WcT[F:], WoT,
    ], axis=0).astype(bf16)

    # Slab 3: f32 biases + initial states (16 x 4F)
    def pad_lanes(a, w=4 * F):
        return jnp.pad(a, ((0, 0), (0, w - a.shape[-1])))

    f32_slab = jnp.concatenate([
        (prm["p_bih"] + prm["p_bhh"]).reshape(1, 4 * F) * gate_scale[None, :],
        (prm["t_bih"] + prm["t_bhh"]).reshape(1, 4 * F) * gate_scale[None, :],
        pad_lanes(prm["b1"].reshape(1, F)),
        pad_lanes(prm["b2"].reshape(1, F)),
        pad_lanes(prm["b3"].reshape(1, F)),
        pad_lanes(prm["btp"].reshape(1, F)),
        pad_lanes(prm["bc"].reshape(1, F)),
        pad_lanes(prm["bo"].reshape(1, TGT)),
        pad_lanes(prm["h0"]), pad_lanes(prm["c0"]),
        pad_lanes(prm["th0"]), pad_lanes(prm["tc0"]),
        jnp.zeros((2, 4 * F), f32),
    ], axis=0).astype(f32)

    vmem = pl.BlockSpec(memory_space=pltpu.MemorySpace.VMEM)
    kernel = functools.partial(team_model2_kernel, T=T, P=P, F=F, TGT=TGT)
    out_flat = pl.pallas_call(
        kernel,
        out_shape=jax.ShapeDtypeStruct((TP, TGT), f32),
        in_specs=[vmem, vmem, vmem],
        out_specs=vmem,
        scratch_shapes=[pltpu.VMEM((TP, F), f32),    # per-step personal h
                        pltpu.VMEM((TP, F), f32)],   # per-step team h (per person)
    )(gate_slab, lin_slab, f32_slab)
    return out_flat.reshape(T, P, TGT)


# -----------------------------------------------------------------------------
# Deterministic parameter init (PyTorch-style shapes; synthetic values).
# -----------------------------------------------------------------------------
def init_params(key, P, F, TGT):
    ks = list(jax.random.split(key, 24))
    it = iter(ks)

    def lin(n_in, n_out):
        b = float(n_in) ** -0.5
        W = jax.random.uniform(next(it), (n_out, n_in), jnp.float32, -b, b)
        bb = jax.random.uniform(next(it), (n_out,), jnp.float32, -b, b)
        return W, bb

    def lstm(n_in, n_hid):
        b = float(n_hid) ** -0.5
        Wih = jax.random.uniform(next(it), (4 * n_hid, n_in), jnp.float32, -b, b)
        Whh = jax.random.uniform(next(it), (4 * n_hid, n_hid), jnp.float32, -b, b)
        bih = jax.random.uniform(next(it), (4 * n_hid,), jnp.float32, -b, b)
        bhh = jax.random.uniform(next(it), (4 * n_hid,), jnp.float32, -b, b)
        return Wih, Whh, bih, bhh

    prm = {}
    prm["W1"], prm["b1"] = lin(F, F)
    prm["W2"], prm["b2"] = lin(F, F)
    prm["W3"], prm["b3"] = lin(F, F)
    prm["p_Wih"], prm["p_Whh"], prm["p_bih"], prm["p_bhh"] = lstm(F, F)
    prm["Wtp"], prm["btp"] = lin(2 * F, F)
    prm["t_Wih"], prm["t_Whh"], prm["t_bih"], prm["t_bhh"] = lstm(F, F)
    prm["Wc"], prm["bc"] = lin(2 * F, F)
    prm["Wo"], prm["bo"] = lin(F, TGT)
    prm["h0"] = jax.random.normal(next(it), (P, F), jnp.float32)
    prm["c0"] = jax.random.normal(next(it), (P, F), jnp.float32)
    prm["th0"] = jax.random.normal(next(it), (1, F), jnp.float32)
    prm["tc0"] = jax.random.normal(next(it), (1, F), jnp.float32)
    return prm


# -----------------------------------------------------------------------------
# Pure-JAX reference (mirrors the PyTorch forward exactly) for validation.
# -----------------------------------------------------------------------------
def ref_forward(x, prm):
    T, P, F = x.shape

    def lin(v, W, b):
        return v @ W.T + b

    p = jax.nn.relu(lin(x, prm["W1"], prm["b1"]))
    p = jax.nn.relu(lin(p, prm["W2"], prm["b2"]))
    p = jax.nn.relu(lin(p, prm["W3"], prm["b3"]))

    def run_lstm(seq, Wih, Whh, bih, bhh, h0, c0):
        def cell(carry, xt):
            h, c = carry
            gates = xt @ Wih.T + h @ Whh.T + bih + bhh
            i, f, g, o = jnp.split(gates, 4, axis=-1)
            c = jax.nn.sigmoid(f) * c + jax.nn.sigmoid(i) * jnp.tanh(g)
            h = jax.nn.sigmoid(o) * jnp.tanh(c)
            return (h, c), h
        _, hs = jax.lax.scan(cell, (h0, c0), seq)
        return hs

    p_out = run_lstm(p, prm["p_Wih"], prm["p_Whh"], prm["p_bih"], prm["p_bhh"],
                     prm["h0"], prm["c0"])                              # (T, P, F)
    pooled = jax.nn.relu(p_out.reshape(T, 1, P * F) @ prm["Wtp"].T + prm["btp"])
    t_out = run_lstm(pooled, prm["t_Wih"], prm["t_Whh"], prm["t_bih"], prm["t_bhh"],
                     prm["th0"], prm["tc0"])                            # (T, 1, F)
    t_by_person = jnp.concatenate([t_out, t_out], axis=1)               # (T, 2, F)
    comb_in = jnp.concatenate([p_out, t_by_person], axis=2)             # (T, 2, 2F)
    comb = jax.nn.relu(comb_in @ prm["Wc"].T + prm["bc"])
    return jax.nn.relu(comb @ prm["Wo"].T + prm["bo"])


if __name__ == "__main__":
    T, P, F, TGT = 8, 2, 32, 8     # seq=8, person_count=2 (required), feature=32, target=8
    key = jax.random.PRNGKey(0)
    k_x, k_p = jax.random.split(key)

    x = jax.random.normal(k_x, (T, P, F), jnp.float32)
    prm = init_params(k_p, P, F, TGT)

    out = team_model2_pallas(x, prm)
    out = jax.block_until_ready(out)

    ref = ref_forward(x, prm)
    assert out.shape == (T, P, TGT), out.shape
    # Tolerance accounts for explicit bf16 MXU operands (f32 accumulation)
    # compounding across the 16 serial LSTM cells.
    max_err = float(jnp.max(jnp.abs(out - ref)))
    if not bool(jnp.allclose(out, ref, atol=3e-2, rtol=3e-2)):
        raise AssertionError(f"Pallas kernel mismatch vs reference, max abs err = {max_err}")

    print("KERNEL_OK")
</pallas_src>

<mosaic_0001>
module attributes {stable_mosaic.version = 11 : i64} {
  func.func @team_model2_kernel(%arg0: memref<128x128xbf16, #tpu.memory_space<vmem>>, %arg1: memref<272x32xbf16, #tpu.memory_space<vmem>>, %arg2: memref<16x128xf32, #tpu.memory_space<vmem>>, %arg3: memref<16x8xf32, #tpu.memory_space<vmem>>, %arg4: memref<16x32xf32, #tpu.memory_space<vmem>>, %arg5: memref<16x32xf32, #tpu.memory_space<vmem>>) attributes {dimension_semantics = [], scalar_prefetch = 0 : i64, scratch_operands = 2 : i64, tpu.core_type = #tpu.core_type<tc>} {
    %c0 = arith.constant 0 : index
    %c0_0 = arith.constant 0 : index
    %0 = vector.load %arg0[%c0, %c0_0] : memref<128x128xbf16, #tpu.memory_space<vmem>>, vector<32x128xbf16>
    %c32 = arith.constant 32 : index
    %c0_1 = arith.constant 0 : index
    %1 = vector.load %arg0[%c32, %c0_1] : memref<128x128xbf16, #tpu.memory_space<vmem>>, vector<32x128xbf16>
    %c64 = arith.constant 64 : index
    %c0_2 = arith.constant 0 : index
    %2 = vector.load %arg0[%c64, %c0_2] : memref<128x128xbf16, #tpu.memory_space<vmem>>, vector<32x128xbf16>
    %c96 = arith.constant 96 : index
    %c0_3 = arith.constant 0 : index
    %3 = vector.load %arg0[%c96, %c0_3] : memref<128x128xbf16, #tpu.memory_space<vmem>>, vector<32x128xbf16>
    %c0_4 = arith.constant 0 : index
    %c0_5 = arith.constant 0 : index
    %4 = vector.load %arg1[%c0_4, %c0_5] : memref<272x32xbf16, #tpu.memory_space<vmem>>, vector<16x32xbf16>
    %c16 = arith.constant 16 : index
    %c0_6 = arith.constant 0 : index
    %5 = vector.load %arg1[%c16, %c0_6] : memref<272x32xbf16, #tpu.memory_space<vmem>>, vector<32x32xbf16>
    %c48 = arith.constant 48 : index
    %c0_7 = arith.constant 0 : index
    %6 = vector.load %arg1[%c48, %c0_7] : memref<272x32xbf16, #tpu.memory_space<vmem>>, vector<32x32xbf16>
    %c80 = arith.constant 80 : index
    %c0_8 = arith.constant 0 : index
    %7 = vector.load %arg1[%c80, %c0_8] : memref<272x32xbf16, #tpu.memory_space<vmem>>, vector<32x32xbf16>
    %c112 = arith.constant 112 : index
    %c0_9 = arith.constant 0 : index
    %8 = vector.load %arg1[%c112, %c0_9] : memref<272x32xbf16, #tpu.memory_space<vmem>>, vector<32x32xbf16>
    %c144 = arith.constant 144 : index
    %c0_10 = arith.constant 0 : index
    %9 = vector.load %arg1[%c144, %c0_10] : memref<272x32xbf16, #tpu.memory_space<vmem>>, vector<32x32xbf16>
    %c0_11 = arith.constant 0 : index
    %c0_12 = arith.constant 0 : index
    %10 = vector.load %arg2[%c0_11, %c0_12] : memref<16x128xf32, #tpu.memory_space<vmem>>, vector<1x128xf32>
    %c1 = arith.constant 1 : index
    %c0_13 = arith.constant 0 : index
    %11 = vector.load %arg2[%c1, %c0_13] : memref<16x128xf32, #tpu.memory_space<vmem>>, vector<1x128xf32>
    %c2 = arith.constant 2 : index
    %c0_14 = arith.constant 0 : index
    %12 = vector.load %arg2[%c2, %c0_14] : memref<16x128xf32, #tpu.memory_space<vmem>>, vector<1x32xf32>
    %c3 = arith.constant 3 : index
    %c0_15 = arith.constant 0 : index
    %13 = vector.load %arg2[%c3, %c0_15] : memref<16x128xf32, #tpu.memory_space<vmem>>, vector<1x32xf32>
    %c4 = arith.constant 4 : index
    %c0_16 = arith.constant 0 : index
    %14 = vector.load %arg2[%c4, %c0_16] : memref<16x128xf32, #tpu.memory_space<vmem>>, vector<1x32xf32>
    %c5 = arith.constant 5 : index
    %c0_17 = arith.constant 0 : index
    %15 = vector.load %arg2[%c5, %c0_17] : memref<16x128xf32, #tpu.memory_space<vmem>>, vector<1x32xf32>
    %c8 = arith.constant 8 : index
    %c0_18 = arith.constant 0 : index
    %16 = vector.load %arg2[%c8, %c0_18] : memref<16x128xf32, #tpu.memory_space<vmem>>, vector<2x32xf32>
    %c10 = arith.constant 10 : index
    %c0_19 = arith.constant 0 : index
    %17 = vector.load %arg2[%c10, %c0_19] : memref<16x128xf32, #tpu.memory_space<vmem>>, vector<2x32xf32>
    %c12 = arith.constant 12 : index
    %c0_20 = arith.constant 0 : index
    %18 = vector.load %arg2[%c12, %c0_20] : memref<16x128xf32, #tpu.memory_space<vmem>>, vector<1x32xf32>
    %c13 = arith.constant 13 : index
    %c0_21 = arith.constant 0 : index
    %19 = vector.load %arg2[%c13, %c0_21] : memref<16x128xf32, #tpu.memory_space<vmem>>, vector<1x32xf32>
    %cst = arith.constant dense<0.000000e+00> : vector<16x32xf32>
    %20 = tpu.matmul %4, %5, %cst {dimension_numbers = #tpu.dot_dimension_numbers<[1], [0], [0], [1], [0, 0, 1, 1], [], []>} : vector<16x32xbf16>, vector<32x32xbf16>, vector<16x32xf32> -> vector<16x32xf32>
    %21 = vector.broadcast %12 : vector<1x32xf32> to vector<16x32xf32>
    %22 = arith.addf %20, %21 : vector<16x32xf32>
    %cst_22 = arith.constant 0.000000e+00 : f32
    %23 = vector.broadcast %cst_22 : f32 to vector<16x32xf32>
    %24 = arith.maximumf %22, %23 : vector<16x32xf32>
    %25 = arith.truncf %24 : vector<16x32xf32> to vector<16x32xbf16>
    %cst_23 = arith.constant dense<0.000000e+00> : vector<16x32xf32>
    %26 = tpu.matmul %25, %6, %cst_23 {dimension_numbers = #tpu.dot_dimension_numbers<[1], [0], [0], [1], [0, 0, 1, 1], [], []>} : vector<16x32xbf16>, vector<32x32xbf16>, vector<16x32xf32> -> vector<16x32xf32>
    %27 = vector.broadcast %13 : vector<1x32xf32> to vector<16x32xf32>
    %28 = arith.addf %26, %27 : vector<16x32xf32>
    %cst_24 = arith.constant 0.000000e+00 : f32
    %29 = vector.broadcast %cst_24 : f32 to vector<16x32xf32>
    %30 = arith.maximumf %28, %29 : vector<16x32xf32>
    %31 = arith.truncf %30 : vector<16x32xf32> to vector<16x32xbf16>
    %cst_25 = arith.constant dense<0.000000e+00> : vector<16x32xf32>
    %32 = tpu.matmul %31, %7, %cst_25 {dimension_numbers = #tpu.dot_dimension_numbers<[1], [0], [0], [1], [0, 0, 1, 1], [], []>} : vector<16x32xbf16>, vector<32x32xbf16>, vector<16x32xf32> -> vector<16x32xf32>
    %33 = vector.broadcast %14 : vector<1x32xf32> to vector<16x32xf32>
    %34 = arith.addf %32, %33 : vector<16x32xf32>
    %cst_26 = arith.constant 0.000000e+00 : f32
    %35 = vector.broadcast %cst_26 : f32 to vector<16x32xf32>
    %36 = arith.maximumf %34, %35 : vector<16x32xf32>
    %37 = arith.truncf %36 : vector<16x32xf32> to vector<16x32xbf16>
    %cst_27 = arith.constant dense<0.000000e+00> : vector<16x128xf32>
    %38 = tpu.matmul %37, %0, %cst_27 {dimension_numbers = #tpu.dot_dimension_numbers<[1], [0], [0], [1], [0, 0, 1, 1], [], []>} : vector<16x32xbf16>, vector<32x128xbf16>, vector<16x128xf32> -> vector<16x128xf32>
    %39 = vector.broadcast %10 : vector<1x128xf32> to vector<16x128xf32>
    %40 = arith.addf %38, %39 : vector<16x128xf32>
    %41 = vector.extract_strided_slice %40 {offsets = [0, 0], sizes = [2, 128], strides = [1, 1]} : vector<16x128xf32> to vector<2x128xf32>
    %42 = vector.extract_strided_slice %40 {offsets = [2, 0], sizes = [2, 128], strides = [1, 1]} : vector<16x128xf32> to vector<2x128xf32>
    %43 = vector.extract_strided_slice %40 {offsets = [4, 0], sizes = [2, 128], strides = [1, 1]} : vector<16x128xf32> to vector<2x128xf32>
    %44 = vector.extract_strided_slice %40 {offsets = [6, 0], sizes = [2, 128], strides = [1, 1]} : vector<16x128xf32> to vector<2x128xf32>
    %45 = vector.extract_strided_slice %40 {offsets = [8, 0], sizes = [2, 128], strides = [1, 1]} : vector<16x128xf32> to vector<2x128xf32>
    %46 = vector.extract_strided_slice %40 {offsets = [10, 0], sizes = [2, 128], strides = [1, 1]} : vector<16x128xf32> to vector<2x128xf32>
    %47 = vector.extract_strided_slice %40 {offsets = [12, 0], sizes = [2, 128], strides = [1, 1]} : vector<16x128xf32> to vector<2x128xf32>
    %48 = vector.extract_strided_slice %40 {offsets = [14, 0], sizes = [2, 128], strides = [1, 1]} : vector<16x128xf32> to vector<2x128xf32>
    %49 = arith.truncf %18 : vector<1x32xf32> to vector<1x32xbf16>
    %cst_28 = arith.constant dense<0.000000e+00> : vector<1x128xf32>
    %50 = tpu.matmul %49, %3, %cst_28 {dimension_numbers = #tpu.dot_dimension_numbers<[1], [0], [0], [1], [0, 0, 1, 1], [], []>} : vector<1x32xbf16>, vector<32x128xbf16>, vector<1x128xf32> -> vector<1x128xf32>
    %51 = arith.truncf %16 : vector<2x32xf32> to vector<2x32xbf16>
    %cst_29 = arith.constant dense<0.000000e+00> : vector<2x128xf32>
    %52 = tpu.matmul %51, %1, %cst_29 {dimension_numbers = #tpu.dot_dimension_numbers<[1], [0], [0], [1], [0, 0, 1, 1], [], []>} : vector<2x32xbf16>, vector<32x128xbf16>, vector<2x128xf32> -> vector<2x128xf32>
    %53 = arith.addf %41, %52 : vector<2x128xf32>
    %54 = math.tanh %53 : vector<2x128xf32>
    %cst_30 = arith.constant 5.000000e-01 : f32
    %55 = vector.broadcast %cst_30 : f32 to vector<2x128xf32>
    %56 = arith.mulf %55, %54 : vector<2x128xf32>
    %cst_31 = arith.constant 5.000000e-01 : f32
    %57 = vector.broadcast %cst_31 : f32 to vector<2x128xf32>
    %58 = arith.addf %56, %57 : vector<2x128xf32>
    %59 = vector.extract_strided_slice %58 {offsets = [0, 0], sizes = [2, 32], strides = [1, 1]} : vector<2x128xf32> to vector<2x32xf32>
    %60 = vector.extract_strided_slice %58 {offsets = [0, 32], sizes = [2, 32], strides = [1, 1]} : vector<2x128xf32> to vector<2x32xf32>
    %61 = vector.extract_strided_slice %54 {offsets = [0, 64], sizes = [2, 32], strides = [1, 1]} : vector<2x128xf32> to vector<2x32xf32>
    %62 = vector.extract_strided_slice %58 {offsets = [0, 96], sizes = [2, 32], strides = [1, 1]} : vector<2x128xf32> to vector<2x32xf32>
    %63 = arith.mulf %60, %17 : vector<2x32xf32>
    %64 = arith.mulf %59, %61 : vector<2x32xf32>
    %65 = arith.addf %63, %64 : vector<2x32xf32>
    %66 = math.tanh %65 : vector<2x32xf32>
    %67 = arith.mulf %62, %66 : vector<2x32xf32>
    %c0_32 = arith.constant 0 : index
    %c0_33 = arith.constant 0 : index
    %68 = vector.load %arg4[%c0_32, %c0_33] : memref<16x32xf32, #tpu.memory_space<vmem>>, vector<2x32xf32>
    tpu.vector_store %arg4[%c0_32, %c0_33], %67 {strides = array<i32>} : memref<16x32xf32, #tpu.memory_space<vmem>>, vector<2x32xf32>,
    %69 = vector.extract_strided_slice %67 {offsets = [0, 0], sizes = [1, 32], strides = [1, 1]} : vector<2x32xf32> to vector<1x32xf32>
    %70 = arith.truncf %69 : vector<1x32xf32> to vector<1x32xbf16>
    %cst_34 = arith.constant dense<0.000000e+00> : vector<1x32xf32>
    %71 = tpu.matmul %70, %8, %cst_34 {dimension_numbers = #tpu.dot_dimension_numbers<[1], [0], [0], [1], [0, 0, 1, 1], [], []>} : vector<1x32xbf16>, vector<32x32xbf16>, vector<1x32xf32> -> vector<1x32xf32>
    %72 = vector.extract_strided_slice %67 {offsets = [1, 0], sizes = [1, 32], strides = [1, 1]} : vector<2x32xf32> to vector<1x32xf32>
    %73 = arith.truncf %72 : vector<1x32xf32> to vector<1x32xbf16>
    %cst_35 = arith.constant dense<0.000000e+00> : vector<1x32xf32>
    %74 = tpu.matmul %73, %9, %cst_35 {dimension_numbers = #tpu.dot_dimension_numbers<[1], [0], [0], [1], [0, 0, 1, 1], [], []>} : vector<1x32xbf16>, vector<32x32xbf16>, vector<1x32xf32> -> vector<1x32xf32>
    %75 = arith.addf %71, %74 : vector<1x32xf32>
    %76 = arith.addf %75, %15 : vector<1x32xf32>
    %cst_36 = arith.constant 0.000000e+00 : f32
    %77 = vector.broadcast %cst_36 : f32 to vector<1x32xf32>
    %78 = arith.maximumf %76, %77 : vector<1x32xf32>
    %79 = arith.truncf %78 : vector<1x32xf32> to vector<1x32xbf16>
    %cst_37 = arith.constant dense<0.000000e+00> : vector<1x128xf32>
    %80 = tpu.matmul %79, %2, %cst_37 {dimension_numbers = #tpu.dot_dimension_numbers<[1], [0], [0], [1], [0, 0, 1, 1], [], []>} : vector<1x32xbf16>, vector<32x128xbf16>, vector<1x128xf32> -> vector<1x128xf32>
    %81 = arith.addf %80, %50 : vector<1x128xf32>
    %82 = arith.addf %81, %11 : vector<1x128xf32>
    %83 = math.tanh %82 : vector<1x128xf32>
    %cst_38 = arith.constant 5.000000e-01 : f32
    %84 = vector.broadcast %cst_38 : f32 to vector<1x128xf32>
    %85 = arith.mulf %84, %83 : vector<1x128xf32>
    %cst_39 = arith.constant 5.000000e-01 : f32
    %86 = vector.broadcast %cst_39 : f32 to vector<1x128xf32>
    %87 = arith.addf %85, %86 : vector<1x128xf32>
    %88 = vector.extract_strided_slice %87 {offsets = [0, 0], sizes = [1, 32], strides = [1, 1]} : vector<1x128xf32> to vector<1x32xf32>
    %89 = vector.extract_strided_slice %87 {offsets = [0, 32], sizes = [1, 32], strides = [1, 1]} : vector<1x128xf32> to vector<1x32xf32>
    %90 = vector.extract_strided_slice %83 {offsets = [0, 64], sizes = [1, 32], strides = [1, 1]} : vector<1x128xf32> to vector<1x32xf32>
    %91 = vector.extract_strided_slice %87 {offsets = [0, 96], sizes = [1, 32], strides = [1, 1]} : vector<1x128xf32> to vector<1x32xf32>
    %92 = arith.mulf %89, %19 : vector<1x32xf32>
    %93 = arith.mulf %88, %90 : vector<1x32xf32>
    %94 = arith.addf %92, %93 : vector<1x32xf32>
    %95 = math.tanh %94 : vector<1x32xf32>
    %96 = arith.mulf %91, %95 : vector<1x32xf32>
    %97 = vector.shape_cast %96 : vector<1x32xf32> to vector<1x32xf32>
    %98 = vector.broadcast %97 : vector<1x32xf32> to vector<2x32xf32>
    %c0_40 = arith.constant 0 : index
    %c0_41 = arith.constant 0 : index
    %99 = vector.load %arg5[%c0_40, %c0_41] : memref<16x32xf32, #tpu.memory_space<vmem>>, vector<2x32xf32>
    tpu.vector_store %arg5[%c0_40, %c0_41], %98 {strides = array<i32>} : memref<16x32xf32, #tpu.memory_space<vmem>>, vector<2x32xf32>,
    %100 = arith.truncf %96 : vector<1x32xf32> to vector<1x32xbf16>
    %cst_42 = arith.constant dense<0.000000e+00> : vector<1x128xf32>
    %101 = tpu.matmul %100, %3, %cst_42 {dimension_numbers = #tpu.dot_dimension_numbers<[1], [0], [0], [1], [0, 0, 1, 1], [], []>} : vector<1x32xbf16>, vector<32x128xbf16>, vector<1x128xf32> -> vector<1x128xf32>
    %102 = arith.truncf %67 : vector<2x32xf32> to vector<2x32xbf16>
    %cst_43 = arith.constant dense<0.000000e+00> : vector<2x128xf32>
    %103 = tpu.matmul %102, %1, %cst_43 {dimension_numbers = #tpu.dot_dimension_numbers<[1], [0], [0], [1], [0, 0, 1, 1], [], []>} : vector<2x32xbf16>, vector<32x128xbf16>, vector<2x128xf32> -> vector<2x128xf32>
    %104 = arith.addf %42, %103 : vector<2x128xf32>
    %105 = math.tanh %104 : vector<2x128xf32>
    %cst_44 = arith.constant 5.000000e-01 : f32
    %106 = vector.broadcast %cst_44 : f32 to vector<2x128xf32>
    %107 = arith.mulf %106, %105 : vector<2x128xf32>
    %cst_45 = arith.constant 5.000000e-01 : f32
    %108 = vector.broadcast %cst_45 : f32 to vector<2x128xf32>
    %109 = arith.addf %107, %108 : vector<2x128xf32>
    %110 = vector.extract_strided_slice %109 {offsets = [0, 0], sizes = [2, 32], strides = [1, 1]} : vector<2x128xf32> to vector<2x32xf32>
    %111 = vector.extract_strided_slice %109 {offsets = [0, 32], sizes = [2, 32], strides = [1, 1]} : vector<2x128xf32> to vector<2x32xf32>
    %112 = vector.extract_strided_slice %105 {offsets = [0, 64], sizes = [2, 32], strides = [1, 1]} : vector<2x128xf32> to vector<2x32xf32>
    %113 = vector.extract_strided_slice %109 {offsets = [0, 96], sizes = [2, 32], strides = [1, 1]} : vector<2x128xf32> to vector<2x32xf32>
    %114 = arith.mulf %111, %65 : vector<2x32xf32>
    %115 = arith.mulf %110, %112 : vector<2x32xf32>
    %116 = arith.addf %114, %115 : vector<2x32xf32>
    %117 = math.tanh %116 : vector<2x32xf32>
    %118 = arith.mulf %113, %117 : vector<2x32xf32>
    %c2_46 = arith.constant 2 : index
    %c0_47 = arith.constant 0 : index
    %119 = vector.load %arg4[%c2_46, %c0_47] : memref<16x32xf32, #tpu.memory_space<vmem>>, vector<2x32xf32>
    tpu.vector_store %arg4[%c2_46, %c0_47], %118 {strides = array<i32>} : memref<16x32xf32, #tpu.memory_space<vmem>>, vector<2x32xf32>,
    %120 = vector.extract_strided_slice %118 {offsets = [0, 0], sizes = [1, 32], strides = [1, 1]} : vector<2x32xf32> to vector<1x32xf32>
    %121 = arith.truncf %120 : vector<1x32xf32> to vector<1x32xbf16>
    %cst_48 = arith.constant dense<0.000000e+00> : vector<1x32xf32>
    %122 = tpu.matmul %121, %8, %cst_48 {dimension_numbers = #tpu.dot_dimension_numbers<[1], [0], [0], [1], [0, 0, 1, 1], [], []>} : vector<1x32xbf16>, vector<32x32xbf16>, vector<1x32xf32> -> vector<1x32xf32>
    %123 = vector.extract_strided_slice %118 {offsets = [1, 0], sizes = [1, 32], strides = [1, 1]} : vector<2x32xf32> to vector<1x32xf32>
    %124 = arith.truncf %123 : vector<1x32xf32> to vector<1x32xbf16>
    %cst_49 = arith.constant dense<0.000000e+00> : vector<1x32xf32>
    %125 = tpu.matmul %124, %9, %cst_49 {dimension_numbers = #tpu.dot_dimension_numbers<[1], [0], [0], [1], [0, 0, 1, 1], [], []>} : vector<1x32xbf16>, vector<32x32xbf16>, vector<1x32xf32> -> vector<1x32xf32>
    %126 = arith.addf %122, %125 : vector<1x32xf32>
    %127 = arith.addf %126, %15 : vector<1x32xf32>
    %cst_50 = arith.constant 0.000000e+00 : f32
    %128 = vector.broadcast %cst_50 : f32 to vector<1x32xf32>
    %129 = arith.maximumf %127, %128 : vector<1x32xf32>
    %130 = arith.truncf %129 : vector<1x32xf32> to vector<1x32xbf16>
    %cst_51 = arith.constant dense<0.000000e+00> : vector<1x128xf32>
    %131 = tpu.matmul %130, %2, %cst_51 {dimension_numbers = #tpu.dot_dimension_numbers<[1], [0], [0], [1], [0, 0, 1, 1], [], []>} : vector<1x32xbf16>, vector<32x128xbf16>, vector<1x128xf32> -> vector<1x128xf32>
    %132 = arith.addf %131, %101 : vector<1x128xf32>
    %133 = arith.addf %132, %11 : vector<1x128xf32>
    %134 = math.tanh %133 : vector<1x128xf32>
    %cst_52 = arith.constant 5.000000e-01 : f32
    %135 = vector.broadcast %cst_52 : f32 to vector<1x128xf32>
    %136 = arith.mulf %135, %134 : vector<1x128xf32>
    %cst_53 = arith.constant 5.000000e-01 : f32
    %137 = vector.broadcast %cst_53 : f32 to vector<1x128xf32>
    %138 = arith.addf %136, %137 : vector<1x128xf32>
    %139 = vector.extract_strided_slice %138 {offsets = [0, 0], sizes = [1, 32], strides = [1, 1]} : vector<1x128xf32> to vector<1x32xf32>
    %140 = vector.extract_strided_slice %138 {offsets = [0, 32], sizes = [1, 32], strides = [1, 1]} : vector<1x128xf32> to vector<1x32xf32>
    %141 = vector.extract_strided_slice %134 {offsets = [0, 64], sizes = [1, 32], strides = [1, 1]} : vector<1x128xf32> to vector<1x32xf32>
    %142 = vector.extract_strided_slice %138 {offsets = [0, 96], sizes = [1, 32], strides = [1, 1]} : vector<1x128xf32> to vector<1x32xf32>
    %143 = arith.mulf %140, %94 : vector<1x32xf32>
    %144 = arith.mulf %139, %141 : vector<1x32xf32>
    %145 = arith.addf %143, %144 : vector<1x32xf32>
    %146 = math.tanh %145 : vector<1x32xf32>
    %147 = arith.mulf %142, %146 : vector<1x32xf32>
    %148 = vector.shape_cast %147 : vector<1x32xf32> to vector<1x32xf32>
    %149 = vector.broadcast %148 : vector<1x32xf32> to vector<2x32xf32>
    %c2_54 = arith.constant 2 : index
    %c0_55 = arith.constant 0 : index
    %150 = vector.load %arg5[%c2_54, %c0_55] : memref<16x32xf32, #tpu.memory_space<vmem>>, vector<2x32xf32>
    tpu.vector_store %arg5[%c2_54, %c0_55], %149 {strides = array<i32>} : memref<16x32xf32, #tpu.memory_space<vmem>>, vector<2x32xf32>,
    %151 = arith.truncf %147 : vector<1x32xf32> to vector<1x32xbf16>
    %cst_56 = arith.constant dense<0.000000e+00> : vector<1x128xf32>
    %152 = tpu.matmul %151, %3, %cst_56 {dimension_numbers = #tpu.dot_dimension_numbers<[1], [0], [0], [1], [0, 0, 1, 1], [], []>} : vector<1x32xbf16>, vector<32x128xbf16>, vector<1x128xf32> -> vector<1x128xf32>
    %153 = arith.truncf %118 : vector<2x32xf32> to vector<2x32xbf16>
    %cst_57 = arith.constant dense<0.000000e+00> : vector<2x128xf32>
    %154 = tpu.matmul %153, %1, %cst_57 {dimension_numbers = #tpu.dot_dimension_numbers<[1], [0], [0], [1], [0, 0, 1, 1], [], []>} : vector<2x32xbf16>, vector<32x128xbf16>, vector<2x128xf32> -> vector<2x128xf32>
    %155 = arith.addf %43, %154 : vector<2x128xf32>
    %156 = math.tanh %155 : vector<2x128xf32>
    %cst_58 = arith.constant 5.000000e-01 : f32
    %157 = vector.broadcast %cst_58 : f32 to vector<2x128xf32>
    %158 = arith.mulf %157, %156 : vector<2x128xf32>
    %cst_59 = arith.constant 5.000000e-01 : f32
    %159 = vector.broadcast %cst_59 : f32 to vector<2x128xf32>
    %160 = arith.addf %158, %159 : vector<2x128xf32>
    %161 = vector.extract_strided_slice %160 {offsets = [0, 0], sizes = [2, 32], strides = [1, 1]} : vector<2x128xf32> to vector<2x32xf32>
    %162 = vector.extract_strided_slice %160 {offsets = [0, 32], sizes = [2, 32], strides = [1, 1]} : vector<2x128xf32> to vector<2x32xf32>
    %163 = vector.extract_strided_slice %156 {offsets = [0, 64], sizes = [2, 32], strides = [1, 1]} : vector<2x128xf32> to vector<2x32xf32>
    %164 = vector.extract_strided_slice %160 {offsets = [0, 96], sizes = [2, 32], strides = [1, 1]} : vector<2x128xf32> to vector<2x32xf32>
    %165 = arith.mulf %162, %116 : vector<2x32xf32>
    %166 = arith.mulf %161, %163 : vector<2x32xf32>
    %167 = arith.addf %165, %166 : vector<2x32xf32>
    %168 = math.tanh %167 : vector<2x32xf32>
    %169 = arith.mulf %164, %168 : vector<2x32xf32>
    %c4_60 = arith.constant 4 : index
    %c0_61 = arith.constant 0 : index
    %170 = vector.load %arg4[%c4_60, %c0_61] : memref<16x32xf32, #tpu.memory_space<vmem>>, vector<2x32xf32>
    tpu.vector_store %arg4[%c4_60, %c0_61], %169 {strides = array<i32>} : memref<16x32xf32, #tpu.memory_space<vmem>>, vector<2x32xf32>,
    %171 = vector.extract_strided_slice %169 {offsets = [0, 0], sizes = [1, 32], strides = [1, 1]} : vector<2x32xf32> to vector<1x32xf32>
    %172 = arith.truncf %171 : vector<1x32xf32> to vector<1x32xbf16>
    %cst_62 = arith.constant dense<0.000000e+00> : vector<1x32xf32>
    %173 = tpu.matmul %172, %8, %cst_62 {dimension_numbers = #tpu.dot_dimension_numbers<[1], [0], [0], [1], [0, 0, 1, 1], [], []>} : vector<1x32xbf16>, vector<32x32xbf16>, vector<1x32xf32> -> vector<1x32xf32>
    %174 = vector.extract_strided_slice %169 {offsets = [1, 0], sizes = [1, 32], strides = [1, 1]} : vector<2x32xf32> to vector<1x32xf32>
    %175 = arith.truncf %174 : vector<1x32xf32> to vector<1x32xbf16>
    %cst_63 = arith.constant dense<0.000000e+00> : vector<1x32xf32>
    %176 = tpu.matmul %175, %9, %cst_63 {dimension_numbers = #tpu.dot_dimension_numbers<[1], [0], [0], [1], [0, 0, 1, 1], [], []>} : vector<1x32xbf16>, vector<32x32xbf16>, vector<1x32xf32> -> vector<1x32xf32>
    %177 = arith.addf %173, %176 : vector<1x32xf32>
    %178 = arith.addf %177, %15 : vector<1x32xf32>
    %cst_64 = arith.constant 0.000000e+00 : f32
    %179 = vector.broadcast %cst_64 : f32 to vector<1x32xf32>
    %180 = arith.maximumf %178, %179 : vector<1x32xf32>
    %181 = arith.truncf %180 : vector<1x32xf32> to vector<1x32xbf16>
    %cst_65 = arith.constant dense<0.000000e+00> : vector<1x128xf32>
    %182 = tpu.matmul %181, %2, %cst_65 {dimension_numbers = #tpu.dot_dimension_numbers<[1], [0], [0], [1], [0, 0, 1, 1], [], []>} : vector<1x32xbf16>, vector<32x128xbf16>, vector<1x128xf32> -> vector<1x128xf32>
    %183 = arith.addf %182, %152 : vector<1x128xf32>
    %184 = arith.addf %183, %11 : vector<1x128xf32>
    %185 = math.tanh %184 : vector<1x128xf32>
    %cst_66 = arith.constant 5.000000e-01 : f32
    %186 = vector.broadcast %cst_66 : f32 to vector<1x128xf32>
    %187 = arith.mulf %186, %185 : vector<1x128xf32>
    %cst_67 = arith.constant 5.000000e-01 : f32
    %188 = vector.broadcast %cst_67 : f32 to vector<1x128xf32>
    %189 = arith.addf %187, %188 : vector<1x128xf32>
    %190 = vector.extract_strided_slice %189 {offsets = [0, 0], sizes = [1, 32], strides = [1, 1]} : vector<1x128xf32> to vector<1x32xf32>
    %191 = vector.extract_strided_slice %189 {offsets = [0, 32], sizes = [1, 32], strides = [1, 1]} : vector<1x128xf32> to vector<1x32xf32>
    %192 = vector.extract_strided_slice %185 {offsets = [0, 64], sizes = [1, 32], strides = [1, 1]} : vector<1x128xf32> to vector<1x32xf32>
    %193 = vector.extract_strided_slice %189 {offsets = [0, 96], sizes = [1, 32], strides = [1, 1]} : vector<1x128xf32> to vector<1x32xf32>
    %194 = arith.mulf %191, %145 : vector<1x32xf32>
    %195 = arith.mulf %190, %192 : vector<1x32xf32>
    %196 = arith.addf %194, %195 : vector<1x32xf32>
    %197 = math.tanh %196 : vector<1x32xf32>
    %198 = arith.mulf %193, %197 : vector<1x32xf32>
    %199 = vector.shape_cast %198 : vector<1x32xf32> to vector<1x32xf32>
    %200 = vector.broadcast %199 : vector<1x32xf32> to vector<2x32xf32>
    %c4_68 = arith.constant 4 : index
    %c0_69 = arith.constant 0 : index
    %201 = vector.load %arg5[%c4_68, %c0_69] : memref<16x32xf32, #tpu.memory_space<vmem>>, vector<2x32xf32>
    tpu.vector_store %arg5[%c4_68, %c0_69], %200 {strides = array<i32>} : memref<16x32xf32, #tpu.memory_space<vmem>>, vector<2x32xf32>,
    %202 = arith.truncf %198 : vector<1x32xf32> to vector<1x32xbf16>
    %cst_70 = arith.constant dense<0.000000e+00> : vector<1x128xf32>
    %203 = tpu.matmul %202, %3, %cst_70 {dimension_numbers = #tpu.dot_dimension_numbers<[1], [0], [0], [1], [0, 0, 1, 1], [], []>} : vector<1x32xbf16>, vector<32x128xbf16>, vector<1x128xf32> -> vector<1x128xf32>
    %204 = arith.truncf %169 : vector<2x32xf32> to vector<2x32xbf16>
    %cst_71 = arith.constant dense<0.000000e+00> : vector<2x128xf32>
    %205 = tpu.matmul %204, %1, %cst_71 {dimension_numbers = #tpu.dot_dimension_numbers<[1], [0], [0], [1], [0, 0, 1, 1], [], []>} : vector<2x32xbf16>, vector<32x128xbf16>, vector<2x128xf32> -> vector<2x128xf32>
    %206 = arith.addf %44, %205 : vector<2x128xf32>
    %207 = math.tanh %206 : vector<2x128xf32>
    %cst_72 = arith.constant 5.000000e-01 : f32
    %208 = vector.broadcast %cst_72 : f32 to vector<2x128xf32>
    %209 = arith.mulf %208, %207 : vector<2x128xf32>
    %cst_73 = arith.constant 5.000000e-01 : f32
    %210 = vector.broadcast %cst_73 : f32 to vector<2x128xf32>
    %211 = arith.addf %209, %210 : vector<2x128xf32>
    %212 = vector.extract_strided_slice %211 {offsets = [0, 0], sizes = [2, 32], strides = [1, 1]} : vector<2x128xf32> to vector<2x32xf32>
    %213 = vector.extract_strided_slice %211 {offsets = [0, 32], sizes = [2, 32], strides = [1, 1]} : vector<2x128xf32> to vector<2x32xf32>
    %214 = vector.extract_strided_slice %207 {offsets = [0, 64], sizes = [2, 32], strides = [1, 1]} : vector<2x128xf32> to vector<2x32xf32>
    %215 = vector.extract_strided_slice %211 {offsets = [0, 96], sizes = [2, 32], strides = [1, 1]} : vector<2x128xf32> to vector<2x32xf32>
    %216 = arith.mulf %213, %167 : vector<2x32xf32>
    %217 = arith.mulf %212, %214 : vector<2x32xf32>
    %218 = arith.addf %216, %217 : vector<2x32xf32>
    %219 = math.tanh %218 : vector<2x32xf32>
    %220 = arith.mulf %215, %219 : vector<2x32xf32>
    %c6 = arith.constant 6 : index
    %c0_74 = arith.constant 0 : index
    %221 = vector.load %arg4[%c6, %c0_74] : memref<16x32xf32, #tpu.memory_space<vmem>>, vector<2x32xf32>
    tpu.vector_store %arg4[%c6, %c0_74], %220 {strides = array<i32>} : memref<16x32xf32, #tpu.memory_space<vmem>>, vector<2x32xf32>,
    %222 = vector.extract_strided_slice %220 {offsets = [0, 0], sizes = [1, 32], strides = [1, 1]} : vector<2x32xf32> to vector<1x32xf32>
    %223 = arith.truncf %222 : vector<1x32xf32> to vector<1x32xbf16>
    %cst_75 = arith.constant dense<0.000000e+00> : vector<1x32xf32>
    %224 = tpu.matmul %223, %8, %cst_75 {dimension_numbers = #tpu.dot_dimension_numbers<[1], [0], [0], [1], [0, 0, 1, 1], [], []>} : vector<1x32xbf16>, vector<32x32xbf16>, vector<1x32xf32> -> vector<1x32xf32>
    %225 = vector.extract_strided_slice %220 {offsets = [1, 0], sizes = [1, 32], strides = [1, 1]} : vector<2x32xf32> to vector<1x32xf32>
    %226 = arith.truncf %225 : vector<1x32xf32> to vector<1x32xbf16>
    %cst_76 = arith.constant dense<0.000000e+00> : vector<1x32xf32>
    %227 = tpu.matmul %226, %9, %cst_76 {dimension_numbers = #tpu.dot_dimension_numbers<[1], [0], [0], [1], [0, 0, 1, 1], [], []>} : vector<1x32xbf16>, vector<32x32xbf16>, vector<1x32xf32> -> vector<1x32xf32>
    %228 = arith.addf %224, %227 : vector<1x32xf32>
    %229 = arith.addf %228, %15 : vector<1x32xf32>
    %cst_77 = arith.constant 0.000000e+00 : f32
    %230 = vector.broadcast %cst_77 : f32 to vector<1x32xf32>
    %231 = arith.maximumf %229, %230 : vector<1x32xf32>
    %232 = arith.truncf %231 : vector<1x32xf32> to vector<1x32xbf16>
    %cst_78 = arith.constant dense<0.000000e+00> : vector<1x128xf32>
    %233 = tpu.matmul %232, %2, %cst_78 {dimension_numbers = #tpu.dot_dimension_numbers<[1], [0], [0], [1], [0, 0, 1, 1], [], []>} : vector<1x32xbf16>, vector<32x128xbf16>, vector<1x128xf32> -> vector<1x128xf32>
    %234 = arith.addf %233, %203 : vector<1x128xf32>
    %235 = arith.addf %234, %11 : vector<1x128xf32>
    %236 = math.tanh %235 : vector<1x128xf32>
    %cst_79 = arith.constant 5.000000e-01 : f32
    %237 = vector.broadcast %cst_79 : f32 to vector<1x128xf32>
    %238 = arith.mulf %237, %236 : vector<1x128xf32>
    %cst_80 = arith.constant 5.000000e-01 : f32
    %239 = vector.broadcast %cst_80 : f32 to vector<1x128xf32>
    %240 = arith.addf %238, %239 : vector<1x128xf32>
    %241 = vector.extract_strided_slice %240 {offsets = [0, 0], sizes = [1, 32], strides = [1, 1]} : vector<1x128xf32> to vector<1x32xf32>
    %242 = vector.extract_strided_slice %240 {offsets = [0, 32], sizes = [1, 32], strides = [1, 1]} : vector<1x128xf32> to vector<1x32xf32>
    %243 = vector.extract_strided_slice %236 {offsets = [0, 64], sizes = [1, 32], strides = [1, 1]} : vector<1x128xf32> to vector<1x32xf32>
    %244 = vector.extract_strided_slice %240 {offsets = [0, 96], sizes = [1, 32], strides = [1, 1]} : vector<1x128xf32> to vector<1x32xf32>
    %245 = arith.mulf %242, %196 : vector<1x32xf32>
    %246 = arith.mulf %241, %243 : vector<1x32xf32>
    %247 = arith.addf %245, %246 : vector<1x32xf32>
    %248 = math.tanh %247 : vector<1x32xf32>
    %249 = arith.mulf %244, %248 : vector<1x32xf32>
    %250 = vector.shape_cast %249 : vector<1x32xf32> to vector<1x32xf32>
    %251 = vector.broadcast %250 : vector<1x32xf32> to vector<2x32xf32>
    %c6_81 = arith.constant 6 : index
    %c0_82 = arith.constant 0 : index
    %252 = vector.load %arg5[%c6_81, %c0_82] : memref<16x32xf32, #tpu.memory_space<vmem>>, vector<2x32xf32>
    tpu.vector_store %arg5[%c6_81, %c0_82], %251 {strides = array<i32>} : memref<16x32xf32, #tpu.memory_space<vmem>>, vector<2x32xf32>,
    %253 = arith.truncf %249 : vector<1x32xf32> to vector<1x32xbf16>
    %cst_83 = arith.constant dense<0.000000e+00> : vector<1x128xf32>
    %254 = tpu.matmul %253, %3, %cst_83 {dimension_numbers = #tpu.dot_dimension_numbers<[1], [0], [0], [1], [0, 0, 1, 1], [], []>} : vector<1x32xbf16>, vector<32x128xbf16>, vector<1x128xf32> -> vector<1x128xf32>
    %255 = arith.truncf %220 : vector<2x32xf32> to vector<2x32xbf16>
    %cst_84 = arith.constant dense<0.000000e+00> : vector<2x128xf32>
    %256 = tpu.matmul %255, %1, %cst_84 {dimension_numbers = #tpu.dot_dimension_numbers<[1], [0], [0], [1], [0, 0, 1, 1], [], []>} : vector<2x32xbf16>, vector<32x128xbf16>, vector<2x128xf32> -> vector<2x128xf32>
    %257 = arith.addf %45, %256 : vector<2x128xf32>
    %258 = math.tanh %257 : vector<2x128xf32>
    %cst_85 = arith.constant 5.000000e-01 : f32
    %259 = vector.broadcast %cst_85 : f32 to vector<2x128xf32>
    %260 = arith.mulf %259, %258 : vector<2x128xf32>
    %cst_86 = arith.constant 5.000000e-01 : f32
    %261 = vector.broadcast %cst_86 : f32 to vector<2x128xf32>
    %262 = arith.addf %260, %261 : vector<2x128xf32>
    %263 = vector.extract_strided_slice %262 {offsets = [0, 0], sizes = [2, 32], strides = [1, 1]} : vector<2x128xf32> to vector<2x32xf32>
    %264 = vector.extract_strided_slice %262 {offsets = [0, 32], sizes = [2, 32], strides = [1, 1]} : vector<2x128xf32> to vector<2x32xf32>
    %265 = vector.extract_strided_slice %258 {offsets = [0, 64], sizes = [2, 32], strides = [1, 1]} : vector<2x128xf32> to vector<2x32xf32>
    %266 = vector.extract_strided_slice %262 {offsets = [0, 96], sizes = [2, 32], strides = [1, 1]} : vector<2x128xf32> to vector<2x32xf32>
    %267 = arith.mulf %264, %218 : vector<2x32xf32>
    %268 = arith.mulf %263, %265 : vector<2x32xf32>
    %269 = arith.addf %267, %268 : vector<2x32xf32>
    %270 = math.tanh %269 : vector<2x32xf32>
    %271 = arith.mulf %266, %270 : vector<2x32xf32>
    %c8_87 = arith.constant 8 : index
    %c0_88 = arith.constant 0 : index
    %272 = vector.load %arg4[%c8_87, %c0_88] : memref<16x32xf32, #tpu.memory_space<vmem>>, vector<2x32xf32>
    tpu.vector_store %arg4[%c8_87, %c0_88], %271 {strides = array<i32>} : memref<16x32xf32, #tpu.memory_space<vmem>>, vector<2x32xf32>,
    %273 = vector.extract_strided_slice %271 {offsets = [0, 0], sizes = [1, 32], strides = [1, 1]} : vector<2x32xf32> to vector<1x32xf32>
    %274 = arith.truncf %273 : vector<1x32xf32> to vector<1x32xbf16>
    %cst_89 = arith.constant dense<0.000000e+00> : vector<1x32xf32>
    %275 = tpu.matmul %274, %8, %cst_89 {dimension_numbers = #tpu.dot_dimension_numbers<[1], [0], [0], [1], [0, 0, 1, 1], [], []>} : vector<1x32xbf16>, vector<32x32xbf16>, vector<1x32xf32> -> vector<1x32xf32>
    %276 = vector.extract_strided_slice %271 {offsets = [1, 0], sizes = [1, 32], strides = [1, 1]} : vector<2x32xf32> to vector<1x32xf32>
    %277 = arith.truncf %276 : vector<1x32xf32> to vector<1x32xbf16>
    %cst_90 = arith.constant dense<0.000000e+00> : vector<1x32xf32>
    %278 = tpu.matmul %277, %9, %cst_90 {dimension_numbers = #tpu.dot_dimension_numbers<[1], [0], [0], [1], [0, 0, 1, 1], [], []>} : vector<1x32xbf16>, vector<32x32xbf16>, vector<1x32xf32> -> vector<1x32xf32>
    %279 = arith.addf %275, %278 : vector<1x32xf32>
    %280 = arith.addf %279, %15 : vector<1x32xf32>
    %cst_91 = arith.constant 0.000000e+00 : f32
    %281 = vector.broadcast %cst_91 : f32 to vector<1x32xf32>
    %282 = arith.maximumf %280, %281 : vector<1x32xf32>
    %283 = arith.truncf %282 : vector<1x32xf32> to vector<1x32xbf16>
    %cst_92 = arith.constant dense<0.000000e+00> : vector<1x128xf32>
    %284 = tpu.matmul %283, %2, %cst_92 {dimension_numbers = #tpu.dot_dimension_numbers<[1], [0], [0], [1], [0, 0, 1, 1], [], []>} : vector<1x32xbf16>, vector<32x128xbf16>, vector<1x128xf32> -> vector<1x128xf32>
    %285 = arith.addf %284, %254 : vector<1x128xf32>
    %286 = arith.addf %285, %11 : vector<1x128xf32>
    %287 = math.tanh %286 : vector<1x128xf32>
    %cst_93 = arith.constant 5.000000e-01 : f32
    %288 = vector.broadcast %cst_93 : f32 to vector<1x128xf32>
    %289 = arith.mulf %288, %287 : vector<1x128xf32>
    %cst_94 = arith.constant 5.000000e-01 : f32
    %290 = vector.broadcast %cst_94 : f32 to vector<1x128xf32>
    %291 = arith.addf %289, %290 : vector<1x128xf32>
    %292 = vector.extract_strided_slice %291 {offsets = [0, 0], sizes = [1, 32], strides = [1, 1]} : vector<1x128xf32> to vector<1x32xf32>
    %293 = vector.extract_strided_slice %291 {offsets = [0, 32], sizes = [1, 32], strides = [1, 1]} : vector<1x128xf32> to vector<1x32xf32>
    %294 = vector.extract_strided_slice %287 {offsets = [0, 64], sizes = [1, 32], strides = [1, 1]} : vector<1x128xf32> to vector<1x32xf32>
    %295 = vector.extract_strided_slice %291 {offsets = [0, 96], sizes = [1, 32], strides = [1, 1]} : vector<1x128xf32> to vector<1x32xf32>
    %296 = arith.mulf %293, %247 : vector<1x32xf32>
    %297 = arith.mulf %292, %294 : vector<1x32xf32>
    %298 = arith.addf %296, %297 : vector<1x32xf32>
    %299 = math.tanh %298 : vector<1x32xf32>
    %300 = arith.mulf %295, %299 : vector<1x32xf32>
    %301 = vector.shape_cast %300 : vector<1x32xf32> to vector<1x32xf32>
    %302 = vector.broadcast %301 : vector<1x32xf32> to vector<2x32xf32>
    %c8_95 = arith.constant 8 : index
    %c0_96 = arith.constant 0 : index
    %303 = vector.load %arg5[%c8_95, %c0_96] : memref<16x32xf32, #tpu.memory_space<vmem>>, vector<2x32xf32>
    tpu.vector_store %arg5[%c8_95, %c0_96], %302 {strides = array<i32>} : memref<16x32xf32, #tpu.memory_space<vmem>>, vector<2x32xf32>,
    %304 = arith.truncf %300 : vector<1x32xf32> to vector<1x32xbf16>
    %cst_97 = arith.constant dense<0.000000e+00> : vector<1x128xf32>
    %305 = tpu.matmul %304, %3, %cst_97 {dimension_numbers = #tpu.dot_dimension_numbers<[1], [0], [0], [1], [0, 0, 1, 1], [], []>} : vector<1x32xbf16>, vector<32x128xbf16>, vector<1x128xf32> -> vector<1x128xf32>
    %306 = arith.truncf %271 : vector<2x32xf32> to vector<2x32xbf16>
    %cst_98 = arith.constant dense<0.000000e+00> : vector<2x128xf32>
    %307 = tpu.matmul %306, %1, %cst_98 {dimension_numbers = #tpu.dot_dimension_numbers<[1], [0], [0], [1], [0, 0, 1, 1], [], []>} : vector<2x32xbf16>, vector<32x128xbf16>, vector<2x128xf32> -> vector<2x128xf32>
    %308 = arith.addf %46, %307 : vector<2x128xf32>
    %309 = math.tanh %308 : vector<2x128xf32>
    %cst_99 = arith.constant 5.000000e-01 : f32
    %310 = vector.broadcast %cst_99 : f32 to vector<2x128xf32>
    %311 = arith.mulf %310, %309 : vector<2x128xf32>
    %cst_100 = arith.constant 5.000000e-01 : f32
    %312 = vector.broadcast %cst_100 : f32 to vector<2x128xf32>
    %313 = arith.addf %311, %312 : vector<2x128xf32>
    %314 = vector.extract_strided_slice %313 {offsets = [0, 0], sizes = [2, 32], strides = [1, 1]} : vector<2x128xf32> to vector<2x32xf32>
    %315 = vector.extract_strided_slice %313 {offsets = [0, 32], sizes = [2, 32], strides = [1, 1]} : vector<2x128xf32> to vector<2x32xf32>
    %316 = vector.extract_strided_slice %309 {offsets = [0, 64], sizes = [2, 32], strides = [1, 1]} : vector<2x128xf32> to vector<2x32xf32>
    %317 = vector.extract_strided_slice %313 {offsets = [0, 96], sizes = [2, 32], strides = [1, 1]} : vector<2x128xf32> to vector<2x32xf32>
    %318 = arith.mulf %315, %269 : vector<2x32xf32>
    %319 = arith.mulf %314, %316 : vector<2x32xf32>
    %320 = arith.addf %318, %319 : vector<2x32xf32>
    %321 = math.tanh %320 : vector<2x32xf32>
    %322 = arith.mulf %317, %321 : vector<2x32xf32>
    %c10_101 = arith.constant 10 : index
    %c0_102 = arith.constant 0 : index
    %323 = vector.load %arg4[%c10_101, %c0_102] : memref<16x32xf32, #tpu.memory_space<vmem>>, vector<2x32xf32>
    tpu.vector_store %arg4[%c10_101, %c0_102], %322 {strides = array<i32>} : memref<16x32xf32, #tpu.memory_space<vmem>>, vector<2x32xf32>,
    %324 = vector.extract_strided_slice %322 {offsets = [0, 0], sizes = [1, 32], strides = [1, 1]} : vector<2x32xf32> to vector<1x32xf32>
    %325 = arith.truncf %324 : vector<1x32xf32> to vector<1x32xbf16>
    %cst_103 = arith.constant dense<0.000000e+00> : vector<1x32xf32>
    %326 = tpu.matmul %325, %8, %cst_103 {dimension_numbers = #tpu.dot_dimension_numbers<[1], [0], [0], [1], [0, 0, 1, 1], [], []>} : vector<1x32xbf16>, vector<32x32xbf16>, vector<1x32xf32> -> vector<1x32xf32>
    %327 = vector.extract_strided_slice %322 {offsets = [1, 0], sizes = [1, 32], strides = [1, 1]} : vector<2x32xf32> to vector<1x32xf32>
    %328 = arith.truncf %327 : vector<1x32xf32> to vector<1x32xbf16>
    %cst_104 = arith.constant dense<0.000000e+00> : vector<1x32xf32>
    %329 = tpu.matmul %328, %9, %cst_104 {dimension_numbers = #tpu.dot_dimension_numbers<[1], [0], [0], [1], [0, 0, 1, 1], [], []>} : vector<1x32xbf16>, vector<32x32xbf16>, vector<1x32xf32> -> vector<1x32xf32>
    %330 = arith.addf %326, %329 : vector<1x32xf32>
    %331 = arith.addf %330, %15 : vector<1x32xf32>
    %cst_105 = arith.constant 0.000000e+00 : f32
    %332 = vector.broadcast %cst_105 : f32 to vector<1x32xf32>
    %333 = arith.maximumf %331, %332 : vector<1x32xf32>
    %334 = arith.truncf %333 : vector<1x32xf32> to vector<1x32xbf16>
    %cst_106 = arith.constant dense<0.000000e+00> : vector<1x128xf32>
    %335 = tpu.matmul %334, %2, %cst_106 {dimension_numbers = #tpu.dot_dimension_numbers<[1], [0], [0], [1], [0, 0, 1, 1], [], []>} : vector<1x32xbf16>, vector<32x128xbf16>, vector<1x128xf32> -> vector<1x128xf32>
    %336 = arith.addf %335, %305 : vector<1x128xf32>
    %337 = arith.addf %336, %11 : vector<1x128xf32>
    %338 = math.tanh %337 : vector<1x128xf32>
    %cst_107 = arith.constant 5.000000e-01 : f32
    %339 = vector.broadcast %cst_107 : f32 to vector<1x128xf32>
    %340 = arith.mulf %339, %338 : vector<1x128xf32>
    %cst_108 = arith.constant 5.000000e-01 : f32
    %341 = vector.broadcast %cst_108 : f32 to vector<1x128xf32>
    %342 = arith.addf %340, %341 : vector<1x128xf32>
    %343 = vector.extract_strided_slice %342 {offsets = [0, 0], sizes = [1, 32], strides = [1, 1]} : vector<1x128xf32> to vector<1x32xf32>
    %344 = vector.extract_strided_slice %342 {offsets = [0, 32], sizes = [1, 32], strides = [1, 1]} : vector<1x128xf32> to vector<1x32xf32>
    %345 = vector.extract_strided_slice %338 {offsets = [0, 64], sizes = [1, 32], strides = [1, 1]} : vector<1x128xf32> to vector<1x32xf32>
    %346 = vector.extract_strided_slice %342 {offsets = [0, 96], sizes = [1, 32], strides = [1, 1]} : vector<1x128xf32> to vector<1x32xf32>
    %347 = arith.mulf %344, %298 : vector<1x32xf32>
    %348 = arith.mulf %343, %345 : vector<1x32xf32>
    %349 = arith.addf %347, %348 : vector<1x32xf32>
    %350 = math.tanh %349 : vector<1x32xf32>
    %351 = arith.mulf %346, %350 : vector<1x32xf32>
    %352 = vector.shape_cast %351 : vector<1x32xf32> to vector<1x32xf32>
    %353 = vector.broadcast %352 : vector<1x32xf32> to vector<2x32xf32>
    %c10_109 = arith.constant 10 : index
    %c0_110 = arith.constant 0 : index
    %354 = vector.load %arg5[%c10_109, %c0_110] : memref<16x32xf32, #tpu.memory_space<vmem>>, vector<2x32xf32>
    tpu.vector_store %arg5[%c10_109, %c0_110], %353 {strides = array<i32>} : memref<16x32xf32, #tpu.memory_space<vmem>>, vector<2x32xf32>,
    %355 = arith.truncf %351 : vector<1x32xf32> to vector<1x32xbf16>
    %cst_111 = arith.constant dense<0.000000e+00> : vector<1x128xf32>
    %356 = tpu.matmul %355, %3, %cst_111 {dimension_numbers = #tpu.dot_dimension_numbers<[1], [0], [0], [1], [0, 0, 1, 1], [], []>} : vector<1x32xbf16>, vector<32x128xbf16>, vector<1x128xf32> -> vector<1x128xf32>
    %357 = arith.truncf %322 : vector<2x32xf32> to vector<2x32xbf16>
    %cst_112 = arith.constant dense<0.000000e+00> : vector<2x128xf32>
    %358 = tpu.matmul %357, %1, %cst_112 {dimension_numbers = #tpu.dot_dimension_numbers<[1], [0], [0], [1], [0, 0, 1, 1], [], []>} : vector<2x32xbf16>, vector<32x128xbf16>, vector<2x128xf32> -> vector<2x128xf32>
    %359 = arith.addf %47, %358 : vector<2x128xf32>
    %360 = math.tanh %359 : vector<2x128xf32>
    %cst_113 = arith.constant 5.000000e-01 : f32
    %361 = vector.broadcast %cst_113 : f32 to vector<2x128xf32>
    %362 = arith.mulf %361, %360 : vector<2x128xf32>
    %cst_114 = arith.constant 5.000000e-01 : f32
    %363 = vector.broadcast %cst_114 : f32 to vector<2x128xf32>
    %364 = arith.addf %362, %363 : vector<2x128xf32>
    %365 = vector.extract_strided_slice %364 {offsets = [0, 0], sizes = [2, 32], strides = [1, 1]} : vector<2x128xf32> to vector<2x32xf32>
    %366 = vector.extract_strided_slice %364 {offsets = [0, 32], sizes = [2, 32], strides = [1, 1]} : vector<2x128xf32> to vector<2x32xf32>
    %367 = vector.extract_strided_slice %360 {offsets = [0, 64], sizes = [2, 32], strides = [1, 1]} : vector<2x128xf32> to vector<2x32xf32>
    %368 = vector.extract_strided_slice %364 {offsets = [0, 96], sizes = [2, 32], strides = [1, 1]} : vector<2x128xf32> to vector<2x32xf32>
    %369 = arith.mulf %366, %320 : vector<2x32xf32>
    %370 = arith.mulf %365, %367 : vector<2x32xf32>
    %371 = arith.addf %369, %370 : vector<2x32xf32>
    %372 = math.tanh %371 : vector<2x32xf32>
    %373 = arith.mulf %368, %372 : vector<2x32xf32>
    %c12_115 = arith.constant 12 : index
    %c0_116 = arith.constant 0 : index
    %374 = vector.load %arg4[%c12_115, %c0_116] : memref<16x32xf32, #tpu.memory_space<vmem>>, vector<2x32xf32>
    tpu.vector_store %arg4[%c12_115, %c0_116], %373 {strides = array<i32>} : memref<16x32xf32, #tpu.memory_space<vmem>>, vector<2x32xf32>,
    %375 = vector.extract_strided_slice %373 {offsets = [0, 0], sizes = [1, 32], strides = [1, 1]} : vector<2x32xf32> to vector<1x32xf32>
    %376 = arith.truncf %375 : vector<1x32xf32> to vector<1x32xbf16>
    %cst_117 = arith.constant dense<0.000000e+00> : vector<1x32xf32>
    %377 = tpu.matmul %376, %8, %cst_117 {dimension_numbers = #tpu.dot_dimension_numbers<[1], [0], [0], [1], [0, 0, 1, 1], [], []>} : vector<1x32xbf16>, vector<32x32xbf16>, vector<1x32xf32> -> vector<1x32xf32>
    %378 = vector.extract_strided_slice %373 {offsets = [1, 0], sizes = [1, 32], strides = [1, 1]} : vector<2x32xf32> to vector<1x32xf32>
    %379 = arith.truncf %378 : vector<1x32xf32> to vector<1x32xbf16>
    %cst_118 = arith.constant dense<0.000000e+00> : vector<1x32xf32>
    %380 = tpu.matmul %379, %9, %cst_118 {dimension_numbers = #tpu.dot_dimension_numbers<[1], [0], [0], [1], [0, 0, 1, 1], [], []>} : vector<1x32xbf16>, vector<32x32xbf16>, vector<1x32xf32> -> vector<1x32xf32>
    %381 = arith.addf %377, %380 : vector<1x32xf32>
    %382 = arith.addf %381, %15 : vector<1x32xf32>
    %cst_119 = arith.constant 0.000000e+00 : f32
    %383 = vector.broadcast %cst_119 : f32 to vector<1x32xf32>
    %384 = arith.maximumf %382, %383 : vector<1x32xf32>
    %385 = arith.truncf %384 : vector<1x32xf32> to vector<1x32xbf16>
    %cst_120 = arith.constant dense<0.000000e+00> : vector<1x128xf32>
    %386 = tpu.matmul %385, %2, %cst_120 {dimension_numbers = #tpu.dot_dimension_numbers<[1], [0], [0], [1], [0, 0, 1, 1], [], []>} : vector<1x32xbf16>, vector<32x128xbf16>, vector<1x128xf32> -> vector<1x128xf32>
    %387 = arith.addf %386, %356 : vector<1x128xf32>
    %388 = arith.addf %387, %11 : vector<1x128xf32>
    %389 = math.tanh %388 : vector<1x128xf32>
    %cst_121 = arith.constant 5.000000e-01 : f32
    %390 = vector.broadcast %cst_121 : f32 to vector<1x128xf32>
    %391 = arith.mulf %390, %389 : vector<1x128xf32>
    %cst_122 = arith.constant 5.000000e-01 : f32
    %392 = vector.broadcast %cst_122 : f32 to vector<1x128xf32>
    %393 = arith.addf %391, %392 : vector<1x128xf32>
    %394 = vector.extract_strided_slice %393 {offsets = [0, 0], sizes = [1, 32], strides = [1, 1]} : vector<1x128xf32> to vector<1x32xf32>
    %395 = vector.extract_strided_slice %393 {offsets = [0, 32], sizes = [1, 32], strides = [1, 1]} : vector<1x128xf32> to vector<1x32xf32>
    %396 = vector.extract_strided_slice %389 {offsets = [0, 64], sizes = [1, 32], strides = [1, 1]} : vector<1x128xf32> to vector<1x32xf32>
    %397 = vector.extract_strided_slice %393 {offsets = [0, 96], sizes = [1, 32], strides = [1, 1]} : vector<1x128xf32> to vector<1x32xf32>
    %398 = arith.mulf %395, %349 : vector<1x32xf32>
    %399 = arith.mulf %394, %396 : vector<1x32xf32>
    %400 = arith.addf %398, %399 : vector<1x32xf32>
    %401 = math.tanh %400 : vector<1x32xf32>
    %402 = arith.mulf %397, %401 : vector<1x32xf32>
    %403 = vector.shape_cast %402 : vector<1x32xf32> to vector<1x32xf32>
    %404 = vector.broadcast %403 : vector<1x32xf32> to vector<2x32xf32>
    %c12_123 = arith.constant 12 : index
    %c0_124 = arith.constant 0 : index
    %405 = vector.load %arg5[%c12_123, %c0_124] : memref<16x32xf32, #tpu.memory_space<vmem>>, vector<2x32xf32>
    tpu.vector_store %arg5[%c12_123, %c0_124], %404 {strides = array<i32>} : memref<16x32xf32, #tpu.memory_space<vmem>>, vector<2x32xf32>,
    %406 = arith.truncf %402 : vector<1x32xf32> to vector<1x32xbf16>
    %cst_125 = arith.constant dense<0.000000e+00> : vector<1x128xf32>
    %407 = tpu.matmul %406, %3, %cst_125 {dimension_numbers = #tpu.dot_dimension_numbers<[1], [0], [0], [1], [0, 0, 1, 1], [], []>} : vector<1x32xbf16>, vector<32x128xbf16>, vector<1x128xf32> -> vector<1x128xf32>
    %408 = arith.truncf %373 : vector<2x32xf32> to vector<2x32xbf16>
    %cst_126 = arith.constant dense<0.000000e+00> : vector<2x128xf32>
    %409 = tpu.matmul %408, %1, %cst_126 {dimension_numbers = #tpu.dot_dimension_numbers<[1], [0], [0], [1], [0, 0, 1, 1], [], []>} : vector<2x32xbf16>, vector<32x128xbf16>, vector<2x128xf32> -> vector<2x128xf32>
    %410 = arith.addf %48, %409 : vector<2x128xf32>
    %411 = math.tanh %410 : vector<2x128xf32>
    %cst_127 = arith.constant 5.000000e-01 : f32
    %412 = vector.broadcast %cst_127 : f32 to vector<2x128xf32>
    %413 = arith.mulf %412, %411 : vector<2x128xf32>
    %cst_128 = arith.constant 5.000000e-01 : f32
    %414 = vector.broadcast %cst_128 : f32 to vector<2x128xf32>
    %415 = arith.addf %413, %414 : vector<2x128xf32>
    %416 = vector.extract_strided_slice %415 {offsets = [0, 0], sizes = [2, 32], strides = [1, 1]} : vector<2x128xf32> to vector<2x32xf32>
    %417 = vector.extract_strided_slice %415 {offsets = [0, 32], sizes = [2, 32], strides = [1, 1]} : vector<2x128xf32> to vector<2x32xf32>
    %418 = vector.extract_strided_slice %411 {offsets = [0, 64], sizes = [2, 32], strides = [1, 1]} : vector<2x128xf32> to vector<2x32xf32>
    %419 = vector.extract_strided_slice %415 {offsets = [0, 96], sizes = [2, 32], strides = [1, 1]} : vector<2x128xf32> to vector<2x32xf32>
    %420 = arith.mulf %417, %371 : vector<2x32xf32>
    %421 = arith.mulf %416, %418 : vector<2x32xf32>
    %422 = arith.addf %420, %421 : vector<2x32xf32>
    %423 = math.tanh %422 : vector<2x32xf32>
    %424 = arith.mulf %419, %423 : vector<2x32xf32>
    %c14 = arith.constant 14 : index
    %c0_129 = arith.constant 0 : index
    %425 = vector.load %arg4[%c14, %c0_129] : memref<16x32xf32, #tpu.memory_space<vmem>>, vector<2x32xf32>
    tpu.vector_store %arg4[%c14, %c0_129], %424 {strides = array<i32>} : memref<16x32xf32, #tpu.memory_space<vmem>>, vector<2x32xf32>,
    %426 = vector.extract_strided_slice %424 {offsets = [0, 0], sizes = [1, 32], strides = [1, 1]} : vector<2x32xf32> to vector<1x32xf32>
    %427 = arith.truncf %426 : vector<1x32xf32> to vector<1x32xbf16>
    %cst_130 = arith.constant dense<0.000000e+00> : vector<1x32xf32>
    %428 = tpu.matmul %427, %8, %cst_130 {dimension_numbers = #tpu.dot_dimension_numbers<[1], [0], [0], [1], [0, 0, 1, 1], [], []>} : vector<1x32xbf16>, vector<32x32xbf16>, vector<1x32xf32> -> vector<1x32xf32>
    %429 = vector.extract_strided_slice %424 {offsets = [1, 0], sizes = [1, 32], strides = [1, 1]} : vector<2x32xf32> to vector<1x32xf32>
    %430 = arith.truncf %429 : vector<1x32xf32> to vector<1x32xbf16>
    %cst_131 = arith.constant dense<0.000000e+00> : vector<1x32xf32>
    %431 = tpu.matmul %430, %9, %cst_131 {dimension_numbers = #tpu.dot_dimension_numbers<[1], [0], [0], [1], [0, 0, 1, 1], [], []>} : vector<1x32xbf16>, vector<32x32xbf16>, vector<1x32xf32> -> vector<1x32xf32>
    %432 = arith.addf %428, %431 : vector<1x32xf32>
    %433 = arith.addf %432, %15 : vector<1x32xf32>
    %cst_132 = arith.constant 0.000000e+00 : f32
    %434 = vector.broadcast %cst_132 : f32 to vector<1x32xf32>
    %435 = arith.maximumf %433, %434 : vector<1x32xf32>
    %436 = arith.truncf %435 : vector<1x32xf32> to vector<1x32xbf16>
    %cst_133 = arith.constant dense<0.000000e+00> : vector<1x128xf32>
    %437 = tpu.matmul %436, %2, %cst_133 {dimension_numbers = #tpu.dot_dimension_numbers<[1], [0], [0], [1], [0, 0, 1, 1], [], []>} : vector<1x32xbf16>, vector<32x128xbf16>, vector<1x128xf32> -> vector<1x128xf32>
    %438 = arith.addf %437, %407 : vector<1x128xf32>
    %439 = arith.addf %438, %11 : vector<1x128xf32>
    %440 = math.tanh %439 : vector<1x128xf32>
    %cst_134 = arith.constant 5.000000e-01 : f32
    %441 = vector.broadcast %cst_134 : f32 to vector<1x128xf32>
    %442 = arith.mulf %441, %440 : vector<1x128xf32>
    %cst_135 = arith.constant 5.000000e-01 : f32
    %443 = vector.broadcast %cst_135 : f32 to vector<1x128xf32>
    %444 = arith.addf %442, %443 : vector<1x128xf32>
    %445 = vector.extract_strided_slice %444 {offsets = [0, 0], sizes = [1, 32], strides = [1, 1]} : vector<1x128xf32> to vector<1x32xf32>
    %446 = vector.extract_strided_slice %444 {offsets = [0, 32], sizes = [1, 32], strides = [1, 1]} : vector<1x128xf32> to vector<1x32xf32>
    %447 = vector.extract_strided_slice %440 {offsets = [0, 64], sizes = [1, 32], strides = [1, 1]} : vector<1x128xf32> to vector<1x32xf32>
    %448 = vector.extract_strided_slice %444 {offsets = [0, 96], sizes = [1, 32], strides = [1, 1]} : vector<1x128xf32> to vector<1x32xf32>
    %449 = arith.mulf %446, %400 : vector<1x32xf32>
    %450 = arith.mulf %445, %447 : vector<1x32xf32>
    %451 = arith.addf %449, %450 : vector<1x32xf32>
    %452 = math.tanh %451 : vector<1x32xf32>
    %453 = arith.mulf %448, %452 : vector<1x32xf32>
    %454 = vector.shape_cast %453 : vector<1x32xf32> to vector<1x32xf32>
    %455 = vector.broadcast %454 : vector<1x32xf32> to vector<2x32xf32>
    %c14_136 = arith.constant 14 : index
    %c0_137 = arith.constant 0 : index
    %456 = vector.load %arg5[%c14_136, %c0_137] : memref<16x32xf32, #tpu.memory_space<vmem>>, vector<2x32xf32>
    tpu.vector_store %arg5[%c14_136, %c0_137], %455 {strides = array<i32>} : memref<16x32xf32, #tpu.memory_space<vmem>>, vector<2x32xf32>,
    %c176 = arith.constant 176 : index
    %c0_138 = arith.constant 0 : index
    %457 = vector.load %arg1[%c176, %c0_138] : memref<272x32xbf16, #tpu.memory_space<vmem>>, vector<32x32xbf16>
    %c208 = arith.constant 208 : index
    %c0_139 = arith.constant 0 : index
    %458 = vector.load %arg1[%c208, %c0_139] : memref<272x32xbf16, #tpu.memory_space<vmem>>, vector<32x32xbf16>
    %c240 = arith.constant 240 : index
    %c0_140 = arith.constant 0 : index
    %459 = vector.load %arg1[%c240, %c0_140] : memref<272x32xbf16, #tpu.memory_space<vmem>>, vector<32x32xbf16>
    %c6_141 = arith.constant 6 : index
    %c0_142 = arith.constant 0 : index
    %460 = vector.load %arg2[%c6_141, %c0_142] : memref<16x128xf32, #tpu.memory_space<vmem>>, vector<1x32xf32>
    %c7 = arith.constant 7 : index
    %c0_143 = arith.constant 0 : index
    %461 = vector.load %arg2[%c7, %c0_143] : memref<16x128xf32, #tpu.memory_space<vmem>>, vector<1x32xf32>
    %c0_144 = arith.constant 0 : index
    %c0_145 = arith.constant 0 : index
    %462 = vector.load %arg4[%c0_144, %c0_145] : memref<16x32xf32, #tpu.memory_space<vmem>>, vector<16x32xf32>
    %463 = arith.truncf %462 : vector<16x32xf32> to vector<16x32xbf16>
    %cst_146 = arith.constant dense<0.000000e+00> : vector<16x32xf32>
    %464 = tpu.matmul %463, %457, %cst_146 {dimension_numbers = #tpu.dot_dimension_numbers<[1], [0], [0], [1], [0, 0, 1, 1], [], []>} : vector<16x32xbf16>, vector<32x32xbf16>, vector<16x32xf32> -> vector<16x32xf32>
    %c0_147 = arith.constant 0 : index
    %c0_148 = arith.constant 0 : index
    %465 = vector.load %arg5[%c0_147, %c0_148] : memref<16x32xf32, #tpu.memory_space<vmem>>, vector<16x32xf32>
    %466 = arith.truncf %465 : vector<16x32xf32> to vector<16x32xbf16>
    %cst_149 = arith.constant dense<0.000000e+00> : vector<16x32xf32>
    %467 = tpu.matmul %466, %458, %cst_149 {dimension_numbers = #tpu.dot_dimension_numbers<[1], [0], [0], [1], [0, 0, 1, 1], [], []>} : vector<16x32xbf16>, vector<32x32xbf16>, vector<16x32xf32> -> vector<16x32xf32>
    %468 = arith.addf %464, %467 : vector<16x32xf32>
    %469 = vector.broadcast %460 : vector<1x32xf32> to vector<16x32xf32>
    %470 = arith.addf %468, %469 : vector<16x32xf32>
    %cst_150 = arith.constant 0.000000e+00 : f32
    %471 = vector.broadcast %cst_150 : f32 to vector<16x32xf32>
    %472 = arith.maximumf %470, %471 : vector<16x32xf32>
    %473 = arith.truncf %472 : vector<16x32xf32> to vector<16x32xbf16>
    %cst_151 = arith.constant dense<0.000000e+00> : vector<16x32xf32>
    %474 = tpu.matmul %473, %459, %cst_151 {dimension_numbers = #tpu.dot_dimension_numbers<[1], [0], [0], [1], [0, 0, 1, 1], [], []>} : vector<16x32xbf16>, vector<32x32xbf16>, vector<16x32xf32> -> vector<16x32xf32>
    %475 = vector.broadcast %461 : vector<1x32xf32> to vector<16x32xf32>
    %476 = arith.addf %474, %475 : vector<16x32xf32>
    %cst_152 = arith.constant 0.000000e+00 : f32
    %477 = vector.broadcast %cst_152 : f32 to vector<16x32xf32>
    %478 = arith.maximumf %476, %477 : vector<16x32xf32>
    %479 = vector.extract_strided_slice %478 {offsets = [0, 0], sizes = [16, 8], strides = [1, 1]} : vector<16x32xf32> to vector<16x8xf32>
    %c0_153 = arith.constant 0 : index
    %c0_154 = arith.constant 0 : index
    %480 = vector.load %arg3[%c0_153, %c0_154] : memref<16x8xf32, #tpu.memory_space<vmem>>, vector<16x8xf32>
    tpu.vector_store %arg3[%c0_153, %c0_154], %479 {strides = array<i32>} : memref<16x8xf32, #tpu.memory_space<vmem>>, vector<16x8xf32>,
    return
  }
}

</mosaic_0001>

<llo_original>
// kernel: tpu_custom_call.1
$region0: #{tpu_custom_call.1}
  #allocation0 [shape = 'u32[]', space=smem, size = 0x4, offset = 0x4, fixed_abs, tag = 'smem constant byte address 0x4 - core index']
  #allocation1 [shape = 'u32[144,128]{1,0:T(1,128)}', space=vmem, size = 0x12000, scoped, tag = 'internal scratch']
  #allocation2 [shape = 'f32[16,32]{1,0:T(8,128)}', space=vmem, size = 0x2000, scoped, tag = 'scratch operand']
  #allocation3 [shape = 'f32[16,32]{1,0:T(8,128)}', space=vmem, size = 0x2000, scoped, tag = 'scratch operand']
  %s0 = inlined_call_operand.vmem [shape: bf16[128,128], index: 0, kind: input, shape index: {}]
  %s1 = inlined_call_operand.vmem [shape: bf16[272,32], index: 1, kind: input, shape index: {}]
  %s2 = inlined_call_operand.vmem [shape: f32[16,128], index: 2, kind: input, shape index: {}]
  %s3 = inlined_call_operand.vmem [shape: f32[16,8], index: 3, kind: output, shape index: {}]
  %s4 = sld [smem:[#allocation0]]
  $region22: #{tpu_custom_call.1} parent=0
    _
  %s6 = ssub.s32 1, %s4
  %s7 = scalar_select 0, %s6, %s4
  // Predicated region
  $region2: #{tpu_custom_call.1} parent=0 // pred_check
    _
  $region3: #{tpu_custom_call.1} parent=0 // pred_check_branch
    %9 = sbr.rel (0) target = $region5
  $region4: #{tpu_custom_call.1} parent=0 // pred_region
    _
  $region5: #{tpu_custom_call.1} parent=0 // pred_fallthru
    _
  // Predicated region
  $region6: #{tpu_custom_call.1} parent=0 // pred_check
    _
  $region7: #{tpu_custom_call.1} parent=0 // pred_check_branch
    %11 = sbr.rel (0) target = $region9
  $region8: #{tpu_custom_call.1} parent=0 // pred_region
    _
  $region9: #{tpu_custom_call.1} parent=0 // pred_fallthru
    _
  // Predicated region
  $region10: #{tpu_custom_call.1} parent=0 // pred_check
    _
  $region11: #{tpu_custom_call.1} parent=0 // pred_check_branch
    %13 = sbr.rel (0) target = $region13
  $region12: #{tpu_custom_call.1} parent=0 // pred_region
    _
  $region13: #{tpu_custom_call.1} parent=0 // pred_fallthru
    _
  %v15 = vld [vmem:[%s0] sm:$0xf]
  %v16 = vld [vmem:[%s0 + $0x4] sm:$0xf]
  %v17 = vld [vmem:[%s0 + $0x8] sm:$0xf]
  %v18 = vld [vmem:[%s0 + $0xc] sm:$0xf]
  %v19 = vld [vmem:[%s0 + $0x10] sm:$0xf]
  %v20 = vld [vmem:[%s0 + $0x14] sm:$0xf]
  %v21 = vld [vmem:[%s0 + $0x18] sm:$0xf]
  %v22 = vld [vmem:[%s0 + $0x1c] sm:$0xf]
  %v23 = vld [vmem:[%s0 + $0x20] sm:$0xf]
  %v24 = vld [vmem:[%s0 + $0x24] sm:$0xf]
  %v25 = vld [vmem:[%s0 + $0x28] sm:$0xf]
  %v26 = vld [vmem:[%s0 + $0x2c] sm:$0xf]
  %v27 = vld [vmem:[%s0 + $0x30] sm:$0xf]
  %v28 = vld [vmem:[%s0 + $0x34] sm:$0xf]
  %v29 = vld [vmem:[%s0 + $0x38] sm:$0xf]
  %v30 = vld [vmem:[%s0 + $0x3c] sm:$0xf]
  %v31 = vld [vmem:[%s1] sm:$0xf]
  %v32 = vld [vmem:[%s1 + $0x4] sm:$0xf]
  %v33 = vld [vmem:[%s1 + $0x8] sm:$0xf]
  %v34 = vld [vmem:[%s1 + $0xc] sm:$0xf]
  %v35 = vld [vmem:[%s1 + $0x10] sm:$0xf]
  %v36 = vld [vmem:[%s1 + $0x14] sm:$0xf]
  %v37 = vld [vmem:[%s1 + $0x18] sm:$0xf]
  %v38 = vld [vmem:[%s1 + $0x1c] sm:$0xf]
  %v39 = vld [vmem:[%s1 + $0x20] sm:$0xf]
  %v40 = vld [vmem:[%s1 + $0x24] sm:$0xf]
  %v41 = vld [vmem:[%s1 + $0x28] sm:$0xf]
  %v42 = vld [vmem:[%s1 + $0x2c] sm:$0xf]
  %v43 = vld [vmem:[%s1 + $0x30] sm:$0xf]
  %v44 = vld [vmem:[%s1 + $0x34] sm:$0xf]
  %v45 = vld [vmem:[%s1 + $0x38] sm:$0xf]
  %v46 = vld [vmem:[%s1 + $0x3c] sm:$0xf]
  %v47 = vld [vmem:[%s1 + $0x40] sm:$0xf]
  %v48 = vld [vmem:[%s1 + $0x44] sm:$0xf]
  %v49 = vld [vmem:[%s1 + $0x48] sm:$0xf]
  %v50 = vld [vmem:[%s1 + $0x4c] sm:$0xf]
  %v51 = vld [vmem:[%s1 + $0x50] sm:$0xf]
  %v52 = vld [vmem:[%s1 + $0x54] sm:$0xf]
  %v53 = vld [vmem:[%s2] sm:$0x1]
  %v54 = vld [vmem:[%s2 + $0x1] sm:$0x1]
  %v55 = vld [vmem:[%s2 + $0x2] sm:$0x1]
  %v56 = vld [vmem:[%s2 + $0x3] sm:$0x1]
  %v57 = vld [vmem:[%s2 + $0x4] sm:$0x1]
  %v58 = vld [vmem:[%s2 + $0x5] sm:$0x1]
  %v59 = vld [vmem:[%s2 + $0x8] sm:$0x3]
  %v60 = vld [vmem:[%s2 + $0xa] sm:$0x3]
  %v61 = vld [vmem:[%s2 + $0xc] sm:$0x1]
  %v62 = vld [vmem:[%s2 + $0xd] sm:$0x1]
  %v63 = vlaneseq
  %v64 = vshrl.u32 %v63, 7
  %v65 = vsub.s32 0, %v64
  %v66 = vrot.slane %v55, %v65
  %v69 = vunpack.c.l.b16 %v31
  %v70 = vunpack.c.l.b16 %v32
  %v71 = vpack.c.b16 %v70, %v69
  %v76 = vunpack.c.l.b16 %v33
  %v77 = vunpack.c.l.b16 %v34
  %v78 = vunpack.c.l.b16 %v35
  %v79 = vunpack.c.l.b16 %v36
  %v80 = vpack.c.b16 %v77, %v76
  %v81 = vpack.c.b16 %v79, %v78
  %vm84 = vcmask 261120
  %v86 = vsel %vm84, %v71, 0
  %88 = vmatprep.subr.bf16.mxu0 0
  %89 = vmatpush1.bf16.msra.mxu0 %v80
  %90 = vmatprep.subr.bf16.mxu0 0
  %91 = vmatpush1.bf16.msra.mxu0 %v81
  %92 = vmatprep.subr.bf16.mxu0 0
  %93 = vmatpush1.bf16.msra.mxu0 0
  %94 = vmatprep.subr.bf16.mxu0 0
  %95 = vmatpush1.bf16.msra.mxu0 0
  %96 = vmatprep.subr.bf16.mxu0 0
  %97 = vmatpush1.bf16.msra.mxu0 0
  %98 = vmatprep.subr.bf16.mxu0 0
  %99 = vmatpush1.bf16.msra.mxu0 0
  %100 = vmatprep.subr.bf16.mxu0 0
  %101 = vmatpush1.bf16.msra.mxu0 0
  %102 = vmatprep.subr.bf16.mxu0 0
  %103 = vmatpush1.bf16.msra.mxu0 0
  %104 = vmatprep.subr.bf16.mxu0 0
  %105 = vmatpush1.bf16.msra.mxu0 0
  %106 = vmatprep.subr.bf16.mxu0 0
  %107 = vmatpush1.bf16.msra.mxu0 0
  %108 = vmatprep.subr.bf16.mxu0 0
  %109 = vmatpush1.bf16.msra.mxu0 0
  %110 = vmatprep.subr.bf16.mxu0 0
  %111 = vmatpush1.bf16.msra.mxu0 0
  %112 = vmatprep.subr.bf16.mxu0 0
  %113 = vmatpush1.bf16.msra.mxu0 0
  %114 = vmatprep.subr.bf16.mxu0 0
  %115 = vmatpush1.bf16.msra.mxu0 0
  %116 = vmatprep.subr.bf16.mxu0 0
  %117 = vmatpush1.bf16.msra.mxu0 0
  %118 = vmatprep.subr.bf16.mxu0 0
  %119 = vmatpush1.bf16.msra.mxu0 0
  %120 = vmatprep.mubr.bf16.mxu0 0
  %121 = vmatmul.mubr.bf16.gmra.mrb[0].mxu0 %v86
  %v122 = vpop.f32.mrb[0].mxu0
  %v123 = vadd.f32 %v66, %v122
  %v124 = vpop.f32.mrb[0].mxu0
  %v125 = vpop.f32.mrb[0].mxu0
  %v126 = vadd.f32 %v66, %v125
  %v127 = vpop.f32.mrb[0].mxu0
  %128 = vdwg.mxu0
  %v129 = vmax.f32 %v123, 0.0
  %v130 = vmax.f32 %v126, 0.0
  %v131 = vpack.c.bf16 %v130, %v129
  %v132 = vlaneseq
  %v133 = vshrl.u32 %v132, 7
  %v134 = vsub.s32 0, %v133
  %v135 = vrot.slane %v56, %v134
  %v140 = vunpack.c.l.b16 %v37
  %v141 = vunpack.c.l.b16 %v38
  %v142 = vunpack.c.l.b16 %v39
  %v143 = vunpack.c.l.b16 %v40
  %v144 = vpack.c.b16 %v141, %v140
  %v145 = vpack.c.b16 %v143, %v142
  %v149 = vsel %vm84, %v131, 0
  %151 = vmatprep.subr.bf16.mxu0 0
  %152 = vmatpush1.bf16.msra.mxu0 %v144
  %153 = vmatprep.subr.bf16.mxu0 0
  %154 = vmatpush1.bf16.msra.mxu0 %v145
  %155 = vmatprep.subr.bf16.mxu0 0
  %156 = vmatpush1.bf16.msra.mxu0 0
  %157 = vmatprep.subr.bf16.mxu0 0
  %158 = vmatpush1.bf16.msra.mxu0 0
  %159 = vmatprep.subr.bf16.mxu0 0
  %160 = vmatpush1.bf16.msra.mxu0 0
  %161 = vmatprep.subr.bf16.mxu0 0
  %162 = vmatpush1.bf16.msra.mxu0 0
  %163 = vmatprep.subr.bf16.mxu0 0
  %164 = vmatpush1.bf16.msra.mxu0 0
  %165 = vmatprep.subr.bf16.mxu0 0
  %166 = vmatpush1.bf16.msra.mxu0 0
  %167 = vmatprep.subr.bf16.mxu0 0
  %168 = vmatpush1.bf16.msra.mxu0 0
  %169 = vmatprep.subr.bf16.mxu0 0
  %170 = vmatpush1.bf16.msra.mxu0 0
  %171 = vmatprep.subr.bf16.mxu0 0
  %172 = vmatpush1.bf16.msra.mxu0 0
  %173 = vmatprep.subr.bf16.mxu0 0
  %174 = vmatpush1.bf16.msra.mxu0 0
  %175 = vmatprep.subr.bf16.mxu0 0
  %176 = vmatpush1.bf16.msra.mxu0 0
  %177 = vmatprep.subr.bf16.mxu0 0
  %178 = vmatpush1.bf16.msra.mxu0 0
  %179 = vmatprep.subr.bf16.mxu0 0
  %180 = vmatpush1.bf16.msra.mxu0 0
  %181 = vmatprep.subr.bf16.mxu0 0
  %182 = vmatpush1.bf16.msra.mxu0 0
  %183 = vmatprep.mubr.bf16.mxu0 0
  %184 = vmatmul.mubr.bf16.gmra.mrb[0].mxu0 %v149
  %v185 = vpop.f32.mrb[0].mxu0
  %v186 = vadd.f32 %v135, %v185
  %v187 = vpop.f32.mrb[0].mxu0
  %v188 = vpop.f32.mrb[0].mxu0
  %v189 = vadd.f32 %v135, %v188
  %v190 = vpop.f32.mrb[0].mxu0
  %191 = vdwg.mxu0
  %v192 = vmax.f32 %v186, 0.0
  %v193 = vmax.f32 %v189, 0.0
  %v194 = vpack.c.bf16 %v193, %v192
  %v195 = vlaneseq
  %v196 = vshrl.u32 %v195, 7
  %v197 = vsub.s32 0, %v196
  %v198 = vrot.slane %v57, %v197
  %v203 = vunpack.c.l.b16 %v41
  %v204 = vunpack.c.l.b16 %v42
  %v205 = vunpack.c.l.b16 %v43
  %v206 = vunpack.c.l.b16 %v44
  %v207 = vpack.c.b16 %v204, %v203
  %v208 = vpack.c.b16 %v206, %v205
  %v212 = vsel %vm84, %v194, 0
  %214 = vmatprep.subr.bf16.mxu0 0
  %215 = vmatpush1.bf16.msra.mxu0 %v207
  %216 = vmatprep.subr.bf16.mxu0 0
  %217 = vmatpush1.bf16.msra.mxu0 %v208
  %218 = vmatprep.subr.bf16.mxu0 0
  %219 = vmatpush1.bf16.msra.mxu0 0
  %220 = vmatprep.subr.bf16.mxu0 0
  %221 = vmatpush1.bf16.msra.mxu0 0
  %222 = vmatprep.subr.bf16.mxu0 0
  %223 = vmatpush1.bf16.msra.mxu0 0
  %224 = vmatprep.subr.bf16.mxu0 0
  %225 = vmatpush1.bf16.msra.mxu0 0
  %226 = vmatprep.subr.bf16.mxu0 0
  %227 = vmatpush1.bf16.msra.mxu0 0
  %228 = vmatprep.subr.bf16.mxu0 0
  %229 = vmatpush1.bf16.msra.mxu0 0
  %230 = vmatprep.subr.bf16.mxu0 0
  %231 = vmatpush1.bf16.msra.mxu0 0
  %232 = vmatprep.subr.bf16.mxu0 0
  %233 = vmatpush1.bf16.msra.mxu0 0
  %234 = vmatprep.subr.bf16.mxu0 0
  %235 = vmatpush1.bf16.msra.mxu0 0
  %236 = vmatprep.subr.bf16.mxu0 0
  %237 = vmatpush1.bf16.msra.mxu0 0
  %238 = vmatprep.subr.bf16.mxu0 0
  %239 = vmatpush1.bf16.msra.mxu0 0
  %240 = vmatprep.subr.bf16.mxu0 0
  %241 = vmatpush1.bf16.msra.mxu0 0
  %242 = vmatprep.subr.bf16.mxu0 0
  %243 = vmatpush1.bf16.msra.mxu0 0
  %244 = vmatprep.subr.bf16.mxu0 0
  %245 = vmatpush1.bf16.msra.mxu0 0
  %246 = vmatprep.mubr.bf16.mxu0 0
  %247 = vmatmul.mubr.bf16.gmra.mrb[0].mxu0 %v212
  %v248 = vpop.f32.mrb[0].mxu0
  %v249 = vadd.f32 %v198, %v248
  %v250 = vpop.f32.mrb[0].mxu0
  %v251 = vpop.f32.mrb[0].mxu0
  %v252 = vadd.f32 %v198, %v251
  %v253 = vpop.f32.mrb[0].mxu0
  %254 = vdwg.mxu0
  %v255 = vmax.f32 %v249, 0.0
  %v256 = vmax.f32 %v252, 0.0
  %v257 = vpack.c.bf16 %v256, %v255
  %v258 = vlaneseq
  %v259 = vshrl.u32 %v258, 7
  %v260 = vsub.s32 0, %v259
  %v261 = vrot.slane %v53, %v260
  %v266 = vunpack.c.l.b16 %v15
  %v267 = vunpack.c.l.b16 %v16
  %v268 = vunpack.c.l.b16 %v17
  %v269 = vunpack.c.l.b16 %v18
  %v270 = vpack.c.b16 %v267, %v266
  %v271 = vpack.c.b16 %v269, %v268
  %v275 = vsel %vm84, %v257, 0
  %277 = vmatprep.subr.bf16.mxu0 0
  %278 = vmatpush1.bf16.msra.mxu0 %v270
  %279 = vmatprep.subr.bf16.mxu0 0
  %280 = vmatpush1.bf16.msra.mxu0 %v271
  %281 = vmatprep.subr.bf16.mxu0 0
  %282 = vmatpush1.bf16.msra.mxu0 0
  %283 = vmatprep.subr.bf16.mxu0 0
  %284 = vmatpush1.bf16.msra.mxu0 0
  %285 = vmatprep.subr.bf16.mxu0 0
  %286 = vmatpush1.bf16.msra.mxu0 0
  %287 = vmatprep.subr.bf16.mxu0 0
  %288 = vmatpush1.bf16.msra.mxu0 0
  %289 = vmatprep.subr.bf16.mxu0 0
  %290 = vmatpush1.bf16.msra.mxu0 0
  %291 = vmatprep.subr.bf16.mxu0 0
  %292 = vmatpush1.bf16.msra.mxu0 0
  %293 = vmatprep.subr.bf16.mxu0 0
  %294 = vmatpush1.bf16.msra.mxu0 0
  %295 = vmatprep.subr.bf16.mxu0 0
  %296 = vmatpush1.bf16.msra.mxu0 0
  %297 = vmatprep.subr.bf16.mxu0 0
  %298 = vmatpush1.bf16.msra.mxu0 0
  %299 = vmatprep.subr.bf16.mxu0 0
  %300 = vmatpush1.bf16.msra.mxu0 0
  %301 = vmatprep.subr.bf16.mxu0 0
  %302 = vmatpush1.bf16.msra.mxu0 0
  %303 = vmatprep.subr.bf16.mxu0 0
  %304 = vmatpush1.bf16.msra.mxu0 0
  %305 = vmatprep.subr.bf16.mxu0 0
  %306 = vmatpush1.bf16.msra.mxu0 0
  %307 = vmatprep.subr.bf16.mxu0 0
  %308 = vmatpush1.bf16.msra.mxu0 0
  %309 = vmatprep.mubr.bf16.mxu0 0
  %310 = vmatmul.mubr.bf16.gmra.mrb[0].mxu0 %v275
  %v311 = vpop.f32.mrb[0].mxu0
  %v312 = vadd.f32 %v261, %v311
  %v313 = vpop.f32.mrb[0].mxu0
  %v314 = vpop.f32.mrb[0].mxu0
  %v315 = vadd.f32 %v261, %v314
  %v316 = vpop.f32.mrb[0].mxu0
  %317 = vdwg.mxu0
  %v318 = vpack.c.bf16 %v61, %v61
  %v323 = vunpack.c.l.b16 %v27
  %v324 = vunpack.c.l.b16 %v28
  %v325 = vunpack.c.l.b16 %v29
  %v326 = vunpack.c.l.b16 %v30
  %v327 = vpack.c.b16 %v324, %v323
  %v328 = vpack.c.b16 %v326, %v325
  %v332 = vsel %vm84, %v318, 0
  %334 = vmatprep.subr.bf16.mxu0 0
  %335 = vmatpush1.bf16.msra.mxu0 %v327
  %336 = vmatprep.subr.bf16.mxu0 0
  %337 = vmatpush1.bf16.msra.mxu0 %v328
  %338 = vmatprep.subr.bf16.mxu0 0
  %339 = vmatpush1.bf16.msra.mxu0 0
  %340 = vmatprep.subr.bf16.mxu0 0
  %341 = vmatpush1.bf16.msra.mxu0 0
  %342 = vmatprep.subr.bf16.mxu0 0
  %343 = vmatpush1.bf16.msra.mxu0 0
  %344 = vmatprep.subr.bf16.mxu0 0
  %345 = vmatpush1.bf16.msra.mxu0 0
  %346 = vmatprep.subr.bf16.mxu0 0
  %347 = vmatpush1.bf16.msra.mxu0 0
  %348 = vmatprep.subr.bf16.mxu0 0
  %349 = vmatpush1.bf16.msra.mxu0 0
  %350 = vmatprep.subr.bf16.mxu0 0
  %351 = vmatpush1.bf16.msra.mxu0 0
  %352 = vmatprep.subr.bf16.mxu0 0
  %353 = vmatpush1.bf16.msra.mxu0 0
  %354 = vmatprep.subr.bf16.mxu0 0
  %355 = vmatpush1.bf16.msra.mxu0 0
  %356 = vmatprep.subr.bf16.mxu0 0
  %357 = vmatpush1.bf16.msra.mxu0 0
  %358 = vmatprep.subr.bf16.mxu0 0
  %359 = vmatpush1.bf16.msra.mxu0 0
  %360 = vmatprep.subr.bf16.mxu0 0
  %361 = vmatpush1.bf16.msra.mxu0 0
  %362 = vmatprep.subr.bf16.mxu0 0
  %363 = vmatpush1.bf16.msra.mxu0 0
  %364 = vmatprep.subr.bf16.mxu0 0
  %365 = vmatpush1.bf16.msra.mxu0 0
  %366 = vmatprep.mubr.bf16.mxu0 0
  %367 = vmatmul.mubr.bf16.gmra.mrb[0].mxu0 %v332
  %v368 = vpop.f32.mrb[0].mxu0
  %v369 = vadd.f32 0.0, %v368
  %v370 = vpop.f32.mrb[0].mxu0
  %v371 = vpop.f32.mrb[0].mxu0
  %v372 = vpop.f32.mrb[0].mxu0
  %373 = vdwg.mxu0
  %v374 = vpack.c.bf16 %v59, %v59
  %v379 = vunpack.c.l.b16 %v19
  %v380 = vunpack.c.l.b16 %v20
  %v381 = vunpack.c.l.b16 %v21
  %v382 = vunpack.c.l.b16 %v22
  %v383 = vpack.c.b16 %v380, %v379
  %v384 = vpack.c.b16 %v382, %v381
  %v388 = vsel %vm84, %v374, 0
  %390 = vmatprep.subr.bf16.mxu0 0
  %391 = vmatpush1.bf16.msra.mxu0 %v383
  %392 = vmatprep.subr.bf16.mxu0 0
  %393 = vmatpush1.bf16.msra.mxu0 %v384
  %394 = vmatprep.subr.bf16.mxu0 0
  %395 = vmatpush1.bf16.msra.mxu0 0
  %396 = vmatprep.subr.bf16.mxu0 0
  %397 = vmatpush1.bf16.msra.mxu0 0
  %398 = vmatprep.subr.bf16.mxu0 0
  %399 = vmatpush1.bf16.msra.mxu0 0
  %400 = vmatprep.subr.bf16.mxu0 0
  %401 = vmatpush1.bf16.msra.mxu0 0
  %402 = vmatprep.subr.bf16.mxu0 0
  %403 = vmatpush1.bf16.msra.mxu0 0
  %404 = vmatprep.subr.bf16.mxu0 0
  %405 = vmatpush1.bf16.msra.mxu0 0
  %406 = vmatprep.subr.bf16.mxu0 0
  %407 = vmatpush1.bf16.msra.mxu0 0
  %408 = vmatprep.subr.bf16.mxu0 0
  %409 = vmatpush1.bf16.msra.mxu0 0
  %410 = vmatprep.subr.bf16.mxu0 0
  %411 = vmatpush1.bf16.msra.mxu0 0
  %412 = vmatprep.subr.bf16.mxu0 0
  %413 = vmatpush1.bf16.msra.mxu0 0
  %414 = vmatprep.subr.bf16.mxu0 0
  %415 = vmatpush1.bf16.msra.mxu0 0
  %416 = vmatprep.subr.bf16.mxu0 0
  %417 = vmatpush1.bf16.msra.mxu0 0
  %418 = vmatprep.subr.bf16.mxu0 0
  %419 = vmatpush1.bf16.msra.mxu0 0
  %420 = vmatprep.subr.bf16.mxu0 0
  %421 = vmatpush1.bf16.msra.mxu0 0
  %422 = vmatprep.mubr.bf16.mxu0 0
  %423 = vmatmul.mubr.bf16.gmra.mrb[0].mxu0 %v388
  %v424 = vpop.f32.mrb[0].mxu0
  %v425 = vadd.f32 0.0, %v424
  %v426 = vpop.f32.mrb[0].mxu0
  %v427 = vpop.f32.mrb[0].mxu0
  %v428 = vpop.f32.mrb[0].mxu0
  %429 = vdwg.mxu0
  %v430 = vadd.f32 %v312, %v425
  %v431 = vtanh.pop %v430
  %v432 = vmul.f32 %v431, 0.5
  %v433 = vadd.f32 %v432, 0.5
  %435 = vrot.lane.b32.xlu0 %v60, 32
  %v436 = vpop.permute.xlu0 %435
  %v438 = vmul.f32 %v433, %v436
  %440 = vrot.lane.b32.xlu0 %v431, 64
  %v441 = vpop.permute.xlu0 %440
  %v443 = vmul.f32 %v433, %v441
  %445 = vrot.lane.b32.xlu0 %v443, 32
  %v446 = vpop.permute.xlu0 %445
  %v448 = vadd.f32 %v438, %v446
  %v449 = vtanh.pop %v448
  %451 = vrot.lane.b32.xlu0 %v449, 64
  %v452 = vpop.permute.xlu0 %451
  %v454 = vmul.f32 %v433, %v452
  %456 = vrot.lane.b32.xlu0 %v454, 32
  %v457 = vpop.permute.xlu0 %456
  %vm459 = vcmask 254976
  %460 = vst.msk [vmem:[#allocation2] sm:$0x3] %vm459, %v457
  %v461 = vpack.c.bf16 %v454, %v454
  %v463 = vshrl.u32 %v461, 16
  %465 = vrot.lane.b32.xlu0 %v463, 32
  %v466 = vpop.permute.xlu0 %465
  %v471 = vunpack.c.l.b16 %v49
  %v472 = vunpack.c.l.b16 %v50
  %v473 = vunpack.c.l.b16 %v51
  %v474 = vunpack.c.l.b16 %v52
  %v475 = vpack.c.b16 %v472, %v471
  %v476 = vpack.c.b16 %v474, %v473
  %v480 = vsel %vm84, %v466, 0
  %482 = vmatprep.subr.bf16.mxu0 0
  %483 = vmatpush1.bf16.msra.mxu0 %v475
  %484 = vmatprep.subr.bf16.mxu0 0
  %485 = vmatpush1.bf16.msra.mxu0 %v476
  %486 = vmatprep.subr.bf16.mxu0 0
  %487 = vmatpush1.bf16.msra.mxu0 0
  %488 = vmatprep.subr.bf16.mxu0 0
  %489 = vmatpush1.bf16.msra.mxu0 0
  %490 = vmatprep.subr.bf16.mxu0 0
  %491 = vmatpush1.bf16.msra.mxu0 0
  %492 = vmatprep.subr.bf16.mxu0 0
  %493 = vmatpush1.bf16.msra.mxu0 0
  %494 = vmatprep.subr.bf16.mxu0 0
  %495 = vmatpush1.bf16.msra.mxu0 0
  %496 = vmatprep.subr.bf16.mxu0 0
  %497 = vmatpush1.bf16.msra.mxu0 0
  %498 = vmatprep.subr.bf16.mxu0 0
  %499 = vmatpush1.bf16.msra.mxu0 0
  %500 = vmatprep.subr.bf16.mxu0 0
  %501 = vmatpush1.bf16.msra.mxu0 0
  %502 = vmatprep.subr.bf16.mxu0 0
  %503 = vmatpush1.bf16.msra.mxu0 0
  %504 = vmatprep.subr.bf16.mxu0 0
  %505 = vmatpush1.bf16.msra.mxu0 0
  %506 = vmatprep.subr.bf16.mxu0 0
  %507 = vmatpush1.bf16.msra.mxu0 0
  %508 = vmatprep.subr.bf16.mxu0 0
  %509 = vmatpush1.bf16.msra.mxu0 0
  %510 = vmatprep.subr.bf16.mxu0 0
  %511 = vmatpush1.bf16.msra.mxu0 0
  %512 = vmatprep.subr.bf16.mxu0 0
  %513 = vmatpush1.bf16.msra.mxu0 0
  %514 = vmatprep.mubr.bf16.mxu0 0
  %515 = vmatmul.mubr.bf16.gmra.mrb[0].mxu0 %v480
  %v516 = vpop.f32.mrb[0].mxu0
  %v517 = vadd.f32 0.0, %v516
  %v518 = vpop.f32.mrb[0].mxu0
  %v519 = vpop.f32.mrb[0].mxu0
  %v520 = vpop.f32.mrb[0].mxu0
  %521 = vdwg.mxu0
  %523 = vrot.lane.b32.xlu0 %v461, 32
  %v524 = vpop.permute.xlu0 %523
  %v529 = vunpack.c.l.b16 %v45
  %v530 = vunpack.c.l.b16 %v46
  %v531 = vunpack.c.l.b16 %v47
  %v532 = vunpack.c.l.b16 %v48
  %v533 = vpack.c.b16 %v530, %v529
  %v534 = vpack.c.b16 %v532, %v531
  %v538 = vsel %vm84, %v524, 0
  %540 = vmatprep.subr.bf16.mxu0 0
  %541 = vmatpush1.bf16.msra.mxu0 %v533
  %542 = vmatprep.subr.bf16.mxu0 0
  %543 = vmatpush1.bf16.msra.mxu0 %v534
  %544 = vmatprep.subr.bf16.mxu0 0
  %545 = vmatpush1.bf16.msra.mxu0 0
  %546 = vmatprep.subr.bf16.mxu0 0
  %547 = vmatpush1.bf16.msra.mxu0 0
  %548 = vmatprep.subr.bf16.mxu0 0
  %549 = vmatpush1.bf16.msra.mxu0 0
  %550 = vmatprep.subr.bf16.mxu0 0
  %551 = vmatpush1.bf16.msra.mxu0 0
  %552 = vmatprep.subr.bf16.mxu0 0
  %553 = vmatpush1.bf16.msra.mxu0 0
  %554 = vmatprep.subr.bf16.mxu0 0
  %555 = vmatpush1.bf16.msra.mxu0 0
  %556 = vmatprep.subr.bf16.mxu0 0
  %557 = vmatpush1.bf16.msra.mxu0 0
  %558 = vmatprep.subr.bf16.mxu0 0
  %559 = vmatpush1.bf16.msra.mxu0 0
  %560 = vmatprep.subr.bf16.mxu0 0
  %561 = vmatpush1.bf16.msra.mxu0 0
  %562 = vmatprep.subr.bf16.mxu0 0
  %563 = vmatpush1.bf16.msra.mxu0 0
  %564 = vmatprep.subr.bf16.mxu0 0
  %565 = vmatpush1.bf16.msra.mxu0 0
  %566 = vmatprep.subr.bf16.mxu0 0
  %567 = vmatpush1.bf16.msra.mxu0 0
  %568 = vmatprep.subr.bf16.mxu0 0
  %569 = vmatpush1.bf16.msra.mxu0 0
  %570 = vmatprep.subr.bf16.mxu0 0
  %571 = vmatpush1.bf16.msra.mxu0 0
  %572 = vmatprep.mubr.bf16.mxu0 0
  %573 = vmatmul.mubr.bf16.gmra.mrb[0].mxu0 %v538
  %v574 = vpop.f32.mrb[0].mxu0
  %v575 = vadd.f32 %v517, %v574
  %v576 = vpop.f32.mrb[0].mxu0
  %v577 = vpop.f32.mrb[0].mxu0
  %v578 = vpop.f32.mrb[0].mxu0
  %579 = vdwg.mxu0
  %v580 = vadd.f32 %v575, %v58
  %v581 = vmax.f32 %v580, 0.0
  %v582 = vpack.c.bf16 %v581, %v581
  %v587 = vunpack.c.l.b16 %v23
  %v588 = vunpack.c.l.b16 %v24
  %v589 = vunpack.c.l.b16 %v25
  %v590 = vunpack.c.l.b16 %v26
  %v591 = vpack.c.b16 %v588, %v587
  %v592 = vpack.c.b16 %v590, %v589
  %v596 = vsel %vm84, %v582, 0
  %598 = vmatprep.subr.bf16.mxu0 0
  %599 = vmatpush1.bf16.msra.mxu0 %v591
  %600 = vmatprep.subr.bf16.mxu0 0
  %601 = vmatpush1.bf16.msra.mxu0 %v592
  %602 = vmatprep.subr.bf16.mxu0 0
  %603 = vmatpush1.bf16.msra.mxu0 0
  %604 = vmatprep.subr.bf16.mxu0 0
  %605 = vmatpush1.bf16.msra.mxu0 0
  %606 = vmatprep.subr.bf16.mxu0 0
  %607 = vmatpush1.bf16.msra.mxu0 0
  %608 = vmatprep.subr.bf16.mxu0 0
  %609 = vmatpush1.bf16.msra.mxu0 0
  %610 = vmatprep.subr.bf16.mxu0 0
  %611 = vmatpush1.bf16.msra.mxu0 0
  %612 = vmatprep.subr.bf16.mxu0 0
  %613 = vmatpush1.bf16.msra.mxu0 0
  %614 = vmatprep.subr.bf16.mxu0 0
  %615 = vmatpush1.bf16.msra.mxu0 0
  %616 = vmatprep.subr.bf16.mxu0 0
  %617 = vmatpush1.bf16.msra.mxu0 0
  %618 = vmatprep.subr.bf16.mxu0 0
  %619 = vmatpush1.bf16.msra.mxu0 0
  %620 = vmatprep.subr.bf16.mxu0 0
  %621 = vmatpush1.bf16.msra.mxu0 0
  %622 = vmatprep.subr.bf16.mxu0 0
  %623 = vmatpush1.bf16.msra.mxu0 0
  %624 = vmatprep.subr.bf16.mxu0 0
  %625 = vmatpush1.bf16.msra.mxu0 0
  %626 = vmatprep.subr.bf16.mxu0 0
  %627 = vmatpush1.bf16.msra.mxu0 0
  %628 = vmatprep.subr.bf16.mxu0 0
  %629 = vmatpush1.bf16.msra.mxu0 0
  %630 = vmatprep.mubr.bf16.mxu0 0
  %631 = vmatmul.mubr.bf16.gmra.mrb[0].mxu0 %v596
  %v632 = vpop.f32.mrb[0].mxu0
  %v633 = vadd.f32 %v369, %v632
  %v634 = vpop.f32.mrb[0].mxu0
  %v635 = vpop.f32.mrb[0].mxu0
  %v636 = vpop.f32.mrb[0].mxu0
  %637 = vdwg.mxu0
  %v638 = vadd.f32 %v633, %v54
  %v639 = vtanh.pop %v638
  %v640 = vmul.f32 %v639, 0.5
  %v641 = vadd.f32 %v640, 0.5
  %643 = vrot.lane.b32.xlu0 %v62, 32
  %v644 = vpop.permute.xlu0 %643
  %v646 = vmul.f32 %v641, %v644
  %648 = vrot.lane.b32.xlu0 %v639, 64
  %v649 = vpop.permute.xlu0 %648
  %v651 = vmul.f32 %v641, %v649
  %653 = vrot.lane.b32.xlu0 %v651, 32
  %v654 = vpop.permute.xlu0 %653
  %v656 = vadd.f32 %v646, %v654
  %v657 = vtanh.pop %v656
  %659 = vrot.lane.b32.xlu0 %v657, 64
  %v660 = vpop.permute.xlu0 %659
  %v662 = vmul.f32 %v641, %v660
  %v663 = vlaneseq
  %v664 = vshrl.u32 %v663, 7
  %v665 = vsub.s32 0, %v664
  %v666 = vrot.slane %v662, %v665
  %668 = vrot.lane.b32.xlu0 %v666, 32
  %v669 = vpop.permute.xlu0 %668
  %671 = vst.msk [vmem:[#allocation3] sm:$0x3] %vm459, %v669
  %v672 = vpack.c.bf16 %v662, %v662
  %674 = vrot.lane.b32.xlu0 %v672, 32
  %v675 = vpop.permute.xlu0 %674
  %v677 = vsel %vm84, %v675, 0
  %679 = vmatprep.subr.bf16.mxu0 0
  %680 = vmatpush1.bf16.msra.mxu0 %v327
  %681 = vmatprep.subr.bf16.mxu0 0
  %682 = vmatpush1.bf16.msra.mxu0 %v328
  %683 = vmatprep.subr.bf16.mxu0 0
  %684 = vmatpush1.bf16.msra.mxu0 0
  %685 = vmatprep.subr.bf16.mxu0 0
  %686 = vmatpush1.bf16.msra.mxu0 0
  %687 = vmatprep.subr.bf16.mxu0 0
  %688 = vmatpush1.bf16.msra.mxu0 0
  %689 = vmatprep.subr.bf16.mxu0 0
  %690 = vmatpush1.bf16.msra.mxu0 0
  %691 = vmatprep.subr.bf16.mxu0 0
  %692 = vmatpush1.bf16.msra.mxu0 0
  %693 = vmatprep.subr.bf16.mxu0 0
  %694 = vmatpush1.bf16.msra.mxu0 0
  %695 = vmatprep.subr.bf16.mxu0 0
  %696 = vmatpush1.bf16.msra.mxu0 0
  %697 = vmatprep.subr.bf16.mxu0 0
  %698 = vmatpush1.bf16.msra.mxu0 0
  %699 = vmatprep.subr.bf16.mxu0 0
  %700 = vmatpush1.bf16.msra.mxu0 0
  %701 = vmatprep.subr.bf16.mxu0 0
  %702 = vmatpush1.bf16.msra.mxu0 0
  %703 = vmatprep.subr.bf16.mxu0 0
  %704 = vmatpush1.bf16.msra.mxu0 0
  %705 = vmatprep.subr.bf16.mxu0 0
  %706 = vmatpush1.bf16.msra.mxu0 0
  %707 = vmatprep.subr.bf16.mxu0 0
  %708 = vmatpush1.bf16.msra.mxu0 0
  %709 = vmatprep.subr.bf16.mxu0 0
  %710 = vmatpush1.bf16.msra.mxu0 0
  %711 = vmatprep.mubr.bf16.mxu0 0
  %712 = vmatmul.mubr.bf16.gmra.mrb[0].mxu0 %v677
  %v713 = vpop.f32.mrb[0].mxu0
  %v714 = vadd.f32 0.0, %v713
  %v715 = vpop.f32.mrb[0].mxu0
  %v716 = vpop.f32.mrb[0].mxu0
  %v717 = vpop.f32.mrb[0].mxu0
  %718 = vdwg.mxu0
  %719 = vmatprep.subr.bf16.mxu0 0
  %720 = vmatpush1.bf16.msra.mxu0 %v383
  %721 = vmatprep.subr.bf16.mxu0 0
  %722 = vmatpush1.bf16.msra.mxu0 %v384
  %723 = vmatprep.subr.bf16.mxu0 0
  %724 = vmatpush1.bf16.msra.mxu0 0
  %725 = vmatprep.subr.bf16.mxu0 0
  %726 = vmatpush1.bf16.msra.mxu0 0
  %727 = vmatprep.subr.bf16.mxu0 0
  %728 = vmatpush1.bf16.msra.mxu0 0
  %729 = vmatprep.subr.bf16.mxu0 0
  %730 = vmatpush1.bf16.msra.mxu0 0
  %731 = vmatprep.subr.bf16.mxu0 0
  %732 = vmatpush1.bf16.msra.mxu0 0
  %733 = vmatprep.subr.bf16.mxu0 0
  %734 = vmatpush1.bf16.msra.mxu0 0
  %735 = vmatprep.subr.bf16.mxu0 0
  %736 = vmatpush1.bf16.msra.mxu0 0
  %737 = vmatprep.subr.bf16.mxu0 0
  %738 = vmatpush1.bf16.msra.mxu0 0
  %739 = vmatprep.subr.bf16.mxu0 0
  %740 = vmatpush1.bf16.msra.mxu0 0
  %741 = vmatprep.subr.bf16.mxu0 0
  %742 = vmatpush1.bf16.msra.mxu0 0
  %743 = vmatprep.subr.bf16.mxu0 0
  %744 = vmatpush1.bf16.msra.mxu0 0
  %745 = vmatprep.subr.bf16.mxu0 0
  %746 = vmatpush1.bf16.msra.mxu0 0
  %747 = vmatprep.subr.bf16.mxu0 0
  %748 = vmatpush1.bf16.msra.mxu0 0
  %749 = vmatprep.subr.bf16.mxu0 0
  %750 = vmatpush1.bf16.msra.mxu0 0
  %751 = vmatprep.mubr.bf16.mxu0 0
  %752 = vmatmul.mubr.bf16.gmra.mrb[0].mxu0 %v538
  %v753 = vpop.f32.mrb[0].mxu0
  %v754 = vadd.f32 0.0, %v753
  %v755 = vpop.f32.mrb[0].mxu0
  %v756 = vpop.f32.mrb[0].mxu0
  %v757 = vpop.f32.mrb[0].mxu0
  %758 = vdwg.mxu0
  %v760 = vrot.slane %v754, 6
  %v762 = vadd.f32 %v312, %v760
  %v763 = vtanh.pop %v762
  %v764 = vmul.f32 %v763, 0.5
  %v765 = vadd.f32 %v764, 0.5
  %v767 = vrot.slane %v448, 6
  %v769 = vmul.f32 %v765, %v767
  %771 = vrot.lane.b32.xlu0 %v763, 64
  %v772 = vpop.permute.xlu0 %771
  %v774 = vmul.f32 %v765, %v772
  %776 = vrot.lane.b32.xlu0 %v774, 32
  %v777 = vpop.permute.xlu0 %776
  %v779 = vadd.f32 %v769, %v777
  %v780 = vtanh.pop %v779
  %782 = vrot.lane.b32.xlu0 %v780, 64
  %v783 = vpop.permute.xlu0 %782
  %v785 = vmul.f32 %v765, %v783
  %787 = vrot.lane.b32.xlu0 %v785, 32
  %v788 = vpop.permute.xlu0 %787
  %vm790 = vcmask 257026
  %791 = vst.msk [vmem:[#allocation2] sm:$0xc] %vm790, %v788
  %v792 = vpack.c.bf16 %v785, %v785
  %v794 = vshrl.u32 %v792, 16
  %v796 = vrot.slane %v794, 1
  %797 = vrot.lane.b32.xlu0 %v796, 32
  %v798 = vpop.permute.xlu0 %797
  %v800 = vsel %vm84, %v798, 0
  %802 = vmatprep.subr.bf16.mxu0 0
  %803 = vmatpush1.bf16.msra.mxu0 %v475
  %804 = vmatprep.subr.bf16.mxu0 0
  %805 = vmatpush1.bf16.msra.mxu0 %v476
  %806 = vmatprep.subr.bf16.mxu0 0
  %807 = vmatpush1.bf16.msra.mxu0 0
  %808 = vmatprep.subr.bf16.mxu0 0
  %809 = vmatpush1.bf16.msra.mxu0 0
  %810 = vmatprep.subr.bf16.mxu0 0
  %811 = vmatpush1.bf16.msra.mxu0 0
  %812 = vmatprep.subr.bf16.mxu0 0
  %813 = vmatpush1.bf16.msra.mxu0 0
  %814 = vmatprep.subr.bf16.mxu0 0
  %815 = vmatpush1.bf16.msra.mxu0 0
  %816 = vmatprep.subr.bf16.mxu0 0
  %817 = vmatpush1.bf16.msra.mxu0 0
  %818 = vmatprep.subr.bf16.mxu0 0
  %819 = vmatpush1.bf16.msra.mxu0 0
  %820 = vmatprep.subr.bf16.mxu0 0
  %821 = vmatpush1.bf16.msra.mxu0 0
  %822 = vmatprep.subr.bf16.mxu0 0
  %823 = vmatpush1.bf16.msra.mxu0 0
  %824 = vmatprep.subr.bf16.mxu0 0
  %825 = vmatpush1.bf16.msra.mxu0 0
  %826 = vmatprep.subr.bf16.mxu0 0
  %827 = vmatpush1.bf16.msra.mxu0 0
  %828 = vmatprep.subr.bf16.mxu0 0
  %829 = vmatpush1.bf16.msra.mxu0 0
  %830 = vmatprep.subr.bf16.mxu0 0
  %831 = vmatpush1.bf16.msra.mxu0 0
  %832 = vmatprep.subr.bf16.mxu0 0
  %833 = vmatpush1.bf16.msra.mxu0 0
  %834 = vmatprep.mubr.bf16.mxu0 0
  %835 = vmatmul.mubr.bf16.gmra.mrb[0].mxu0 %v800
  %v836 = vpop.f32.mrb[0].mxu0
  %v837 = vadd.f32 0.0, %v836
  %v838 = vpop.f32.mrb[0].mxu0
  %v839 = vpop.f32.mrb[0].mxu0
  %v840 = vpop.f32.mrb[0].mxu0
  %841 = vdwg.mxu0
  %v843 = vrot.slane %v792, 1
  %844 = vrot.lane.b32.xlu0 %v843, 32
  %v845 = vpop.permute.xlu0 %844
  %v847 = vsel %vm84, %v845, 0
  %849 = vmatprep.subr.bf16.mxu0 0
  %850 = vmatpush1.bf16.msra.mxu0 %v533
  %851 = vmatprep.subr.bf16.mxu0 0
  %852 = vmatpush1.bf16.msra.mxu0 %v534
  %853 = vmatprep.subr.bf16.mxu0 0
  %854 = vmatpush1.bf16.msra.mxu0 0
  %855 = vmatprep.subr.bf16.mxu0 0
  %856 = vmatpush1.bf16.msra.mxu0 0
  %857 = vmatprep.subr.bf16.mxu0 0
  %858 = vmatpush1.bf16.msra.mxu0 0
  %859 = vmatprep.subr.bf16.mxu0 0
  %860 = vmatpush1.bf16.msra.mxu0 0
  %861 = vmatprep.subr.bf16.mxu0 0
  %862 = vmatpush1.bf16.msra.mxu0 0
  %863 = vmatprep.subr.bf16.mxu0 0
  %864 = vmatpush1.bf16.msra.mxu0 0
  %865 = vmatprep.subr.bf16.mxu0 0
  %866 = vmatpush1.bf16.msra.mxu0 0
  %867 = vmatprep.subr.bf16.mxu0 0
  %868 = vmatpush1.bf16.msra.mxu0 0
  %869 = vmatprep.subr.bf16.mxu0 0
  %870 = vmatpush1.bf16.msra.mxu0 0
  %871 = vmatprep.subr.bf16.mxu0 0
  %872 = vmatpush1.bf16.msra.mxu0 0
  %873 = vmatprep.subr.bf16.mxu0 0
  %874 = vmatpush1.bf16.msra.mxu0 0
  %875 = vmatprep.subr.bf16.mxu0 0
  %876 = vmatpush1.bf16.msra.mxu0 0
  %877 = vmatprep.subr.bf16.mxu0 0
  %878 = vmatpush1.bf16.msra.mxu0 0
  %879 = vmatprep.subr.bf16.mxu0 0
  %880 = vmatpush1.bf16.msra.mxu0 0
  %881 = vmatprep.mubr.bf16.mxu0 0
  %882 = vmatmul.mubr.bf16.gmra.mrb[0].mxu0 %v847
  %v883 = vpop.f32.mrb[0].mxu0
  %v884 = vadd.f32 %v837, %v883
  %v885 = vpop.f32.mrb[0].mxu0
  %v886 = vpop.f32.mrb[0].mxu0
  %v887 = vpop.f32.mrb[0].mxu0
  %888 = vdwg.mxu0
  %v889 = vadd.f32 %v884, %v58
  %v890 = vmax.f32 %v889, 0.0
  %v891 = vpack.c.bf16 %v890, %v890
  %v893 = vsel %vm84, %v891, 0
  %895 = vmatprep.subr.bf16.mxu0 0
  %896 = vmatpush1.bf16.msra.mxu0 %v591
  %897 = vmatprep.subr.bf16.mxu0 0
  %898 = vmatpush1.bf16.msra.mxu0 %v592
  %899 = vmatprep.subr.bf16.mxu0 0
  %900 = vmatpush1.bf16.msra.mxu0 0
  %901 = vmatprep.subr.bf16.mxu0 0
  %902 = vmatpush1.bf16.msra.mxu0 0
  %903 = vmatprep.subr.bf16.mxu0 0
  %904 = vmatpush1.bf16.msra.mxu0 0
  %905 = vmatprep.subr.bf16.mxu0 0
  %906 = vmatpush1.bf16.msra.mxu0 0
  %907 = vmatprep.subr.bf16.mxu0 0
  %908 = vmatpush1.bf16.msra.mxu0 0
  %909 = vmatprep.subr.bf16.mxu0 0
  %910 = vmatpush1.bf16.msra.mxu0 0
  %911 = vmatprep.subr.bf16.mxu0 0
  %912 = vmatpush1.bf16.msra.mxu0 0
  %913 = vmatprep.subr.bf16.mxu0 0
  %914 = vmatpush1.bf16.msra.mxu0 0
  %915 = vmatprep.subr.bf16.mxu0 0
  %916 = vmatpush1.bf16.msra.mxu0 0
  %917 = vmatprep.subr.bf16.mxu0 0
  %918 = vmatpush1.bf16.msra.mxu0 0
  %919 = vmatprep.subr.bf16.mxu0 0
  %920 = vmatpush1.bf16.msra.mxu0 0
  %921 = vmatprep.subr.bf16.mxu0 0
  %922 = vmatpush1.bf16.msra.mxu0 0
  %923 = vmatprep.subr.bf16.mxu0 0
  %924 = vmatpush1.bf16.msra.mxu0 0
  %925 = vmatprep.subr.bf16.mxu0 0
  %926 = vmatpush1.bf16.msra.mxu0 0
  %927 = vmatprep.mubr.bf16.mxu0 0
  %928 = vmatmul.mubr.bf16.gmra.mrb[0].mxu0 %v893
  %v929 = vpop.f32.mrb[0].mxu0
  %v930 = vadd.f32 %v714, %v929
  %v931 = vpop.f32.mrb[0].mxu0
  %v932 = vpop.f32.mrb[0].mxu0
  %v933 = vpop.f32.mrb[0].mxu0
  %934 = vdwg.mxu0
  %v935 = vadd.f32 %v930, %v54
  %v936 = vtanh.pop %v935
  %v937 = vmul.f32 %v936, 0.5
  %v938 = vadd.f32 %v937, 0.5
  %v939 = vmul.f32 %v938, %v656
  %941 = vrot.lane.b32.xlu0 %v936, 64
  %v942 = vpop.permute.xlu0 %941
  %v944 = vmul.f32 %v938, %v942
  %946 = vrot.lane.b32.xlu0 %v944, 32
  %v947 = vpop.permute.xlu0 %946
  %v949 = vadd.f32 %v939, %v947
  %v950 = vtanh.pop %v949
  %952 = vrot.lane.b32.xlu0 %v950, 64
  %v953 = vpop.permute.xlu0 %952
  %v955 = vmul.f32 %v938, %v953
  %v956 = vlaneseq
  %v957 = vshrl.u32 %v956, 7
  %v958 = vsub.s32 0, %v957
  %v959 = vrot.slane %v955, %v958
  %961 = vrot.lane.b32.xlu0 %v959, 32
  %v962 = vpop.permute.xlu0 %961
  %964 = vst.msk [vmem:[#allocation3 + $0x2] sm:$0x3] %vm459, %v962
  %v965 = vpack.c.bf16 %v955, %v955
  %967 = vrot.lane.b32.xlu0 %v965, 32
  %v968 = vpop.permute.xlu0 %967
  %v970 = vsel %vm84, %v968, 0
  %972 = vmatprep.subr.bf16.mxu0 0
  %973 = vmatpush1.bf16.msra.mxu0 %v327
  %974 = vmatprep.subr.bf16.mxu0 0
  %975 = vmatpush1.bf16.msra.mxu0 %v328
  %976 = vmatprep.subr.bf16.mxu0 0
  %977 = vmatpush1.bf16.msra.mxu0 0
  %978 = vmatprep.subr.bf16.mxu0 0
  %979 = vmatpush1.bf16.msra.mxu0 0
  %980 = vmatprep.subr.bf16.mxu0 0
  %981 = vmatpush1.bf16.msra.mxu0 0
  %982 = vmatprep.subr.bf16.mxu0 0
  %983 = vmatpush1.bf16.msra.mxu0 0
  %984 = vmatprep.subr.bf16.mxu0 0
  %985 = vmatpush1.bf16.msra.mxu0 0
  %986 = vmatprep.subr.bf16.mxu0 0
  %987 = vmatpush1.bf16.msra.mxu0 0
  %988 = vmatprep.subr.bf16.mxu0 0
  %989 = vmatpush1.bf16.msra.mxu0 0
  %990 = vmatprep.subr.bf16.mxu0 0
  %991 = vmatpush1.bf16.msra.mxu0 0
  %992 = vmatprep.subr.bf16.mxu0 0
  %993 = vmatpush1.bf16.msra.mxu0 0
  %994 = vmatprep.subr.bf16.mxu0 0
  %995 = vmatpush1.bf16.msra.mxu0 0
  %996 = vmatprep.subr.bf16.mxu0 0
  %997 = vmatpush1.bf16.msra.mxu0 0
  %998 = vmatprep.subr.bf16.mxu0 0
  %999 = vmatpush1.bf16.msra.mxu0 0
  %1000 = vmatprep.subr.bf16.mxu0 0
  %1001 = vmatpush1.bf16.msra.mxu0 0
  %1002 = vmatprep.subr.bf16.mxu0 0
  %1003 = vmatpush1.bf16.msra.mxu0 0
  %1004 = vmatprep.mubr.bf16.mxu0 0
  %1005 = vmatmul.mubr.bf16.gmra.mrb[0].mxu0 %v970
  %v1006 = vpop.f32.mrb[0].mxu0
  %v1007 = vadd.f32 0.0, %v1006
  %v1008 = vpop.f32.mrb[0].mxu0
  %v1009 = vpop.f32.mrb[0].mxu0
  %v1010 = vpop.f32.mrb[0].mxu0
  %1011 = vdwg.mxu0
  %1012 = vmatprep.subr.bf16.mxu0 0
  %1013 = vmatpush1.bf16.msra.mxu0 %v383
  %1014 = vmatprep.subr.bf16.mxu0 0
  %1015 = vmatpush1.bf16.msra.mxu0 %v384
  %1016 = vmatprep.subr.bf16.mxu0 0
  %1017 = vmatpush1.bf16.msra.mxu0 0
  %1018 = vmatprep.subr.bf16.mxu0 0
  %1019 = vmatpush1.bf16.msra.mxu0 0
  %1020 = vmatprep.subr.bf16.mxu0 0
  %1021 = vmatpush1.bf16.msra.mxu0 0
  %1022 = vmatprep.subr.bf16.mxu0 0
  %1023 = vmatpush1.bf16.msra.mxu0 0
  %1024 = vmatprep.subr.bf16.mxu0 0
  %1025 = vmatpush1.bf16.msra.mxu0 0
  %1026 = vmatprep.subr.bf16.mxu0 0
  %1027 = vmatpush1.bf16.msra.mxu0 0
  %1028 = vmatprep.subr.bf16.mxu0 0
  %1029 = vmatpush1.bf16.msra.mxu0 0
  %1030 = vmatprep.subr.bf16.mxu0 0
  %1031 = vmatpush1.bf16.msra.mxu0 0
  %1032 = vmatprep.subr.bf16.mxu0 0
  %1033 = vmatpush1.bf16.msra.mxu0 0
  %1034 = vmatprep.subr.bf16.mxu0 0
  %1035 = vmatpush1.bf16.msra.mxu0 0
  %1036 = vmatprep.subr.bf16.mxu0 0
  %1037 = vmatpush1.bf16.msra.mxu0 0
  %1038 = vmatprep.subr.bf16.mxu0 0
  %1039 = vmatpush1.bf16.msra.mxu0 0
  %1040 = vmatprep.subr.bf16.mxu0 0
  %1041 = vmatpush1.bf16.msra.mxu0 0
  %1042 = vmatprep.subr.bf16.mxu0 0
  %1043 = vmatpush1.bf16.msra.mxu0 0
  %1044 = vmatprep.mubr.bf16.mxu0 0
  %1045 = vmatmul.mubr.bf16.gmra.mrb[0].mxu0 %v847
  %v1046 = vpop.f32.mrb[0].mxu0
  %v1047 = vadd.f32 0.0, %v1046
  %v1048 = vpop.f32.mrb[0].mxu0
  %v1049 = vpop.f32.mrb[0].mxu0
  %v1050 = vpop.f32.mrb[0].mxu0
  %1051 = vdwg.mxu0
  %v1053 = vrot.slane %v1047, 4
  %v1055 = vadd.f32 %v312, %v1053
  %v1056 = vtanh.pop %v1055
  %v1057 = vmul.f32 %v1056, 0.5
  %v1058 = vadd.f32 %v1057, 0.5
  %v1060 = vrot.slane %v779, 6
  %v1062 = vmul.f32 %v1058, %v1060
  %1064 = vrot.lane.b32.xlu0 %v1056, 64
  %v1065 = vpop.permute.xlu0 %1064
  %v1067 = vmul.f32 %v1058, %v1065
  %1069 = vrot.lane.b32.xlu0 %v1067, 32
  %v1070 = vpop.permute.xlu0 %1069
  %v1072 = vadd.f32 %v1062, %v1070
  %v1073 = vtanh.pop %v1072
  %1075 = vrot.lane.b32.xlu0 %v1073, 64
  %v1076 = vpop.permute.xlu0 %1075
  %v1078 = vmul.f32 %v1058, %v1076
  %1080 = vrot.lane.b32.xlu0 %v1078, 32
  %v1081 = vpop.permute.xlu0 %1080
  %vm1083 = vcmask 259076
  %1084 = vst.msk [vmem:[#allocation2] sm:$0x30] %vm1083, %v1081
  %v1085 = vpack.c.bf16 %v1078, %v1078
  %v1087 = vshrl.u32 %v1085, 16
  %v1089 = vrot.slane %v1087, 2
  %1090 = vrot.lane.b32.xlu0 %v1089, 32
  %v1091 = vpop.permute.xlu0 %1090
  %v1093 = vsel %vm84, %v1091, 0
  %1095 = vmatprep.subr.bf16.mxu0 0
  %1096 = vmatpush1.bf16.msra.mxu0 %v475
  %1097 = vmatprep.subr.bf16.mxu0 0
  %1098 = vmatpush1.bf16.msra.mxu0 %v476
  %1099 = vmatprep.subr.bf16.mxu0 0
  %1100 = vmatpush1.bf16.msra.mxu0 0
  %1101 = vmatprep.subr.bf16.mxu0 0
  %1102 = vmatpush1.bf16.msra.mxu0 0
  %1103 = vmatprep.subr.bf16.mxu0 0
  %1104 = vmatpush1.bf16.msra.mxu0 0
  %1105 = vmatprep.subr.bf16.mxu0 0
  %1106 = vmatpush1.bf16.msra.mxu0 0
  %1107 = vmatprep.subr.bf16.mxu0 0
  %1108 = vmatpush1.bf16.msra.mxu0 0
  %1109 = vmatprep.subr.bf16.mxu0 0
  %1110 = vmatpush1.bf16.msra.mxu0 0
  %1111 = vmatprep.subr.bf16.mxu0 0
  %1112 = vmatpush1.bf16.msra.mxu0 0
  %1113 = vmatprep.subr.bf16.mxu0 0
  %1114 = vmatpush1.bf16.msra.mxu0 0
  %1115 = vmatprep.subr.bf16.mxu0 0
  %1116 = vmatpush1.bf16.msra.mxu0 0
  %1117 = vmatprep.subr.bf16.mxu0 0
  %1118 = vmatpush1.bf16.msra.mxu0 0
  %1119 = vmatprep.subr.bf16.mxu0 0
  %1120 = vmatpush1.bf16.msra.mxu0 0
  %1121 = vmatprep.subr.bf16.mxu0 0
  %1122 = vmatpush1.bf16.msra.mxu0 0
  %1123 = vmatprep.subr.bf16.mxu0 0
  %1124 = vmatpush1.bf16.msra.mxu0 0
  %1125 = vmatprep.subr.bf16.mxu0 0
  %1126 = vmatpush1.bf16.msra.mxu0 0
  %1127 = vmatprep.mubr.bf16.mxu0 0
  %1128 = vmatmul.mubr.bf16.gmra.mrb[0].mxu0 %v1093
  %v1129 = vpop.f32.mrb[0].mxu0
  %v1130 = vadd.f32 0.0, %v1129
  %v1131 = vpop.f32.mrb[0].mxu0
  %v1132 = vpop.f32.mrb[0].mxu0
  %v1133 = vpop.f32.mrb[0].mxu0
  %1134 = vdwg.mxu0
  %v1136 = vrot.slane %v1085, 2
  %1137 = vrot.lane.b32.xlu0 %v1136, 32
  %v1138 = vpop.permute.xlu0 %1137
  %v1140 = vsel %vm84, %v1138, 0
  %1142 = vmatprep.subr.bf16.mxu0 0
  %1143 = vmatpush1.bf16.msra.mxu0 %v533
  %1144 = vmatprep.subr.bf16.mxu0 0
  %1145 = vmatpush1.bf16.msra.mxu0 %v534
  %1146 = vmatprep.subr.bf16.mxu0 0
  %1147 = vmatpush1.bf16.msra.mxu0 0
  %1148 = vmatprep.subr.bf16.mxu0 0
  %1149 = vmatpush1.bf16.msra.mxu0 0
  %1150 = vmatprep.subr.bf16.mxu0 0
  %1151 = vmatpush1.bf16.msra.mxu0 0
  %1152 = vmatprep.subr.bf16.mxu0 0
  %1153 = vmatpush1.bf16.msra.mxu0 0
  %1154 = vmatprep.subr.bf16.mxu0 0
  %1155 = vmatpush1.bf16.msra.mxu0 0
  %1156 = vmatprep.subr.bf16.mxu0 0
  %1157 = vmatpush1.bf16.msra.mxu0 0
  %1158 = vmatprep.subr.bf16.mxu0 0
  %1159 = vmatpush1.bf16.msra.mxu0 0
  %1160 = vmatprep.subr.bf16.mxu0 0
  %1161 = vmatpush1.bf16.msra.mxu0 0
  %1162 = vmatprep.subr.bf16.mxu0 0
  %1163 = vmatpush1.bf16.msra.mxu0 0
  %1164 = vmatprep.subr.bf16.mxu0 0
  %1165 = vmatpush1.bf16.msra.mxu0 0
  %1166 = vmatprep.subr.bf16.mxu0 0
  %1167 = vmatpush1.bf16.msra.mxu0 0
  %1168 = vmatprep.subr.bf16.mxu0 0
  %1169 = vmatpush1.bf16.msra.mxu0 0
  %1170 = vmatprep.subr.bf16.mxu0 0
  %1171 = vmatpush1.bf16.msra.mxu0 0
  %1172 = vmatprep.subr.bf16.mxu0 0
  %1173 = vmatpush1.bf16.msra.mxu0 0
  %1174 = vmatprep.mubr.bf16.mxu0 0
  %1175 = vmatmul.mubr.bf16.gmra.mrb[0].mxu0 %v1140
  %v1176 = vpop.f32.mrb[0].mxu0
  %v1177 = vadd.f32 %v1130, %v1176
  %v1178 = vpop.f32.mrb[0].mxu0
  %v1179 = vpop.f32.mrb[0].mxu0
  %v1180 = vpop.f32.mrb[0].mxu0
  %1181 = vdwg.mxu0
  %v1182 = vadd.f32 %v1177, %v58
  %v1183 = vmax.f32 %v1182, 0.0
  %v1184 = vpack.c.bf16 %v1183, %v1183
  %v1186 = vsel %vm84, %v1184, 0
  %1188 = vmatprep.subr.bf16.mxu0 0
  %1189 = vmatpush1.bf16.msra.mxu0 %v591
  %1190 = vmatprep.subr.bf16.mxu0 0
  %1191 = vmatpush1.bf16.msra.mxu0 %v592
  %1192 = vmatprep.subr.bf16.mxu0 0
  %1193 = vmatpush1.bf16.msra.mxu0 0
  %1194 = vmatprep.subr.bf16.mxu0 0
  %1195 = vmatpush1.bf16.msra.mxu0 0
  %1196 = vmatprep.subr.bf16.mxu0 0
  %1197 = vmatpush1.bf16.msra.mxu0 0
  %1198 = vmatprep.subr.bf16.mxu0 0
  %1199 = vmatpush1.bf16.msra.mxu0 0
  %1200 = vmatprep.subr.bf16.mxu0 0
  %1201 = vmatpush1.bf16.msra.mxu0 0
  %1202 = vmatprep.subr.bf16.mxu0 0
  %1203 = vmatpush1.bf16.msra.mxu0 0
  %1204 = vmatprep.subr.bf16.mxu0 0
  %1205 = vmatpush1.bf16.msra.mxu0 0
  %1206 = vmatprep.subr.bf16.mxu0 0
  %1207 = vmatpush1.bf16.msra.mxu0 0
  %1208 = vmatprep.subr.bf16.mxu0 0
  %1209 = vmatpush1.bf16.msra.mxu0 0
  %1210 = vmatprep.subr.bf16.mxu0 0
  %1211 = vmatpush1.bf16.msra.mxu0 0
  %1212 = vmatprep.subr.bf16.mxu0 0
  %1213 = vmatpush1.bf16.msra.mxu0 0
  %1214 = vmatprep.subr.bf16.mxu0 0
  %1215 = vmatpush1.bf16.msra.mxu0 0
  %1216 = vmatprep.subr.bf16.mxu0 0
  %1217 = vmatpush1.bf16.msra.mxu0 0
  %1218 = vmatprep.subr.bf16.mxu0 0
  %1219 = vmatpush1.bf16.msra.mxu0 0
  %1220 = vmatprep.mubr.bf16.mxu0 0
  %1221 = vmatmul.mubr.bf16.gmra.mrb[0].mxu0 %v1186
  %v1222 = vpop.f32.mrb[0].mxu0
  %v1223 = vadd.f32 %v1007, %v1222
  %v1224 = vpop.f32.mrb[0].mxu0
  %v1225 = vpop.f32.mrb[0].mxu0
  %v1226 = vpop.f32.mrb[0].mxu0
  %1227 = vdwg.mxu0
  %v1228 = vadd.f32 %v1223, %v54
  %v1229 = vtanh.pop %v1228
  %v1230 = vmul.f32 %v1229, 0.5
  %v1231 = vadd.f32 %v1230, 0.5
  %v1232 = vmul.f32 %v1231, %v949
  %1234 = vrot.lane.b32.xlu0 %v1229, 64
  %v1235 = vpop.permute.xlu0 %1234
  %v1237 = vmul.f32 %v1231, %v1235
  %1239 = vrot.lane.b32.xlu0 %v1237, 32
  %v1240 = vpop.permute.xlu0 %1239
  %v1242 = vadd.f32 %v1232, %v1240
  %v1243 = vtanh.pop %v1242
  %1245 = vrot.lane.b32.xlu0 %v1243, 64
  %v1246 = vpop.permute.xlu0 %1245
  %v1248 = vmul.f32 %v1231, %v1246
  %v1249 = vlaneseq
  %v1250 = vshrl.u32 %v1249, 7
  %v1251 = vsub.s32 0, %v1250
  %v1252 = vrot.slane %v1248, %v1251
  %1254 = vrot.lane.b32.xlu0 %v1252, 32
  %v1255 = vpop.permute.xlu0 %1254
  %1257 = vst.msk [vmem:[#allocation3 + $0x4] sm:$0x3] %vm459, %v1255
  %v1258 = vpack.c.bf16 %v1248, %v1248
  %1260 = vrot.lane.b32.xlu0 %v1258, 32
  %v1261 = vpop.permute.xlu0 %1260
  %v1263 = vsel %vm84, %v1261, 0
  %1265 = vmatprep.subr.bf16.mxu0 0
  %1266 = vmatpush1.bf16.msra.mxu0 %v327
  %1267 = vmatprep.subr.bf16.mxu0 0
  %1268 = vmatpush1.bf16.msra.mxu0 %v328
  %1269 = vmatprep.subr.bf16.mxu0 0
  %1270 = vmatpush1.bf16.msra.mxu0 0
  %1271 = vmatprep.subr.bf16.mxu0 0
  %1272 = vmatpush1.bf16.msra.mxu0 0
  %1273 = vmatprep.subr.bf16.mxu0 0
  %1274 = vmatpush1.bf16.msra.mxu0 0
  %1275 = vmatprep.subr.bf16.mxu0 0
  %1276 = vmatpush1.bf16.msra.mxu0 0
  %1277 = vmatprep.subr.bf16.mxu0 0
  %1278 = vmatpush1.bf16.msra.mxu0 0
  %1279 = vmatprep.subr.bf16.mxu0 0
  %1280 = vmatpush1.bf16.msra.mxu0 0
  %1281 = vmatprep.subr.bf16.mxu0 0
  %1282 = vmatpush1.bf16.msra.mxu0 0
  %1283 = vmatprep.subr.bf16.mxu0 0
  %1284 = vmatpush1.bf16.msra.mxu0 0
  %1285 = vmatprep.subr.bf16.mxu0 0
  %1286 = vmatpush1.bf16.msra.mxu0 0
  %1287 = vmatprep.subr.bf16.mxu0 0
  %1288 = vmatpush1.bf16.msra.mxu0 0
  %1289 = vmatprep.subr.bf16.mxu0 0
  %1290 = vmatpush1.bf16.msra.mxu0 0
  %1291 = vmatprep.subr.bf16.mxu0 0
  %1292 = vmatpush1.bf16.msra.mxu0 0
  %1293 = vmatprep.subr.bf16.mxu0 0
  %1294 = vmatpush1.bf16.msra.mxu0 0
  %1295 = vmatprep.subr.bf16.mxu0 0
  %1296 = vmatpush1.bf16.msra.mxu0 0
  %1297 = vmatprep.mubr.bf16.mxu0 0
  %1298 = vmatmul.mubr.bf16.gmra.mrb[0].mxu0 %v1263
  %v1299 = vpop.f32.mrb[0].mxu0
  %v1300 = vadd.f32 0.0, %v1299
  %v1301 = vpop.f32.mrb[0].mxu0
  %v1302 = vpop.f32.mrb[0].mxu0
  %v1303 = vpop.f32.mrb[0].mxu0
  %1304 = vdwg.mxu0
  %1305 = vmatprep.subr.bf16.mxu0 0
  %1306 = vmatpush1.bf16.msra.mxu0 %v383
  %1307 = vmatprep.subr.bf16.mxu0 0
  %1308 = vmatpush1.bf16.msra.mxu0 %v384
  %1309 = vmatprep.subr.bf16.mxu0 0
  %1310 = vmatpush1.bf16.msra.mxu0 0
  %1311 = vmatprep.subr.bf16.mxu0 0
  %1312 = vmatpush1.bf16.msra.mxu0 0
  %1313 = vmatprep.subr.bf16.mxu0 0
  %1314 = vmatpush1.bf16.msra.mxu0 0
  %1315 = vmatprep.subr.bf16.mxu0 0
  %1316 = vmatpush1.bf16.msra.mxu0 0
  %1317 = vmatprep.subr.bf16.mxu0 0
  %1318 = vmatpush1.bf16.msra.mxu0 0
  %1319 = vmatprep.subr.bf16.mxu0 0
  %1320 = vmatpush1.bf16.msra.mxu0 0
  %1321 = vmatprep.subr.bf16.mxu0 0
  %1322 = vmatpush1.bf16.msra.mxu0 0
  %1323 = vmatprep.subr.bf16.mxu0 0
  %1324 = vmatpush1.bf16.msra.mxu0 0
  %1325 = vmatprep.subr.bf16.mxu0 0
  %1326 = vmatpush1.bf16.msra.mxu0 0
  %1327 = vmatprep.subr.bf16.mxu0 0
  %1328 = vmatpush1.bf16.msra.mxu0 0
  %1329 = vmatprep.subr.bf16.mxu0 0
  %1330 = vmatpush1.bf16.msra.mxu0 0
  %1331 = vmatprep.subr.bf16.mxu0 0
  %1332 = vmatpush1.bf16.msra.mxu0 0
  %1333 = vmatprep.subr.bf16.mxu0 0
  %1334 = vmatpush1.bf16.msra.mxu0 0
  %1335 = vmatprep.subr.bf16.mxu0 0
  %1336 = vmatpush1.bf16.msra.mxu0 0
  %1337 = vmatprep.mubr.bf16.mxu0 0
  %1338 = vmatmul.mubr.bf16.gmra.mrb[0].mxu0 %v1140
  %v1339 = vpop.f32.mrb[0].mxu0
  %v1340 = vadd.f32 0.0, %v1339
  %v1341 = vpop.f32.mrb[0].mxu0
  %v1342 = vpop.f32.mrb[0].mxu0
  %v1343 = vpop.f32.mrb[0].mxu0
  %1344 = vdwg.mxu0
  %v1346 = vrot.slane %v1340, 2
  %v1348 = vadd.f32 %v312, %v1346
  %v1349 = vtanh.pop %v1348
  %v1350 = vmul.f32 %v1349, 0.5
  %v1351 = vadd.f32 %v1350, 0.5
  %v1353 = vrot.slane %v1072, 6
  %v1355 = vmul.f32 %v1351, %v1353
  %1357 = vrot.lane.b32.xlu0 %v1349, 64
  %v1358 = vpop.permute.xlu0 %1357
  %v1360 = vmul.f32 %v1351, %v1358
  %1362 = vrot.lane.b32.xlu0 %v1360, 32
  %v1363 = vpop.permute.xlu0 %1362
  %v1365 = vadd.f32 %v1355, %v1363
  %v1366 = vtanh.pop %v1365
  %1368 = vrot.lane.b32.xlu0 %v1366, 64
  %v1369 = vpop.permute.xlu0 %1368
  %v1371 = vmul.f32 %v1351, %v1369
  %1373 = vrot.lane.b32.xlu0 %v1371, 32
  %v1374 = vpop.permute.xlu0 %1373
  %vm1376 = vcmask 261126
  %1377 = vst.msk [vmem:[#allocation2] sm:$0xc0] %vm1376, %v1374
  %v1378 = vpack.c.bf16 %v1371, %v1371
  %v1380 = vshrl.u32 %v1378, 16
  %v1382 = vrot.slane %v1380, 3
  %1383 = vrot.lane.b32.xlu0 %v1382, 32
  %v1384 = vpop.permute.xlu0 %1383
  %v1386 = vsel %vm84, %v1384, 0
  %1388 = vmatprep.subr.bf16.mxu0 0
  %1389 = vmatpush1.bf16.msra.mxu0 %v475
  %1390 = vmatprep.subr.bf16.mxu0 0
  %1391 = vmatpush1.bf16.msra.mxu0 %v476
  %1392 = vmatprep.subr.bf16.mxu0 0
  %1393 = vmatpush1.bf16.msra.mxu0 0
  %1394 = vmatprep.subr.bf16.mxu0 0
  %1395 = vmatpush1.bf16.msra.mxu0 0
  %1396 = vmatprep.subr.bf16.mxu0 0
  %1397 = vmatpush1.bf16.msra.mxu0 0
  %1398 = vmatprep.subr.bf16.mxu0 0
  %1399 = vmatpush1.bf16.msra.mxu0 0
  %1400 = vmatprep.subr.bf16.mxu0 0
  %1401 = vmatpush1.bf16.msra.mxu0 0
  %1402 = vmatprep.subr.bf16.mxu0 0
  %1403 = vmatpush1.bf16.msra.mxu0 0
  %1404 = vmatprep.subr.bf16.mxu0 0
  %1405 = vmatpush1.bf16.msra.mxu0 0
  %1406 = vmatprep.subr.bf16.mxu0 0
  %1407 = vmatpush1.bf16.msra.mxu0 0
  %1408 = vmatprep.subr.bf16.mxu0 0
  %1409 = vmatpush1.bf16.msra.mxu0 0
  %1410 = vmatprep.subr.bf16.mxu0 0
  %1411 = vmatpush1.bf16.msra.mxu0 0
  %1412 = vmatprep.subr.bf16.mxu0 0
  %1413 = vmatpush1.bf16.msra.mxu0 0
  %1414 = vmatprep.subr.bf16.mxu0 0
  %1415 = vmatpush1.bf16.msra.mxu0 0
  %1416 = vmatprep.subr.bf16.mxu0 0
  %1417 = vmatpush1.bf16.msra.mxu0 0
  %1418 = vmatprep.subr.bf16.mxu0 0
  %1419 = vmatpush1.bf16.msra.mxu0 0
  %1420 = vmatprep.mubr.bf16.mxu0 0
  %1421 = vmatmul.mubr.bf16.gmra.mrb[0].mxu0 %v1386
  %v1422 = vpop.f32.mrb[0].mxu0
  %v1423 = vadd.f32 0.0, %v1422
  %v1424 = vpop.f32.mrb[0].mxu0
  %v1425 = vpop.f32.mrb[0].mxu0
  %v1426 = vpop.f32.mrb[0].mxu0
  %1427 = vdwg.mxu0
  %v1429 = vrot.slane %v1378, 3
  %1430 = vrot.lane.b32.xlu0 %v1429, 32
  %v1431 = vpop.permute.xlu0 %1430
  %v1433 = vsel %vm84, %v1431, 0
  %1435 = vmatprep.subr.bf16.mxu0 0
  %1436 = vmatpush1.bf16.msra.mxu0 %v533
  %1437 = vmatprep.subr.bf16.mxu0 0
  %1438 = vmatpush1.bf16.msra.mxu0 %v534
  %1439 = vmatprep.subr.bf16.mxu0 0
  %1440 = vmatpush1.bf16.msra.mxu0 0
  %1441 = vmatprep.subr.bf16.mxu0 0
  %1442 = vmatpush1.bf16.msra.mxu0 0
  %1443 = vmatprep.subr.bf16.mxu0 0
  %1444 = vmatpush1.bf16.msra.mxu0 0
  %1445 = vmatprep.subr.bf16.mxu0 0
  %1446 = vmatpush1.bf16.msra.mxu0 0
  %1447 = vmatprep.subr.bf16.mxu0 0
  %1448 = vmatpush1.bf16.msra.mxu0 0
  %1449 = vmatprep.subr.bf16.mxu0 0
  %1450 = vmatpush1.bf16.msra.mxu0 0
  %1451 = vmatprep.subr.bf16.mxu0 0
  %1452 = vmatpush1.bf16.msra.mxu0 0
  %1453 = vmatprep.subr.bf16.mxu0 0
  %1454 = vmatpush1.bf16.msra.mxu0 0
  %1455 = vmatprep.subr.bf16.mxu0 0
  %1456 = vmatpush1.bf16.msra.mxu0 0
  %1457 = vmatprep.subr.bf16.mxu0 0
  %1458 = vmatpush1.bf16.msra.mxu0 0
  %1459 = vmatprep.subr.bf16.mxu0 0
  %1460 = vmatpush1.bf16.msra.mxu0 0
  %1461 = vmatprep.subr.bf16.mxu0 0
  %1462 = vmatpush1.bf16.msra.mxu0 0
  %1463 = vmatprep.subr.bf16.mxu0 0
  %1464 = vmatpush1.bf16.msra.mxu0 0
  %1465 = vmatprep.subr.bf16.mxu0 0
  %1466 = vmatpush1.bf16.msra.mxu0 0
  %1467 = vmatprep.mubr.bf16.mxu0 0
  %1468 = vmatmul.mubr.bf16.gmra.mrb[0].mxu0 %v1433
  %v1469 = vpop.f32.mrb[0].mxu0
  %v1470 = vadd.f32 %v1423, %v1469
  %v1471 = vpop.f32.mrb[0].mxu0
  %v1472 = vpop.f32.mrb[0].mxu0
  %v1473 = vpop.f32.mrb[0].mxu0
  %1474 = vdwg.mxu0
  %v1475 = vadd.f32 %v1470, %v58
  %v1476 = vmax.f32 %v1475, 0.0
  %v1477 = vpack.c.bf16 %v1476, %v1476
  %v1479 = vsel %vm84, %v1477, 0
  %1481 = vmatprep.subr.bf16.mxu0 0
  %1482 = vmatpush1.bf16.msra.mxu0 %v591
  %1483 = vmatprep.subr.bf16.mxu0 0
  %1484 = vmatpush1.bf16.msra.mxu0 %v592
  %1485 = vmatprep.subr.bf16.mxu0 0
  %1486 = vmatpush1.bf16.msra.mxu0 0
  %1487 = vmatprep.subr.bf16.mxu0 0
  %1488 = vmatpush1.bf16.msra.mxu0 0
  %1489 = vmatprep.subr.bf16.mxu0 0
  %1490 = vmatpush1.bf16.msra.mxu0 0
  %1491 = vmatprep.subr.bf16.mxu0 0
  %1492 = vmatpush1.bf16.msra.mxu0 0
  %1493 = vmatprep.subr.bf16.mxu0 0
  %1494 = vmatpush1.bf16.msra.mxu0 0
  %1495 = vmatprep.subr.bf16.mxu0 0
  %1496 = vmatpush1.bf16.msra.mxu0 0
  %1497 = vmatprep.subr.bf16.mxu0 0
  %1498 = vmatpush1.bf16.msra.mxu0 0
  %1499 = vmatprep.subr.bf16.mxu0 0
  %1500 = vmatpush1.bf16.msra.mxu0 0
  %1501 = vmatprep.subr.bf16.mxu0 0
  %1502 = vmatpush1.bf16.msra.mxu0 0
  %1503 = vmatprep.subr.bf16.mxu0 0
  %1504 = vmatpush1.bf16.msra.mxu0 0
  %1505 = vmatprep.subr.bf16.mxu0 0
  %1506 = vmatpush1.bf16.msra.mxu0 0
  %1507 = vmatprep.subr.bf16.mxu0 0
  %1508 = vmatpush1.bf16.msra.mxu0 0
  %1509 = vmatprep.subr.bf16.mxu0 0
  %1510 = vmatpush1.bf16.msra.mxu0 0
  %1511 = vmatprep.subr.bf16.mxu0 0
  %1512 = vmatpush1.bf16.msra.mxu0 0
  %1513 = vmatprep.mubr.bf16.mxu0 0
  %1514 = vmatmul.mubr.bf16.gmra.mrb[0].mxu0 %v1479
  %v1515 = vpop.f32.mrb[0].mxu0
  %v1516 = vadd.f32 %v1300, %v1515
  %v1517 = vpop.f32.mrb[0].mxu0
  %v1518 = vpop.f32.mrb[0].mxu0
  %v1519 = vpop.f32.mrb[0].mxu0
  %1520 = vdwg.mxu0
  %v1521 = vadd.f32 %v1516, %v54
  %v1522 = vtanh.pop %v1521
  %v1523 = vmul.f32 %v1522, 0.5
  %v1524 = vadd.f32 %v1523, 0.5
  %v1525 = vmul.f32 %v1524, %v1242
  %1527 = vrot.lane.b32.xlu0 %v1522, 64
  %v1528 = vpop.permute.xlu0 %1527
  %v1530 = vmul.f32 %v1524, %v1528
  %1532 = vrot.lane.b32.xlu0 %v1530, 32
  %v1533 = vpop.permute.xlu0 %1532
  %v1535 = vadd.f32 %v1525, %v1533
  %v1536 = vtanh.pop %v1535
  %1538 = vrot.lane.b32.xlu0 %v1536, 64
  %v1539 = vpop.permute.xlu0 %1538
  %v1541 = vmul.f32 %v1524, %v1539
  %v1542 = vlaneseq
  %v1543 = vshrl.u32 %v1542, 7
  %v1544 = vsub.s32 0, %v1543
  %v1545 = vrot.slane %v1541, %v1544
  %1547 = vrot.lane.b32.xlu0 %v1545, 32
  %v1548 = vpop.permute.xlu0 %1547
  %1550 = vst.msk [vmem:[#allocation3 + $0x6] sm:$0x3] %vm459, %v1548
  %v1551 = vpack.c.bf16 %v1541, %v1541
  %1553 = vrot.lane.b32.xlu0 %v1551, 32
  %v1554 = vpop.permute.xlu0 %1553
  %v1556 = vsel %vm84, %v1554, 0
  %1558 = vmatprep.subr.bf16.mxu0 0
  %1559 = vmatpush1.bf16.msra.mxu0 %v327
  %1560 = vmatprep.subr.bf16.mxu0 0
  %1561 = vmatpush1.bf16.msra.mxu0 %v328
  %1562 = vmatprep.subr.bf16.mxu0 0
  %1563 = vmatpush1.bf16.msra.mxu0 0
  %1564 = vmatprep.subr.bf16.mxu0 0
  %1565 = vmatpush1.bf16.msra.mxu0 0
  %1566 = vmatprep.subr.bf16.mxu0 0
  %1567 = vmatpush1.bf16.msra.mxu0 0
  %1568 = vmatprep.subr.bf16.mxu0 0
  %1569 = vmatpush1.bf16.msra.mxu0 0
  %1570 = vmatprep.subr.bf16.mxu0 0
  %1571 = vmatpush1.bf16.msra.mxu0 0
  %1572 = vmatprep.subr.bf16.mxu0 0
  %1573 = vmatpush1.bf16.msra.mxu0 0
  %1574 = vmatprep.subr.bf16.mxu0 0
  %1575 = vmatpush1.bf16.msra.mxu0 0
  %1576 = vmatprep.subr.bf16.mxu0 0
  %1577 = vmatpush1.bf16.msra.mxu0 0
  %1578 = vmatprep.subr.bf16.mxu0 0
  %1579 = vmatpush1.bf16.msra.mxu0 0
  %1580 = vmatprep.subr.bf16.mxu0 0
  %1581 = vmatpush1.bf16.msra.mxu0 0
  %1582 = vmatprep.subr.bf16.mxu0 0
  %1583 = vmatpush1.bf16.msra.mxu0 0
  %1584 = vmatprep.subr.bf16.mxu0 0
  %1585 = vmatpush1.bf16.msra.mxu0 0
  %1586 = vmatprep.subr.bf16.mxu0 0
  %1587 = vmatpush1.bf16.msra.mxu0 0
  %1588 = vmatprep.subr.bf16.mxu0 0
  %1589 = vmatpush1.bf16.msra.mxu0 0
  %1590 = vmatprep.mubr.bf16.mxu0 0
  %1591 = vmatmul.mubr.bf16.gmra.mrb[0].mxu0 %v1556
  %v1592 = vpop.f32.mrb[0].mxu0
  %v1593 = vadd.f32 0.0, %v1592
  %v1594 = vpop.f32.mrb[0].mxu0
  %v1595 = vpop.f32.mrb[0].mxu0
  %v1596 = vpop.f32.mrb[0].mxu0
  %1597 = vdwg.mxu0
  %1598 = vmatprep.subr.bf16.mxu0 0
  %1599 = vmatpush1.bf16.msra.mxu0 %v383
  %1600 = vmatprep.subr.bf16.mxu0 0
  %1601 = vmatpush1.bf16.msra.mxu0 %v384
  %1602 = vmatprep.subr.bf16.mxu0 0
  %1603 = vmatpush1.bf16.msra.mxu0 0
  %1604 = vmatprep.subr.bf16.mxu0 0
  %1605 = vmatpush1.bf16.msra.mxu0 0
  %1606 = vmatprep.subr.bf16.mxu0 0
  %1607 = vmatpush1.bf16.msra.mxu0 0
  %1608 = vmatprep.subr.bf16.mxu0 0
  %1609 = vmatpush1.bf16.msra.mxu0 0
  %1610 = vmatprep.subr.bf16.mxu0 0
  %1611 = vmatpush1.bf16.msra.mxu0 0
  %1612 = vmatprep.subr.bf16.mxu0 0
  %1613 = vmatpush1.bf16.msra.mxu0 0
  %1614 = vmatprep.subr.bf16.mxu0 0
  %1615 = vmatpush1.bf16.msra.mxu0 0
  %1616 = vmatprep.subr.bf16.mxu0 0
  %1617 = vmatpush1.bf16.msra.mxu0 0
  %1618 = vmatprep.subr.bf16.mxu0 0
  %1619 = vmatpush1.bf16.msra.mxu0 0
  %1620 = vmatprep.subr.bf16.mxu0 0
  %1621 = vmatpush1.bf16.msra.mxu0 0
  %1622 = vmatprep.subr.bf16.mxu0 0
  %1623 = vmatpush1.bf16.msra.mxu0 0
  %1624 = vmatprep.subr.bf16.mxu0 0
  %1625 = vmatpush1.bf16.msra.mxu0 0
  %1626 = vmatprep.subr.bf16.mxu0 0
  %1627 = vmatpush1.bf16.msra.mxu0 0
  %1628 = vmatprep.subr.bf16.mxu0 0
  %1629 = vmatpush1.bf16.msra.mxu0 0
  %1630 = vmatprep.mubr.bf16.mxu0 0
  %1631 = vmatmul.mubr.bf16.gmra.mrb[0].mxu0 %v1433
  %v1632 = vpop.f32.mrb[0].mxu0
  %v1633 = vadd.f32 0.0, %v1632
  %v1634 = vpop.f32.mrb[0].mxu0
  %v1635 = vpop.f32.mrb[0].mxu0
  %v1636 = vpop.f32.mrb[0].mxu0
  %1637 = vdwg.mxu0
  %v1638 = vadd.f32 %v315, %v1633
  %v1639 = vtanh.pop %v1638
  %v1640 = vmul.f32 %v1639, 0.5
  %v1641 = vadd.f32 %v1640, 0.5
  %v1643 = vrot.slane %v1365, 6
  %v1645 = vmul.f32 %v1641, %v1643
  %1647 = vrot.lane.b32.xlu0 %v1639, 64
  %v1648 = vpop.permute.xlu0 %1647
  %v1650 = vmul.f32 %v1641, %v1648
  %1652 = vrot.lane.b32.xlu0 %v1650, 32
  %v1653 = vpop.permute.xlu0 %1652
  %v1655 = vadd.f32 %v1645, %v1653
  %v1656 = vtanh.pop %v1655
  %1658 = vrot.lane.b32.xlu0 %v1656, 64
  %v1659 = vpop.permute.xlu0 %1658
  %v1661 = vmul.f32 %v1641, %v1659
  %1663 = vrot.lane.b32.xlu0 %v1661, 32
  %v1664 = vpop.permute.xlu0 %1663
  %1666 = vst.msk [vmem:[#allocation2 + $0x8] sm:$0x3] %vm459, %v1664
  %v1667 = vpack.c.bf16 %v1661, %v1661
  %v1669 = vshrl.u32 %v1667, 16
  %1671 = vrot.lane.b32.xlu0 %v1669, 32
  %v1672 = vpop.permute.xlu0 %1671
  %v1674 = vsel %vm84, %v1672, 0
  %1676 = vmatprep.subr.bf16.mxu0 0
  %1677 = vmatpush1.bf16.msra.mxu0 %v475
  %1678 = vmatprep.subr.bf16.mxu0 0
  %1679 = vmatpush1.bf16.msra.mxu0 %v476
  %1680 = vmatprep.subr.bf16.mxu0 0
  %1681 = vmatpush1.bf16.msra.mxu0 0
  %1682 = vmatprep.subr.bf16.mxu0 0
  %1683 = vmatpush1.bf16.msra.mxu0 0
  %1684 = vmatprep.subr.bf16.mxu0 0
  %1685 = vmatpush1.bf16.msra.mxu0 0
  %1686 = vmatprep.subr.bf16.mxu0 0
  %1687 = vmatpush1.bf16.msra.mxu0 0
  %1688 = vmatprep.subr.bf16.mxu0 0
  %1689 = vmatpush1.bf16.msra.mxu0 0
  %1690 = vmatprep.subr.bf16.mxu0 0
  %1691 = vmatpush1.bf16.msra.mxu0 0
  %1692 = vmatprep.subr.bf16.mxu0 0
  %1693 = vmatpush1.bf16.msra.mxu0 0
  %1694 = vmatprep.subr.bf16.mxu0 0
  %1695 = vmatpush1.bf16.msra.mxu0 0
  %1696 = vmatprep.subr.bf16.mxu0 0
  %1697 = vmatpush1.bf16.msra.mxu0 0
  %1698 = vmatprep.subr.bf16.mxu0 0
  %1699 = vmatpush1.bf16.msra.mxu0 0
  %1700 = vmatprep.subr.bf16.mxu0 0
  %1701 = vmatpush1.bf16.msra.mxu0 0
  %1702 = vmatprep.subr.bf16.mxu0 0
  %1703 = vmatpush1.bf16.msra.mxu0 0
  %1704 = vmatprep.subr.bf16.mxu0 0
  %1705 = vmatpush1.bf16.msra.mxu0 0
  %1706 = vmatprep.subr.bf16.mxu0 0
  %1707 = vmatpush1.bf16.msra.mxu0 0
  %1708 = vmatprep.mubr.bf16.mxu0 0
  %1709 = vmatmul.mubr.bf16.gmra.mrb[0].mxu0 %v1674
  %v1710 = vpop.f32.mrb[0].mxu0
  %v1711 = vadd.f32 0.0, %v1710
  %v1712 = vpop.f32.mrb[0].mxu0
  %v1713 = vpop.f32.mrb[0].mxu0
  %v1714 = vpop.f32.mrb[0].mxu0
  %1715 = vdwg.mxu0
  %1717 = vrot.lane.b32.xlu0 %v1667, 32
  %v1718 = vpop.permute.xlu0 %1717
  %v1720 = vsel %vm84, %v1718, 0
  %1722 = vmatprep.subr.bf16.mxu0 0
  %1723 = vmatpush1.bf16.msra.mxu0 %v533
  %1724 = vmatprep.subr.bf16.mxu0 0
  %1725 = vmatpush1.bf16.msra.mxu0 %v534
  %1726 = vmatprep.subr.bf16.mxu0 0
  %1727 = vmatpush1.bf16.msra.mxu0 0
  %1728 = vmatprep.subr.bf16.mxu0 0
  %1729 = vmatpush1.bf16.msra.mxu0 0
  %1730 = vmatprep.subr.bf16.mxu0 0
  %1731 = vmatpush1.bf16.msra.mxu0 0
  %1732 = vmatprep.subr.bf16.mxu0 0
  %1733 = vmatpush1.bf16.msra.mxu0 0
  %1734 = vmatprep.subr.bf16.mxu0 0
  %1735 = vmatpush1.bf16.msra.mxu0 0
  %1736 = vmatprep.subr.bf16.mxu0 0
  %1737 = vmatpush1.bf16.msra.mxu0 0
  %1738 = vmatprep.subr.bf16.mxu0 0
  %1739 = vmatpush1.bf16.msra.mxu0 0
  %1740 = vmatprep.subr.bf16.mxu0 0
  %1741 = vmatpush1.bf16.msra.mxu0 0
  %1742 = vmatprep.subr.bf16.mxu0 0
  %1743 = vmatpush1.bf16.msra.mxu0 0
  %1744 = vmatprep.subr.bf16.mxu0 0
  %1745 = vmatpush1.bf16.msra.mxu0 0
  %1746 = vmatprep.subr.bf16.mxu0 0
  %1747 = vmatpush1.bf16.msra.mxu0 0
  %1748 = vmatprep.subr.bf16.mxu0 0
  %1749 = vmatpush1.bf16.msra.mxu0 0
  %1750 = vmatprep.subr.bf16.mxu0 0
  %1751 = vmatpush1.bf16.msra.mxu0 0
  %1752 = vmatprep.subr.bf16.mxu0 0
  %1753 = vmatpush1.bf16.msra.mxu0 0
  %1754 = vmatprep.mubr.bf16.mxu0 0
  %1755 = vmatmul.mubr.bf16.gmra.mrb[0].mxu0 %v1720
  %v1756 = vpop.f32.mrb[0].mxu0
  %v1757 = vadd.f32 %v1711, %v1756
  %v1758 = vpop.f32.mrb[0].mxu0
  %v1759 = vpop.f32.mrb[0].mxu0
  %v1760 = vpop.f32.mrb[0].mxu0
  %1761 = vdwg.mxu0
  %v1762 = vadd.f32 %v1757, %v58
  %v1763 = vmax.f32 %v1762, 0.0
  %v1764 = vpack.c.bf16 %v1763, %v1763
  %v1766 = vsel %vm84, %v1764, 0
  %1768 = vmatprep.subr.bf16.mxu0 0
  %1769 = vmatpush1.bf16.msra.mxu0 %v591
  %1770 = vmatprep.subr.bf16.mxu0 0
  %1771 = vmatpush1.bf16.msra.mxu0 %v592
  %1772 = vmatprep.subr.bf16.mxu0 0
  %1773 = vmatpush1.bf16.msra.mxu0 0
  %1774 = vmatprep.subr.bf16.mxu0 0
  %1775 = vmatpush1.bf16.msra.mxu0 0
  %1776 = vmatprep.subr.bf16.mxu0 0
  %1777 = vmatpush1.bf16.msra.mxu0 0
  %1778 = vmatprep.subr.bf16.mxu0 0
  %1779 = vmatpush1.bf16.msra.mxu0 0
  %1780 = vmatprep.subr.bf16.mxu0 0
  %1781 = vmatpush1.bf16.msra.mxu0 0
  %1782 = vmatprep.subr.bf16.mxu0 0
  %1783 = vmatpush1.bf16.msra.mxu0 0
  %1784 = vmatprep.subr.bf16.mxu0 0
  %1785 = vmatpush1.bf16.msra.mxu0 0
  %1786 = vmatprep.subr.bf16.mxu0 0
  %1787 = vmatpush1.bf16.msra.mxu0 0
  %1788 = vmatprep.subr.bf16.mxu0 0
  %1789 = vmatpush1.bf16.msra.mxu0 0
  %1790 = vmatprep.subr.bf16.mxu0 0
  %1791 = vmatpush1.bf16.msra.mxu0 0
  %1792 = vmatprep.subr.bf16.mxu0 0
  %1793 = vmatpush1.bf16.msra.mxu0 0
  %1794 = vmatprep.subr.bf16.mxu0 0
  %1795 = vmatpush1.bf16.msra.mxu0 0
  %1796 = vmatprep.subr.bf16.mxu0 0
  %1797 = vmatpush1.bf16.msra.mxu0 0
  %1798 = vmatprep.subr.bf16.mxu0 0
  %1799 = vmatpush1.bf16.msra.mxu0 0
  %1800 = vmatprep.mubr.bf16.mxu0 0
  %1801 = vmatmul.mubr.bf16.gmra.mrb[0].mxu0 %v1766
  %v1802 = vpop.f32.mrb[0].mxu0
  %v1803 = vadd.f32 %v1593, %v1802
  %v1804 = vpop.f32.mrb[0].mxu0
  %v1805 = vpop.f32.mrb[0].mxu0
  %v1806 = vpop.f32.mrb[0].mxu0
  %1807 = vdwg.mxu0
  %v1808 = vadd.f32 %v1803, %v54
  %v1809 = vtanh.pop %v1808
  %v1810 = vmul.f32 %v1809, 0.5
  %v1811 = vadd.f32 %v1810, 0.5
  %v1812 = vmul.f32 %v1811, %v1535
  %1814 = vrot.lane.b32.xlu0 %v1809, 64
  %v1815 = vpop.permute.xlu0 %1814
  %v1817 = vmul.f32 %v1811, %v1815
  %1819 = vrot.lane.b32.xlu0 %v1817, 32
  %v1820 = vpop.permute.xlu0 %1819
  %v1822 = vadd.f32 %v1812, %v1820
  %v1823 = vtanh.pop %v1822
  %1825 = vrot.lane.b32.xlu0 %v1823, 64
  %v1826 = vpop.permute.xlu0 %1825
  %v1828 = vmul.f32 %v1811, %v1826
  %v1829 = vlaneseq
  %v1830 = vshrl.u32 %v1829, 7
  %v1831 = vsub.s32 0, %v1830
  %v1832 = vrot.slane %v1828, %v1831
  %1834 = vrot.lane.b32.xlu0 %v1832, 32
  %v1835 = vpop.permute.xlu0 %1834
  %1837 = vst.msk [vmem:[#allocation3 + $0x8] sm:$0x3] %vm459, %v1835
  %v1838 = vpack.c.bf16 %v1828, %v1828
  %1840 = vrot.lane.b32.xlu0 %v1838, 32
  %v1841 = vpop.permute.xlu0 %1840
  %v1843 = vsel %vm84, %v1841, 0
  %1845 = vmatprep.subr.bf16.mxu0 0
  %1846 = vmatpush1.bf16.msra.mxu0 %v327
  %1847 = vmatprep.subr.bf16.mxu0 0
  %1848 = vmatpush1.bf16.msra.mxu0 %v328
  %1849 = vmatprep.subr.bf16.mxu0 0
  %1850 = vmatpush1.bf16.msra.mxu0 0
  %1851 = vmatprep.subr.bf16.mxu0 0
  %1852 = vmatpush1.bf16.msra.mxu0 0
  %1853 = vmatprep.subr.bf16.mxu0 0
  %1854 = vmatpush1.bf16.msra.mxu0 0
  %1855 = vmatprep.subr.bf16.mxu0 0
  %1856 = vmatpush1.bf16.msra.mxu0 0
  %1857 = vmatprep.subr.bf16.mxu0 0
  %1858 = vmatpush1.bf16.msra.mxu0 0
  %1859 = vmatprep.subr.bf16.mxu0 0
  %1860 = vmatpush1.bf16.msra.mxu0 0
  %1861 = vmatprep.subr.bf16.mxu0 0
  %1862 = vmatpush1.bf16.msra.mxu0 0
  %1863 = vmatprep.subr.bf16.mxu0 0
  %1864 = vmatpush1.bf16.msra.mxu0 0
  %1865 = vmatprep.subr.bf16.mxu0 0
  %1866 = vmatpush1.bf16.msra.mxu0 0
  %1867 = vmatprep.subr.bf16.mxu0 0
  %1868 = vmatpush1.bf16.msra.mxu0 0
  %1869 = vmatprep.subr.bf16.mxu0 0
  %1870 = vmatpush1.bf16.msra.mxu0 0
  %1871 = vmatprep.subr.bf16.mxu0 0
  %1872 = vmatpush1.bf16.msra.mxu0 0
  %1873 = vmatprep.subr.bf16.mxu0 0
  %1874 = vmatpush1.bf16.msra.mxu0 0
  %1875 = vmatprep.subr.bf16.mxu0 0
  %1876 = vmatpush1.bf16.msra.mxu0 0
  %1877 = vmatprep.mubr.bf16.mxu0 0
  %1878 = vmatmul.mubr.bf16.gmra.mrb[0].mxu0 %v1843
  %v1879 = vpop.f32.mrb[0].mxu0
  %v1880 = vadd.f32 0.0, %v1879
  %v1881 = vpop.f32.mrb[0].mxu0
  %v1882 = vpop.f32.mrb[0].mxu0
  %v1883 = vpop.f32.mrb[0].mxu0
  %1884 = vdwg.mxu0
  %1885 = vmatprep.subr.bf16.mxu0 0
  %1886 = vmatpush1.bf16.msra.mxu0 %v383
  %1887 = vmatprep.subr.bf16.mxu0 0
  %1888 = vmatpush1.bf16.msra.mxu0 %v384
  %1889 = vmatprep.subr.bf16.mxu0 0
  %1890 = vmatpush1.bf16.msra.mxu0 0
  %1891 = vmatprep.subr.bf16.mxu0 0
  %1892 = vmatpush1.bf16.msra.mxu0 0
  %1893 = vmatprep.subr.bf16.mxu0 0
  %1894 = vmatpush1.bf16.msra.mxu0 0
  %1895 = vmatprep.subr.bf16.mxu0 0
  %1896 = vmatpush1.bf16.msra.mxu0 0
  %1897 = vmatprep.subr.bf16.mxu0 0
  %1898 = vmatpush1.bf16.msra.mxu0 0
  %1899 = vmatprep.subr.bf16.mxu0 0
  %1900 = vmatpush1.bf16.msra.mxu0 0
  %1901 = vmatprep.subr.bf16.mxu0 0
  %1902 = vmatpush1.bf16.msra.mxu0 0
  %1903 = vmatprep.subr.bf16.mxu0 0
  %1904 = vmatpush1.bf16.msra.mxu0 0
  %1905 = vmatprep.subr.bf16.mxu0 0
  %1906 = vmatpush1.bf16.msra.mxu0 0
  %1907 = vmatprep.subr.bf16.mxu0 0
  %1908 = vmatpush1.bf16.msra.mxu0 0
  %1909 = vmatprep.subr.bf16.mxu0 0
  %1910 = vmatpush1.bf16.msra.mxu0 0
  %1911 = vmatprep.subr.bf16.mxu0 0
  %1912 = vmatpush1.bf16.msra.mxu0 0
  %1913 = vmatprep.subr.bf16.mxu0 0
  %1914 = vmatpush1.bf16.msra.mxu0 0
  %1915 = vmatprep.subr.bf16.mxu0 0
  %1916 = vmatpush1.bf16.msra.mxu0 0
  %1917 = vmatprep.mubr.bf16.mxu0 0
  %1918 = vmatmul.mubr.bf16.gmra.mrb[0].mxu0 %v1720
  %v1919 = vpop.f32.mrb[0].mxu0
  %v1920 = vadd.f32 0.0, %v1919
  %v1921 = vpop.f32.mrb[0].mxu0
  %v1922 = vpop.f32.mrb[0].mxu0
  %v1923 = vpop.f32.mrb[0].mxu0
  %1924 = vdwg.mxu0
  %v1926 = vrot.slane %v1920, 6
  %v1928 = vadd.f32 %v315, %v1926
  %v1929 = vtanh.pop %v1928
  %v1930 = vmul.f32 %v1929, 0.5
  %v1931 = vadd.f32 %v1930, 0.5
  %v1933 = vrot.slane %v1655, 6
  %v1935 = vmul.f32 %v1931, %v1933
  %1937 = vrot.lane.b32.xlu0 %v1929, 64
  %v1938 = vpop.permute.xlu0 %1937
  %v1940 = vmul.f32 %v1931, %v1938
  %1942 = vrot.lane.b32.xlu0 %v1940, 32
  %v1943 = vpop.permute.xlu0 %1942
  %v1945 = vadd.f32 %v1935, %v1943
  %v1946 = vtanh.pop %v1945
  %1948 = vrot.lane.b32.xlu0 %v1946, 64
  %v1949 = vpop.permute.xlu0 %1948
  %v1951 = vmul.f32 %v1931, %v1949
  %1953 = vrot.lane.b32.xlu0 %v1951, 32
  %v1954 = vpop.permute.xlu0 %1953
  %1956 = vst.msk [vmem:[#allocation2 + $0x8] sm:$0xc] %vm790, %v1954
  %v1957 = vpack.c.bf16 %v1951, %v1951
  %v1959 = vshrl.u32 %v1957, 16
  %v1961 = vrot.slane %v1959, 1
  %1962 = vrot.lane.b32.xlu0 %v1961, 32
  %v1963 = vpop.permute.xlu0 %1962
  %v1965 = vsel %vm84, %v1963, 0
  %1967 = vmatprep.subr.bf16.mxu0 0
  %1968 = vmatpush1.bf16.msra.mxu0 %v475
  %1969 = vmatprep.subr.bf16.mxu0 0
  %1970 = vmatpush1.bf16.msra.mxu0 %v476
  %1971 = vmatprep.subr.bf16.mxu0 0
  %1972 = vmatpush1.bf16.msra.mxu0 0
  %1973 = vmatprep.subr.bf16.mxu0 0
  %1974 = vmatpush1.bf16.msra.mxu0 0
  %1975 = vmatprep.subr.bf16.mxu0 0
  %1976 = vmatpush1.bf16.msra.mxu0 0
  %1977 = vmatprep.subr.bf16.mxu0 0
  %1978 = vmatpush1.bf16.msra.mxu0 0
  %1979 = vmatprep.subr.bf16.mxu0 0
  %1980 = vmatpush1.bf16.msra.mxu0 0
  %1981 = vmatprep.subr.bf16.mxu0 0
  %1982 = vmatpush1.bf16.msra.mxu0 0
  %1983 = vmatprep.subr.bf16.mxu0 0
  %1984 = vmatpush1.bf16.msra.mxu0 0
  %1985 = vmatprep.subr.bf16.mxu0 0
  %1986 = vmatpush1.bf16.msra.mxu0 0
  %1987 = vmatprep.subr.bf16.mxu0 0
  %1988 = vmatpush1.bf16.msra.mxu0 0
  %1989 = vmatprep.subr.bf16.mxu0 0
  %1990 = vmatpush1.bf16.msra.mxu0 0
  %1991 = vmatprep.subr.bf16.mxu0 0
  %1992 = vmatpush1.bf16.msra.mxu0 0
  %1993 = vmatprep.subr.bf16.mxu0 0
  %1994 = vmatpush1.bf16.msra.mxu0 0
  %1995 = vmatprep.subr.bf16.mxu0 0
  %1996 = vmatpush1.bf16.msra.mxu0 0
  %1997 = vmatprep.subr.bf16.mxu0 0
  %1998 = vmatpush1.bf16.msra.mxu0 0
  %1999 = vmatprep.mubr.bf16.mxu0 0
  %2000 = vmatmul.mubr.bf16.gmra.mrb[0].mxu0 %v1965
  %v2001 = vpop.f32.mrb[0].mxu0
  %v2002 = vadd.f32 0.0, %v2001
  %v2003 = vpop.f32.mrb[0].mxu0
  %v2004 = vpop.f32.mrb[0].mxu0
  %v2005 = vpop.f32.mrb[0].mxu0
  %2006 = vdwg.mxu0
  %v2008 = vrot.slane %v1957, 1
  %2009 = vrot.lane.b32.xlu0 %v2008, 32
  %v2010 = vpop.permute.xlu0 %2009
  %v2012 = vsel %vm84, %v2010, 0
  %2014 = vmatprep.subr.bf16.mxu0 0
  %2015 = vmatpush1.bf16.msra.mxu0 %v533
  %2016 = vmatprep.subr.bf16.mxu0 0
  %2017 = vmatpush1.bf16.msra.mxu0 %v534
  %2018 = vmatprep.subr.bf16.mxu0 0
  %2019 = vmatpush1.bf16.msra.mxu0 0
  %2020 = vmatprep.subr.bf16.mxu0 0
  %2021 = vmatpush1.bf16.msra.mxu0 0
  %2022 = vmatprep.subr.bf16.mxu0 0
  %2023 = vmatpush1.bf16.msra.mxu0 0
  %2024 = vmatprep.subr.bf16.mxu0 0
  %2025 = vmatpush1.bf16.msra.mxu0 0
  %2026 = vmatprep.subr.bf16.mxu0 0
  %2027 = vmatpush1.bf16.msra.mxu0 0
  %2028 = vmatprep.subr.bf16.mxu0 0
  %2029 = vmatpush1.bf16.msra.mxu0 0
  %2030 = vmatprep.subr.bf16.mxu0 0
  %2031 = vmatpush1.bf16.msra.mxu0 0
  %2032 = vmatprep.subr.bf16.mxu0 0
  %2033 = vmatpush1.bf16.msra.mxu0 0
  %2034 = vmatprep.subr.bf16.mxu0 0
  %2035 = vmatpush1.bf16.msra.mxu0 0
  %2036 = vmatprep.subr.bf16.mxu0 0
  %2037 = vmatpush1.bf16.msra.mxu0 0
  %2038 = vmatprep.subr.bf16.mxu0 0
  %2039 = vmatpush1.bf16.msra.mxu0 0
  %2040 = vmatprep.subr.bf16.mxu0 0
  %2041 = vmatpush1.bf16.msra.mxu0 0
  %2042 = vmatprep.subr.bf16.mxu0 0
  %2043 = vmatpush1.bf16.msra.mxu0 0
  %2044 = vmatprep.subr.bf16.mxu0 0
  %2045 = vmatpush1.bf16.msra.mxu0 0
  %2046 = vmatprep.mubr.bf16.mxu0 0
  %2047 = vmatmul.mubr.bf16.gmra.mrb[0].mxu0 %v2012
  %v2048 = vpop.f32.mrb[0].mxu0
  %v2049 = vadd.f32 %v2002, %v2048
  %v2050 = vpop.f32.mrb[0].mxu0
  %v2051 = vpop.f32.mrb[0].mxu0
  %v2052 = vpop.f32.mrb[0].mxu0
  %2053 = vdwg.mxu0
  %v2054 = vadd.f32 %v2049, %v58
  %v2055 = vmax.f32 %v2054, 0.0
  %v2056 = vpack.c.bf16 %v2055, %v2055
  %v2058 = vsel %vm84, %v2056, 0
  %2060 = vmatprep.subr.bf16.mxu0 0
  %2061 = vmatpush1.bf16.msra.mxu0 %v591
  %2062 = vmatprep.subr.bf16.mxu0 0
  %2063 = vmatpush1.bf16.msra.mxu0 %v592
  %2064 = vmatprep.subr.bf16.mxu0 0
  %2065 = vmatpush1.bf16.msra.mxu0 0
  %2066 = vmatprep.subr.bf16.mxu0 0
  %2067 = vmatpush1.bf16.msra.mxu0 0
  %2068 = vmatprep.subr.bf16.mxu0 0
  %2069 = vmatpush1.bf16.msra.mxu0 0
  %2070 = vmatprep.subr.bf16.mxu0 0
  %2071 = vmatpush1.bf16.msra.mxu0 0
  %2072 = vmatprep.subr.bf16.mxu0 0
  %2073 = vmatpush1.bf16.msra.mxu0 0
  %2074 = vmatprep.subr.bf16.mxu0 0
  %2075 = vmatpush1.bf16.msra.mxu0 0
  %2076 = vmatprep.subr.bf16.mxu0 0
  %2077 = vmatpush1.bf16.msra.mxu0 0
  %2078 = vmatprep.subr.bf16.mxu0 0
  %2079 = vmatpush1.bf16.msra.mxu0 0
  %2080 = vmatprep.subr.bf16.mxu0 0
  %2081 = vmatpush1.bf16.msra.mxu0 0
  %2082 = vmatprep.subr.bf16.mxu0 0
  %2083 = vmatpush1.bf16.msra.mxu0 0
  %2084 = vmatprep.subr.bf16.mxu0 0
  %2085 = vmatpush1.bf16.msra.mxu0 0
  %2086 = vmatprep.subr.bf16.mxu0 0
  %2087 = vmatpush1.bf16.msra.mxu0 0
  %2088 = vmatprep.subr.bf16.mxu0 0
  %2089 = vmatpush1.bf16.msra.mxu0 0
  %2090 = vmatprep.subr.bf16.mxu0 0
  %2091 = vmatpush1.bf16.msra.mxu0 0
  %2092 = vmatprep.mubr.bf16.mxu0 0
  %2093 = vmatmul.mubr.bf16.gmra.mrb[0].mxu0 %v2058
  %v2094 = vpop.f32.mrb[0].mxu0
  %v2095 = vadd.f32 %v1880, %v2094
  %v2096 = vpop.f32.mrb[0].mxu0
  %v2097 = vpop.f32.mrb[0].mxu0
  %v2098 = vpop.f32.mrb[0].mxu0
  %2099 = vdwg.mxu0
  %v2100 = vadd.f32 %v2095, %v54
  %v2101 = vtanh.pop %v2100
  %v2102 = vmul.f32 %v2101, 0.5
  %v2103 = vadd.f32 %v2102, 0.5
  %v2104 = vmul.f32 %v2103, %v1822
  %2106 = vrot.lane.b32.xlu0 %v2101, 64
  %v2107 = vpop.permute.xlu0 %2106
  %v2109 = vmul.f32 %v2103, %v2107
  %2111 = vrot.lane.b32.xlu0 %v2109, 32
  %v2112 = vpop.permute.xlu0 %2111
  %v2114 = vadd.f32 %v2104, %v2112
  %v2115 = vtanh.pop %v2114
  %2117 = vrot.lane.b32.xlu0 %v2115, 64
  %v2118 = vpop.permute.xlu0 %2117
  %v2120 = vmul.f32 %v2103, %v2118
  %v2121 = vlaneseq
  %v2122 = vshrl.u32 %v2121, 7
  %v2123 = vsub.s32 0, %v2122
  %v2124 = vrot.slane %v2120, %v2123
  %2126 = vrot.lane.b32.xlu0 %v2124, 32
  %v2127 = vpop.permute.xlu0 %2126
  %2129 = vst.msk [vmem:[#allocation3 + $0xa] sm:$0x3] %vm459, %v2127
  %v2130 = vpack.c.bf16 %v2120, %v2120
  %2132 = vrot.lane.b32.xlu0 %v2130, 32
  %v2133 = vpop.permute.xlu0 %2132
  %v2135 = vsel %vm84, %v2133, 0
  %2137 = vmatprep.subr.bf16.mxu0 0
  %2138 = vmatpush1.bf16.msra.mxu0 %v327
  %2139 = vmatprep.subr.bf16.mxu0 0
  %2140 = vmatpush1.bf16.msra.mxu0 %v328
  %2141 = vmatprep.subr.bf16.mxu0 0
  %2142 = vmatpush1.bf16.msra.mxu0 0
  %2143 = vmatprep.subr.bf16.mxu0 0
  %2144 = vmatpush1.bf16.msra.mxu0 0
  %2145 = vmatprep.subr.bf16.mxu0 0
  %2146 = vmatpush1.bf16.msra.mxu0 0
  %2147 = vmatprep.subr.bf16.mxu0 0
  %2148 = vmatpush1.bf16.msra.mxu0 0
  %2149 = vmatprep.subr.bf16.mxu0 0
  %2150 = vmatpush1.bf16.msra.mxu0 0
  %2151 = vmatprep.subr.bf16.mxu0 0
  %2152 = vmatpush1.bf16.msra.mxu0 0
  %2153 = vmatprep.subr.bf16.mxu0 0
  %2154 = vmatpush1.bf16.msra.mxu0 0
  %2155 = vmatprep.subr.bf16.mxu0 0
  %2156 = vmatpush1.bf16.msra.mxu0 0
  %2157 = vmatprep.subr.bf16.mxu0 0
  %2158 = vmatpush1.bf16.msra.mxu0 0
  %2159 = vmatprep.subr.bf16.mxu0 0
  %2160 = vmatpush1.bf16.msra.mxu0 0
  %2161 = vmatprep.subr.bf16.mxu0 0
  %2162 = vmatpush1.bf16.msra.mxu0 0
  %2163 = vmatprep.subr.bf16.mxu0 0
  %2164 = vmatpush1.bf16.msra.mxu0 0
  %2165 = vmatprep.subr.bf16.mxu0 0
  %2166 = vmatpush1.bf16.msra.mxu0 0
  %2167 = vmatprep.subr.bf16.mxu0 0
  %2168 = vmatpush1.bf16.msra.mxu0 0
  %2169 = vmatprep.mubr.bf16.mxu0 0
  %2170 = vmatmul.mubr.bf16.gmra.mrb[0].mxu0 %v2135
  %v2171 = vpop.f32.mrb[0].mxu0
  %v2172 = vadd.f32 0.0, %v2171
  %v2173 = vpop.f32.mrb[0].mxu0
  %v2174 = vpop.f32.mrb[0].mxu0
  %v2175 = vpop.f32.mrb[0].mxu0
  %2176 = vdwg.mxu0
  %2177 = vmatprep.subr.bf16.mxu0 0
  %2178 = vmatpush1.bf16.msra.mxu0 %v383
  %2179 = vmatprep.subr.bf16.mxu0 0
  %2180 = vmatpush1.bf16.msra.mxu0 %v384
  %2181 = vmatprep.subr.bf16.mxu0 0
  %2182 = vmatpush1.bf16.msra.mxu0 0
  %2183 = vmatprep.subr.bf16.mxu0 0
  %2184 = vmatpush1.bf16.msra.mxu0 0
  %2185 = vmatprep.subr.bf16.mxu0 0
  %2186 = vmatpush1.bf16.msra.mxu0 0
  %2187 = vmatprep.subr.bf16.mxu0 0
  %2188 = vmatpush1.bf16.msra.mxu0 0
  %2189 = vmatprep.subr.bf16.mxu0 0
  %2190 = vmatpush1.bf16.msra.mxu0 0
  %2191 = vmatprep.subr.bf16.mxu0 0
  %2192 = vmatpush1.bf16.msra.mxu0 0
  %2193 = vmatprep.subr.bf16.mxu0 0
  %2194 = vmatpush1.bf16.msra.mxu0 0
  %2195 = vmatprep.subr.bf16.mxu0 0
  %2196 = vmatpush1.bf16.msra.mxu0 0
  %2197 = vmatprep.subr.bf16.mxu0 0
  %2198 = vmatpush1.bf16.msra.mxu0 0
  %2199 = vmatprep.subr.bf16.mxu0 0
  %2200 = vmatpush1.bf16.msra.mxu0 0
  %2201 = vmatprep.subr.bf16.mxu0 0
  %2202 = vmatpush1.bf16.msra.mxu0 0
  %2203 = vmatprep.subr.bf16.mxu0 0
  %2204 = vmatpush1.bf16.msra.mxu0 0
  %2205 = vmatprep.subr.bf16.mxu0 0
  %2206 = vmatpush1.bf16.msra.mxu0 0
  %2207 = vmatprep.subr.bf16.mxu0 0
  %2208 = vmatpush1.bf16.msra.mxu0 0
  %2209 = vmatprep.mubr.bf16.mxu0 0
  %2210 = vmatmul.mubr.bf16.gmra.mrb[0].mxu0 %v2012
  %v2211 = vpop.f32.mrb[0].mxu0
  %v2212 = vadd.f32 0.0, %v2211
  %v2213 = vpop.f32.mrb[0].mxu0
  %v2214 = vpop.f32.mrb[0].mxu0
  %v2215 = vpop.f32.mrb[0].mxu0
  %2216 = vdwg.mxu0
  %v2218 = vrot.slane %v2212, 4
  %v2220 = vadd.f32 %v315, %v2218
  %v2221 = vtanh.pop %v2220
  %v2222 = vmul.f32 %v2221, 0.5
  %v2223 = vadd.f32 %v2222, 0.5
  %v2225 = vrot.slane %v1945, 6
  %v2227 = vmul.f32 %v2223, %v2225
  %2229 = vrot.lane.b32.xlu0 %v2221, 64
  %v2230 = vpop.permute.xlu0 %2229
  %v2232 = vmul.f32 %v2223, %v2230
  %2234 = vrot.lane.b32.xlu0 %v2232, 32
  %v2235 = vpop.permute.xlu0 %2234
  %v2237 = vadd.f32 %v2227, %v2235
  %v2238 = vtanh.pop %v2237
  %2240 = vrot.lane.b32.xlu0 %v2238, 64
  %v2241 = vpop.permute.xlu0 %2240
  %v2243 = vmul.f32 %v2223, %v2241
  %2245 = vrot.lane.b32.xlu0 %v2243, 32
  %v2246 = vpop.permute.xlu0 %2245
  %2248 = vst.msk [vmem:[#allocation2 + $0x8] sm:$0x30] %vm1083, %v2246
  %v2249 = vpack.c.bf16 %v2243, %v2243
  %v2251 = vshrl.u32 %v2249, 16
  %v2253 = vrot.slane %v2251, 2
  %2254 = vrot.lane.b32.xlu0 %v2253, 32
  %v2255 = vpop.permute.xlu0 %2254
  %v2257 = vsel %vm84, %v2255, 0
  %2259 = vmatprep.subr.bf16.mxu0 0
  %2260 = vmatpush1.bf16.msra.mxu0 %v475
  %2261 = vmatprep.subr.bf16.mxu0 0
  %2262 = vmatpush1.bf16.msra.mxu0 %v476
  %2263 = vmatprep.subr.bf16.mxu0 0
  %2264 = vmatpush1.bf16.msra.mxu0 0
  %2265 = vmatprep.subr.bf16.mxu0 0
  %2266 = vmatpush1.bf16.msra.mxu0 0
  %2267 = vmatprep.subr.bf16.mxu0 0
  %2268 = vmatpush1.bf16.msra.mxu0 0
  %2269 = vmatprep.subr.bf16.mxu0 0
  %2270 = vmatpush1.bf16.msra.mxu0 0
  %2271 = vmatprep.subr.bf16.mxu0 0
  %2272 = vmatpush1.bf16.msra.mxu0 0
  %2273 = vmatprep.subr.bf16.mxu0 0
  %2274 = vmatpush1.bf16.msra.mxu0 0
  %2275 = vmatprep.subr.bf16.mxu0 0
  %2276 = vmatpush1.bf16.msra.mxu0 0
  %2277 = vmatprep.subr.bf16.mxu0 0
  %2278 = vmatpush1.bf16.msra.mxu0 0
  %2279 = vmatprep.subr.bf16.mxu0 0
  %2280 = vmatpush1.bf16.msra.mxu0 0
  %2281 = vmatprep.subr.bf16.mxu0 0
  %2282 = vmatpush1.bf16.msra.mxu0 0
  %2283 = vmatprep.subr.bf16.mxu0 0
  %2284 = vmatpush1.bf16.msra.mxu0 0
  %2285 = vmatprep.subr.bf16.mxu0 0
  %2286 = vmatpush1.bf16.msra.mxu0 0
  %2287 = vmatprep.subr.bf16.mxu0 0
  %2288 = vmatpush1.bf16.msra.mxu0 0
  %2289 = vmatprep.subr.bf16.mxu0 0
  %2290 = vmatpush1.bf16.msra.mxu0 0
  %2291 = vmatprep.mubr.bf16.mxu0 0
  %2292 = vmatmul.mubr.bf16.gmra.mrb[0].mxu0 %v2257
  %v2293 = vpop.f32.mrb[0].mxu0
  %v2294 = vadd.f32 0.0, %v2293
  %v2295 = vpop.f32.mrb[0].mxu0
  %v2296 = vpop.f32.mrb[0].mxu0
  %v2297 = vpop.f32.mrb[0].mxu0
  %2298 = vdwg.mxu0
  %v2300 = vrot.slane %v2249, 2
  %2301 = vrot.lane.b32.xlu0 %v2300, 32
  %v2302 = vpop.permute.xlu0 %2301
  %v2304 = vsel %vm84, %v2302, 0
  %2306 = vmatprep.subr.bf16.mxu0 0
  %2307 = vmatpush1.bf16.msra.mxu0 %v533
  %2308 = vmatprep.subr.bf16.mxu0 0
  %2309 = vmatpush1.bf16.msra.mxu0 %v534
  %2310 = vmatprep.subr.bf16.mxu0 0
  %2311 = vmatpush1.bf16.msra.mxu0 0
  %2312 = vmatprep.subr.bf16.mxu0 0
  %2313 = vmatpush1.bf16.msra.mxu0 0
  %2314 = vmatprep.subr.bf16.mxu0 0
  %2315 = vmatpush1.bf16.msra.mxu0 0
  %2316 = vmatprep.subr.bf16.mxu0 0
  %2317 = vmatpush1.bf16.msra.mxu0 0
  %2318 = vmatprep.subr.bf16.mxu0 0
  %2319 = vmatpush1.bf16.msra.mxu0 0
  %2320 = vmatprep.subr.bf16.mxu0 0
  %2321 = vmatpush1.bf16.msra.mxu0 0
  %2322 = vmatprep.subr.bf16.mxu0 0
  %2323 = vmatpush1.bf16.msra.mxu0 0
  %2324 = vmatprep.subr.bf16.mxu0 0
  %2325 = vmatpush1.bf16.msra.mxu0 0
  %2326 = vmatprep.subr.bf16.mxu0 0
  %2327 = vmatpush1.bf16.msra.mxu0 0
  %2328 = vmatprep.subr.bf16.mxu0 0
  %2329 = vmatpush1.bf16.msra.mxu0 0
  %2330 = vmatprep.subr.bf16.mxu0 0
  %2331 = vmatpush1.bf16.msra.mxu0 0
  %2332 = vmatprep.subr.bf16.mxu0 0
  %2333 = vmatpush1.bf16.msra.mxu0 0
  %2334 = vmatprep.subr.bf16.mxu0 0
  %2335 = vmatpush1.bf16.msra.mxu0 0
  %2336 = vmatprep.subr.bf16.mxu0 0
  %2337 = vmatpush1.bf16.msra.mxu0 0
  %2338 = vmatprep.mubr.bf16.mxu0 0
  %2339 = vmatmul.mubr.bf16.gmra.mrb[0].mxu0 %v2304
  %v2340 = vpop.f32.mrb[0].mxu0
  %v2341 = vadd.f32 %v2294, %v2340
  %v2342 = vpop.f32.mrb[0].mxu0
  %v2343 = vpop.f32.mrb[0].mxu0
  %v2344 = vpop.f32.mrb[0].mxu0
  %2345 = vdwg.mxu0
  %v2346 = vadd.f32 %v2341, %v58
  %v2347 = vmax.f32 %v2346, 0.0
  %v2348 = vpack.c.bf16 %v2347, %v2347
  %v2350 = vsel %vm84, %v2348, 0
  %2352 = vmatprep.subr.bf16.mxu0 0
  %2353 = vmatpush1.bf16.msra.mxu0 %v591
  %2354 = vmatprep.subr.bf16.mxu0 0
  %2355 = vmatpush1.bf16.msra.mxu0 %v592
  %2356 = vmatprep.subr.bf16.mxu0 0
  %2357 = vmatpush1.bf16.msra.mxu0 0
  %2358 = vmatprep.subr.bf16.mxu0 0
  %2359 = vmatpush1.bf16.msra.mxu0 0
  %2360 = vmatprep.subr.bf16.mxu0 0
  %2361 = vmatpush1.bf16.msra.mxu0 0
  %2362 = vmatprep.subr.bf16.mxu0 0
  %2363 = vmatpush1.bf16.msra.mxu0 0
  %2364 = vmatprep.subr.bf16.mxu0 0
  %2365 = vmatpush1.bf16.msra.mxu0 0
  %2366 = vmatprep.subr.bf16.mxu0 0
  %2367 = vmatpush1.bf16.msra.mxu0 0
  %2368 = vmatprep.subr.bf16.mxu0 0
  %2369 = vmatpush1.bf16.msra.mxu0 0
  %2370 = vmatprep.subr.bf16.mxu0 0
  %2371 = vmatpush1.bf16.msra.mxu0 0
  %2372 = vmatprep.subr.bf16.mxu0 0
  %2373 = vmatpush1.bf16.msra.mxu0 0
  %2374 = vmatprep.subr.bf16.mxu0 0
  %2375 = vmatpush1.bf16.msra.mxu0 0
  %2376 = vmatprep.subr.bf16.mxu0 0
  %2377 = vmatpush1.bf16.msra.mxu0 0
  %2378 = vmatprep.subr.bf16.mxu0 0
  %2379 = vmatpush1.bf16.msra.mxu0 0
  %2380 = vmatprep.subr.bf16.mxu0 0
  %2381 = vmatpush1.bf16.msra.mxu0 0
  %2382 = vmatprep.subr.bf16.mxu0 0
  %2383 = vmatpush1.bf16.msra.mxu0 0
  %2384 = vmatprep.mubr.bf16.mxu0 0
  %2385 = vmatmul.mubr.bf16.gmra.mrb[0].mxu0 %v2350
  %v2386 = vpop.f32.mrb[0].mxu0
  %v2387 = vadd.f32 %v2172, %v2386
  %v2388 = vpop.f32.mrb[0].mxu0
  %v2389 = vpop.f32.mrb[0].mxu0
  %v2390 = vpop.f32.mrb[0].mxu0
  %2391 = vdwg.mxu0
  %v2392 = vadd.f32 %v2387, %v54
  %v2393 = vtanh.pop %v2392
  %v2394 = vmul.f32 %v2393, 0.5
  %v2395 = vadd.f32 %v2394, 0.5
  %v2396 = vmul.f32 %v2395, %v2114
  %2398 = vrot.lane.b32.xlu0 %v2393, 64
  %v2399 = vpop.permute.xlu0 %2398
  %v2401 = vmul.f32 %v2395, %v2399
  %2403 = vrot.lane.b32.xlu0 %v2401, 32
  %v2404 = vpop.permute.xlu0 %2403
  %v2406 = vadd.f32 %v2396, %v2404
  %v2407 = vtanh.pop %v2406
  %2409 = vrot.lane.b32.xlu0 %v2407, 64
  %v2410 = vpop.permute.xlu0 %2409
  %v2412 = vmul.f32 %v2395, %v2410
  %v2413 = vlaneseq
  %v2414 = vshrl.u32 %v2413, 7
  %v2415 = vsub.s32 0, %v2414
  %v2416 = vrot.slane %v2412, %v2415
  %2418 = vrot.lane.b32.xlu0 %v2416, 32
  %v2419 = vpop.permute.xlu0 %2418
  %2421 = vst.msk [vmem:[#allocation3 + $0xc] sm:$0x3] %vm459, %v2419
  %v2422 = vpack.c.bf16 %v2412, %v2412
  %2424 = vrot.lane.b32.xlu0 %v2422, 32
  %v2425 = vpop.permute.xlu0 %2424
  %v2427 = vsel %vm84, %v2425, 0
  %2429 = vmatprep.subr.bf16.mxu0 0
  %2430 = vmatpush1.bf16.msra.mxu0 %v327
  %2431 = vmatprep.subr.bf16.mxu0 0
  %2432 = vmatpush1.bf16.msra.mxu0 %v328
  %2433 = vmatprep.subr.bf16.mxu0 0
  %2434 = vmatpush1.bf16.msra.mxu0 0
  %2435 = vmatprep.subr.bf16.mxu0 0
  %2436 = vmatpush1.bf16.msra.mxu0 0
  %2437 = vmatprep.subr.bf16.mxu0 0
  %2438 = vmatpush1.bf16.msra.mxu0 0
  %2439 = vmatprep.subr.bf16.mxu0 0
  %2440 = vmatpush1.bf16.msra.mxu0 0
  %2441 = vmatprep.subr.bf16.mxu0 0
  %2442 = vmatpush1.bf16.msra.mxu0 0
  %2443 = vmatprep.subr.bf16.mxu0 0
  %2444 = vmatpush1.bf16.msra.mxu0 0
  %2445 = vmatprep.subr.bf16.mxu0 0
  %2446 = vmatpush1.bf16.msra.mxu0 0
  %2447 = vmatprep.subr.bf16.mxu0 0
  %2448 = vmatpush1.bf16.msra.mxu0 0
  %2449 = vmatprep.subr.bf16.mxu0 0
  %2450 = vmatpush1.bf16.msra.mxu0 0
  %2451 = vmatprep.subr.bf16.mxu0 0
  %2452 = vmatpush1.bf16.msra.mxu0 0
  %2453 = vmatprep.subr.bf16.mxu0 0
  %2454 = vmatpush1.bf16.msra.mxu0 0
  %2455 = vmatprep.subr.bf16.mxu0 0
  %2456 = vmatpush1.bf16.msra.mxu0 0
  %2457 = vmatprep.subr.bf16.mxu0 0
  %2458 = vmatpush1.bf16.msra.mxu0 0
  %2459 = vmatprep.subr.bf16.mxu0 0
  %2460 = vmatpush1.bf16.msra.mxu0 0
  %2461 = vmatprep.mubr.bf16.mxu0 0
  %2462 = vmatmul.mubr.bf16.gmra.mrb[0].mxu0 %v2427
  %v2463 = vpop.f32.mrb[0].mxu0
  %v2464 = vadd.f32 0.0, %v2463
  %v2465 = vpop.f32.mrb[0].mxu0
  %v2466 = vpop.f32.mrb[0].mxu0
  %v2467 = vpop.f32.mrb[0].mxu0
  %2468 = vdwg.mxu0
  %2469 = vmatprep.subr.bf16.mxu0 0
  %2470 = vmatpush1.bf16.msra.mxu0 %v383
  %2471 = vmatprep.subr.bf16.mxu0 0
  %2472 = vmatpush1.bf16.msra.mxu0 %v384
  %2473 = vmatprep.subr.bf16.mxu0 0
  %2474 = vmatpush1.bf16.msra.mxu0 0
  %2475 = vmatprep.subr.bf16.mxu0 0
  %2476 = vmatpush1.bf16.msra.mxu0 0
  %2477 = vmatprep.subr.bf16.mxu0 0
  %2478 = vmatpush1.bf16.msra.mxu0 0
  %2479 = vmatprep.subr.bf16.mxu0 0
  %2480 = vmatpush1.bf16.msra.mxu0 0
  %2481 = vmatprep.subr.bf16.mxu0 0
  %2482 = vmatpush1.bf16.msra.mxu0 0
  %2483 = vmatprep.subr.bf16.mxu0 0
  %2484 = vmatpush1.bf16.msra.mxu0 0
  %2485 = vmatprep.subr.bf16.mxu0 0
  %2486 = vmatpush1.bf16.msra.mxu0 0
  %2487 = vmatprep.subr.bf16.mxu0 0
  %2488 = vmatpush1.bf16.msra.mxu0 0
  %2489 = vmatprep.subr.bf16.mxu0 0
  %2490 = vmatpush1.bf16.msra.mxu0 0
  %2491 = vmatprep.subr.bf16.mxu0 0
  %2492 = vmatpush1.bf16.msra.mxu0 0
  %2493 = vmatprep.subr.bf16.mxu0 0
  %2494 = vmatpush1.bf16.msra.mxu0 0
  %2495 = vmatprep.subr.bf16.mxu0 0
  %2496 = vmatpush1.bf16.msra.mxu0 0
  %2497 = vmatprep.subr.bf16.mxu0 0
  %2498 = vmatpush1.bf16.msra.mxu0 0
  %2499 = vmatprep.subr.bf16.mxu0 0
  %2500 = vmatpush1.bf16.msra.mxu0 0
  %2501 = vmatprep.mubr.bf16.mxu0 0
  %2502 = vmatmul.mubr.bf16.gmra.mrb[0].mxu0 %v2304
  %v2503 = vpop.f32.mrb[0].mxu0
  %v2504 = vadd.f32 0.0, %v2503
  %v2505 = vpop.f32.mrb[0].mxu0
  %v2506 = vpop.f32.mrb[0].mxu0
  %v2507 = vpop.f32.mrb[0].mxu0
  %2508 = vdwg.mxu0
  %v2510 = vrot.slane %v2504, 2
  %v2512 = vadd.f32 %v315, %v2510
  %v2513 = vtanh.pop %v2512
  %v2514 = vmul.f32 %v2513, 0.5
  %v2515 = vadd.f32 %v2514, 0.5
  %v2517 = vrot.slane %v2237, 6
  %v2519 = vmul.f32 %v2515, %v2517
  %2521 = vrot.lane.b32.xlu0 %v2513, 64
  %v2522 = vpop.permute.xlu0 %2521
  %v2524 = vmul.f32 %v2515, %v2522
  %2526 = vrot.lane.b32.xlu0 %v2524, 32
  %v2527 = vpop.permute.xlu0 %2526
  %v2529 = vadd.f32 %v2519, %v2527
  %v2530 = vtanh.pop %v2529
  %2532 = vrot.lane.b32.xlu0 %v2530, 64
  %v2533 = vpop.permute.xlu0 %2532
  %v2535 = vmul.f32 %v2515, %v2533
  %2537 = vrot.lane.b32.xlu0 %v2535, 32
  %v2538 = vpop.permute.xlu0 %2537
  %2540 = vst.msk [vmem:[#allocation2 + $0x8] sm:$0xc0] %vm1376, %v2538
  %v2541 = vpack.c.bf16 %v2535, %v2535
  %v2543 = vshrl.u32 %v2541, 16
  %v2545 = vrot.slane %v2543, 3
  %2546 = vrot.lane.b32.xlu0 %v2545, 32
  %v2547 = vpop.permute.xlu0 %2546
  %v2549 = vsel %vm84, %v2547, 0
  %2551 = vmatprep.subr.bf16.mxu0 0
  %2552 = vmatpush1.bf16.msra.mxu0 %v475
  %2553 = vmatprep.subr.bf16.mxu0 0
  %2554 = vmatpush1.bf16.msra.mxu0 %v476
  %2555 = vmatprep.subr.bf16.mxu0 0
  %2556 = vmatpush1.bf16.msra.mxu0 0
  %2557 = vmatprep.subr.bf16.mxu0 0
  %2558 = vmatpush1.bf16.msra.mxu0 0
  %2559 = vmatprep.subr.bf16.mxu0 0
  %2560 = vmatpush1.bf16.msra.mxu0 0
  %2561 = vmatprep.subr.bf16.mxu0 0
  %2562 = vmatpush1.bf16.msra.mxu0 0
  %2563 = vmatprep.subr.bf16.mxu0 0
  %2564 = vmatpush1.bf16.msra.mxu0 0
  %2565 = vmatprep.subr.bf16.mxu0 0
  %2566 = vmatpush1.bf16.msra.mxu0 0
  %2567 = vmatprep.subr.bf16.mxu0 0
  %2568 = vmatpush1.bf16.msra.mxu0 0
  %2569 = vmatprep.subr.bf16.mxu0 0
  %2570 = vmatpush1.bf16.msra.mxu0 0
  %2571 = vmatprep.subr.bf16.mxu0 0
  %2572 = vmatpush1.bf16.msra.mxu0 0
  %2573 = vmatprep.subr.bf16.mxu0 0
  %2574 = vmatpush1.bf16.msra.mxu0 0
  %2575 = vmatprep.subr.bf16.mxu0 0
  %2576 = vmatpush1.bf16.msra.mxu0 0
  %2577 = vmatprep.subr.bf16.mxu0 0
  %2578 = vmatpush1.bf16.msra.mxu0 0
  %2579 = vmatprep.subr.bf16.mxu0 0
  %2580 = vmatpush1.bf16.msra.mxu0 0
  %2581 = vmatprep.subr.bf16.mxu0 0
  %2582 = vmatpush1.bf16.msra.mxu0 0
  %2583 = vmatprep.mubr.bf16.mxu0 0
  %2584 = vmatmul.mubr.bf16.gmra.mrb[0].mxu0 %v2549
  %v2585 = vpop.f32.mrb[0].mxu0
  %v2586 = vadd.f32 0.0, %v2585
  %v2587 = vpop.f32.mrb[0].mxu0
  %v2588 = vpop.f32.mrb[0].mxu0
  %v2589 = vpop.f32.mrb[0].mxu0
  %2590 = vdwg.mxu0
  %v2592 = vrot.slane %v2541, 3
  %2593 = vrot.lane.b32.xlu0 %v2592, 32
  %v2594 = vpop.permute.xlu0 %2593
  %v2596 = vsel %vm84, %v2594, 0
  %2598 = vmatprep.subr.bf16.mxu0 0
  %2599 = vmatpush1.bf16.msra.mxu0 %v533
  %2600 = vmatprep.subr.bf16.mxu0 0
  %2601 = vmatpush1.bf16.msra.mxu0 %v534
  %2602 = vmatprep.subr.bf16.mxu0 0
  %2603 = vmatpush1.bf16.msra.mxu0 0
  %2604 = vmatprep.subr.bf16.mxu0 0
  %2605 = vmatpush1.bf16.msra.mxu0 0
  %2606 = vmatprep.subr.bf16.mxu0 0
  %2607 = vmatpush1.bf16.msra.mxu0 0
  %2608 = vmatprep.subr.bf16.mxu0 0
  %2609 = vmatpush1.bf16.msra.mxu0 0
  %2610 = vmatprep.subr.bf16.mxu0 0
  %2611 = vmatpush1.bf16.msra.mxu0 0
  %2612 = vmatprep.subr.bf16.mxu0 0
  %2613 = vmatpush1.bf16.msra.mxu0 0
  %2614 = vmatprep.subr.bf16.mxu0 0
  %2615 = vmatpush1.bf16.msra.mxu0 0
  %2616 = vmatprep.subr.bf16.mxu0 0
  %2617 = vmatpush1.bf16.msra.mxu0 0
  %2618 = vmatprep.subr.bf16.mxu0 0
  %2619 = vmatpush1.bf16.msra.mxu0 0
  %2620 = vmatprep.subr.bf16.mxu0 0
  %2621 = vmatpush1.bf16.msra.mxu0 0
  %2622 = vmatprep.subr.bf16.mxu0 0
  %2623 = vmatpush1.bf16.msra.mxu0 0
  %2624 = vmatprep.subr.bf16.mxu0 0
  %2625 = vmatpush1.bf16.msra.mxu0 0
  %2626 = vmatprep.subr.bf16.mxu0 0
  %2627 = vmatpush1.bf16.msra.mxu0 0
  %2628 = vmatprep.subr.bf16.mxu0 0
  %2629 = vmatpush1.bf16.msra.mxu0 0
  %2630 = vmatprep.mubr.bf16.mxu0 0
  %2631 = vmatmul.mubr.bf16.gmra.mrb[0].mxu0 %v2596
  %v2632 = vpop.f32.mrb[0].mxu0
  %v2633 = vadd.f32 %v2586, %v2632
  %v2634 = vpop.f32.mrb[0].mxu0
  %v2635 = vpop.f32.mrb[0].mxu0
  %v2636 = vpop.f32.mrb[0].mxu0
  %2637 = vdwg.mxu0
  %v2638 = vadd.f32 %v2633, %v58
  %v2639 = vmax.f32 %v2638, 0.0
  %v2640 = vpack.c.bf16 %v2639, %v2639
  %v2642 = vsel %vm84, %v2640, 0
  %2644 = vmatprep.subr.bf16.mxu0 0
  %2645 = vmatpush1.bf16.msra.mxu0 %v591
  %2646 = vmatprep.subr.bf16.mxu0 0
  %2647 = vmatpush1.bf16.msra.mxu0 %v592
  %2648 = vmatprep.subr.bf16.mxu0 0
  %2649 = vmatpush1.bf16.msra.mxu0 0
  %2650 = vmatprep.subr.bf16.mxu0 0
  %2651 = vmatpush1.bf16.msra.mxu0 0
  %2652 = vmatprep.subr.bf16.mxu0 0
  %2653 = vmatpush1.bf16.msra.mxu0 0
  %2654 = vmatprep.subr.bf16.mxu0 0
  %2655 = vmatpush1.bf16.msra.mxu0 0
  %2656 = vmatprep.subr.bf16.mxu0 0
  %2657 = vmatpush1.bf16.msra.mxu0 0
  %2658 = vmatprep.subr.bf16.mxu0 0
  %2659 = vmatpush1.bf16.msra.mxu0 0
  %2660 = vmatprep.subr.bf16.mxu0 0
  %2661 = vmatpush1.bf16.msra.mxu0 0
  %2662 = vmatprep.subr.bf16.mxu0 0
  %2663 = vmatpush1.bf16.msra.mxu0 0
  %2664 = vmatprep.subr.bf16.mxu0 0
  %2665 = vmatpush1.bf16.msra.mxu0 0
  %2666 = vmatprep.subr.bf16.mxu0 0
  %2667 = vmatpush1.bf16.msra.mxu0 0
  %2668 = vmatprep.subr.bf16.mxu0 0
  %2669 = vmatpush1.bf16.msra.mxu0 0
  %2670 = vmatprep.subr.bf16.mxu0 0
  %2671 = vmatpush1.bf16.msra.mxu0 0
  %2672 = vmatprep.subr.bf16.mxu0 0
  %2673 = vmatpush1.bf16.msra.mxu0 0
  %2674 = vmatprep.subr.bf16.mxu0 0
  %2675 = vmatpush1.bf16.msra.mxu0 0
  %2676 = vmatprep.mubr.bf16.mxu0 0
  %2677 = vmatmul.mubr.bf16.gmra.mrb[0].mxu0 %v2642
  %v2678 = vpop.f32.mrb[0].mxu0
  %v2679 = vadd.f32 %v2464, %v2678
  %v2680 = vpop.f32.mrb[0].mxu0
  %v2681 = vpop.f32.mrb[0].mxu0
  %v2682 = vpop.f32.mrb[0].mxu0
  %2683 = vdwg.mxu0
  %v2684 = vadd.f32 %v2679, %v54
  %v2685 = vtanh.pop %v2684
  %v2686 = vmul.f32 %v2685, 0.5
  %v2687 = vadd.f32 %v2686, 0.5
  %v2688 = vmul.f32 %v2687, %v2406
  %2690 = vrot.lane.b32.xlu0 %v2685, 64
  %v2691 = vpop.permute.xlu0 %2690
  %v2693 = vmul.f32 %v2687, %v2691
  %2695 = vrot.lane.b32.xlu0 %v2693, 32
  %v2696 = vpop.permute.xlu0 %2695
  %v2698 = vadd.f32 %v2688, %v2696
  %v2699 = vtanh.pop %v2698
  %2701 = vrot.lane.b32.xlu0 %v2699, 64
  %v2702 = vpop.permute.xlu0 %2701
  %v2704 = vmul.f32 %v2687, %v2702
  %v2705 = vlaneseq
  %v2706 = vshrl.u32 %v2705, 7
  %v2707 = vsub.s32 0, %v2706
  %v2708 = vrot.slane %v2704, %v2707
  %2710 = vrot.lane.b32.xlu0 %v2708, 32
  %v2711 = vpop.permute.xlu0 %2710
  %2713 = vst.msk [vmem:[#allocation3 + $0xe] sm:$0x3] %vm459, %v2711
  %v2714 = vld [vmem:[%s1 + $0x58] sm:$0xf]
  %v2715 = vld [vmem:[%s1 + $0x5c] sm:$0xf]
  %v2716 = vld [vmem:[%s1 + $0x60] sm:$0xf]
  %v2717 = vld [vmem:[%s1 + $0x64] sm:$0xf]
  %v2718 = vld [vmem:[%s1 + $0x68] sm:$0xf]
  %v2719 = vld [vmem:[%s1 + $0x6c] sm:$0xf]
  %v2720 = vld [vmem:[%s1 + $0x70] sm:$0xf]
  %v2721 = vld [vmem:[%s1 + $0x74] sm:$0xf]
  %v2722 = vld [vmem:[%s1 + $0x78] sm:$0xf]
  %v2723 = vld [vmem:[%s1 + $0x7c] sm:$0xf]
  %v2724 = vld [vmem:[%s1 + $0x80] sm:$0xf]
  %v2725 = vld [vmem:[%s1 + $0x84] sm:$0xf]
  %v2726 = vld [vmem:[%s2 + $0x6] sm:$0x1]
  %v2727 = vld [vmem:[%s2 + $0x7] sm:$0x1]
  %v2728 = vld [vmem:[#allocation2] sm:$0xff]
  %v2729 = vld [vmem:[#allocation2 + $0x8] sm:$0xff]
  %v2730 = vpack.c.bf16 %v2729, %v2728
  %v2731 = vld [vmem:[#allocation3] sm:$0xff]
  %v2732 = vld [vmem:[#allocation3 + $0x8] sm:$0xff]
  %v2733 = vpack.c.bf16 %v2732, %v2731
  %v2738 = vunpack.c.l.b16 %v2718
  %v2739 = vunpack.c.l.b16 %v2719
  %v2740 = vunpack.c.l.b16 %v2720
  %v2741 = vunpack.c.l.b16 %v2721
  %v2742 = vpack.c.b16 %v2739, %v2738
  %v2743 = vpack.c.b16 %v2741, %v2740
  %v2747 = vsel %vm84, %v2733, 0
  %2749 = vmatprep.subr.bf16.mxu0 0
  %2750 = vmatpush1.bf16.msra.mxu0 %v2742
  %2751 = vmatprep.subr.bf16.mxu0 0
  %2752 = vmatpush1.bf16.msra.mxu0 %v2743
  %2753 = vmatprep.subr.bf16.mxu0 0
  %2754 = vmatpush1.bf16.msra.mxu0 0
  %2755 = vmatprep.subr.bf16.mxu0 0
  %2756 = vmatpush1.bf16.msra.mxu0 0
  %2757 = vmatprep.subr.bf16.mxu0 0
  %2758 = vmatpush1.bf16.msra.mxu0 0
  %2759 = vmatprep.subr.bf16.mxu0 0
  %2760 = vmatpush1.bf16.msra.mxu0 0
  %2761 = vmatprep.subr.bf16.mxu0 0
  %2762 = vmatpush1.bf16.msra.mxu0 0
  %2763 = vmatprep.subr.bf16.mxu0 0
  %2764 = vmatpush1.bf16.msra.mxu0 0
  %2765 = vmatprep.subr.bf16.mxu0 0
  %2766 = vmatpush1.bf16.msra.mxu0 0
  %2767 = vmatprep.subr.bf16.mxu0 0
  %2768 = vmatpush1.bf16.msra.mxu0 0
  %2769 = vmatprep.subr.bf16.mxu0 0
  %2770 = vmatpush1.bf16.msra.mxu0 0
  %2771 = vmatprep.subr.bf16.mxu0 0
  %2772 = vmatpush1.bf16.msra.mxu0 0
  %2773 = vmatprep.subr.bf16.mxu0 0
  %2774 = vmatpush1.bf16.msra.mxu0 0
  %2775 = vmatprep.subr.bf16.mxu0 0
  %2776 = vmatpush1.bf16.msra.mxu0 0
  %2777 = vmatprep.subr.bf16.mxu0 0
  %2778 = vmatpush1.bf16.msra.mxu0 0
  %2779 = vmatprep.subr.bf16.mxu0 0
  %2780 = vmatpush1.bf16.msra.mxu0 0
  %2781 = vmatprep.mubr.bf16.mxu0 0
  %2782 = vmatmul.mubr.bf16.gmra.mrb[0].mxu0 %v2747
  %v2783 = vpop.f32.mrb[0].mxu0
  %v2784 = vadd.f32 0.0, %v2783
  %v2785 = vpop.f32.mrb[0].mxu0
  %v2786 = vpop.f32.mrb[0].mxu0
  %v2787 = vadd.f32 0.0, %v2786
  %v2788 = vpop.f32.mrb[0].mxu0
  %2789 = vdwg.mxu0
  %v2794 = vunpack.c.l.b16 %v2714
  %v2795 = vunpack.c.l.b16 %v2715
  %v2796 = vunpack.c.l.b16 %v2716
  %v2797 = vunpack.c.l.b16 %v2717
  %v2798 = vpack.c.b16 %v2795, %v2794
  %v2799 = vpack.c.b16 %v2797, %v2796
  %v2803 = vsel %vm84, %v2730, 0
  %2805 = vmatprep.subr.bf16.mxu0 0
  %2806 = vmatpush1.bf16.msra.mxu0 %v2798
  %2807 = vmatprep.subr.bf16.mxu0 0
  %2808 = vmatpush1.bf16.msra.mxu0 %v2799
  %2809 = vmatprep.subr.bf16.mxu0 0
  %2810 = vmatpush1.bf16.msra.mxu0 0
  %2811 = vmatprep.subr.bf16.mxu0 0
  %2812 = vmatpush1.bf16.msra.mxu0 0
  %2813 = vmatprep.subr.bf16.mxu0 0
  %2814 = vmatpush1.bf16.msra.mxu0 0
  %2815 = vmatprep.subr.bf16.mxu0 0
  %2816 = vmatpush1.bf16.msra.mxu0 0
  %2817 = vmatprep.subr.bf16.mxu0 0
  %2818 = vmatpush1.bf16.msra.mxu0 0
  %2819 = vmatprep.subr.bf16.mxu0 0
  %2820 = vmatpush1.bf16.msra.mxu0 0
  %2821 = vmatprep.subr.bf16.mxu0 0
  %2822 = vmatpush1.bf16.msra.mxu0 0
  %2823 = vmatprep.subr.bf16.mxu0 0
  %2824 = vmatpush1.bf16.msra.mxu0 0
  %2825 = vmatprep.subr.bf16.mxu0 0
  %2826 = vmatpush1.bf16.msra.mxu0 0
  %2827 = vmatprep.subr.bf16.mxu0 0
  %2828 = vmatpush1.bf16.msra.mxu0 0
  %2829 = vmatprep.subr.bf16.mxu0 0
  %2830 = vmatpush1.bf16.msra.mxu0 0
  %2831 = vmatprep.subr.bf16.mxu0 0
  %2832 = vmatpush1.bf16.msra.mxu0 0
  %2833 = vmatprep.subr.bf16.mxu0 0
  %2834 = vmatpush1.bf16.msra.mxu0 0
  %2835 = vmatprep.subr.bf16.mxu0 0
  %2836 = vmatpush1.bf16.msra.mxu0 0
  %2837 = vmatprep.mubr.bf16.mxu0 0
  %2838 = vmatmul.mubr.bf16.gmra.mrb[0].mxu0 %v2803
  %v2839 = vpop.f32.mrb[0].mxu0
  %v2840 = vadd.f32 %v2784, %v2839
  %v2841 = vpop.f32.mrb[0].mxu0
  %v2842 = vpop.f32.mrb[0].mxu0
  %v2843 = vadd.f32 %v2787, %v2842
  %v2844 = vpop.f32.mrb[0].mxu0
  %2845 = vdwg.mxu0
  %v2846 = vlaneseq
  %v2847 = vshrl.u32 %v2846, 7
  %v2848 = vsub.s32 0, %v2847
  %v2849 = vrot.slane %v2726, %v2848
  %v2850 = vadd.f32 %v2840, %v2849
  %v2851 = vadd.f32 %v2843, %v2849
  %v2852 = vmax.f32 %v2850, 0.0
  %v2853 = vmax.f32 %v2851, 0.0
  %v2854 = vpack.c.bf16 %v2853, %v2852
  %v2855 = vlaneseq
  %v2856 = vshrl.u32 %v2855, 7
  %v2857 = vsub.s32 0, %v2856
  %v2858 = vrot.slane %v2727, %v2857
  %v2863 = vunpack.c.l.b16 %v2722
  %v2864 = vunpack.c.l.b16 %v2723
  %v2865 = vunpack.c.l.b16 %v2724
  %v2866 = vunpack.c.l.b16 %v2725
  %v2867 = vpack.c.b16 %v2864, %v2863
  %v2868 = vpack.c.b16 %v2866, %v2865
  %v2872 = vsel %vm84, %v2854, 0
  %2874 = vmatprep.subr.bf16.mxu0 0
  %2875 = vmatpush1.bf16.msra.mxu0 %v2867
  %2876 = vmatprep.subr.bf16.mxu0 0
  %2877 = vmatpush1.bf16.msra.mxu0 %v2868
  %2878 = vmatprep.subr.bf16.mxu0 0
  %2879 = vmatpush1.bf16.msra.mxu0 0
  %2880 = vmatprep.subr.bf16.mxu0 0
  %2881 = vmatpush1.bf16.msra.mxu0 0
  %2882 = vmatprep.subr.bf16.mxu0 0
  %2883 = vmatpush1.bf16.msra.mxu0 0
  %2884 = vmatprep.subr.bf16.mxu0 0
  %2885 = vmatpush1.bf16.msra.mxu0 0
  %2886 = vmatprep.subr.bf16.mxu0 0
  %2887 = vmatpush1.bf16.msra.mxu0 0
  %2888 = vmatprep.subr.bf16.mxu0 0
  %2889 = vmatpush1.bf16.msra.mxu0 0
  %2890 = vmatprep.subr.bf16.mxu0 0
  %2891 = vmatpush1.bf16.msra.mxu0 0
  %2892 = vmatprep.subr.bf16.mxu0 0
  %2893 = vmatpush1.bf16.msra.mxu0 0
  %2894 = vmatprep.subr.bf16.mxu0 0
  %2895 = vmatpush1.bf16.msra.mxu0 0
  %2896 = vmatprep.subr.bf16.mxu0 0
  %2897 = vmatpush1.bf16.msra.mxu0 0
  %2898 = vmatprep.subr.bf16.mxu0 0
  %2899 = vmatpush1.bf16.msra.mxu0 0
  %2900 = vmatprep.subr.bf16.mxu0 0
  %2901 = vmatpush1.bf16.msra.mxu0 0
  %2902 = vmatprep.subr.bf16.mxu0 0
  %2903 = vmatpush1.bf16.msra.mxu0 0
  %2904 = vmatprep.subr.bf16.mxu0 0
  %2905 = vmatpush1.bf16.msra.mxu0 0
  %2906 = vmatprep.mubr.bf16.mxu0 0
  %2907 = vmatmul.mubr.bf16.gmra.mrb[0].mxu0 %v2872
  %v2908 = vpop.f32.mrb[0].mxu0
  %v2909 = vadd.f32 %v2858, %v2908
  %v2910 = vpop.f32.mrb[0].mxu0
  %v2911 = vpop.f32.mrb[0].mxu0
  %v2912 = vadd.f32 %v2858, %v2911
  %v2913 = vpop.f32.mrb[0].mxu0
  %2914 = vdwg.mxu0
  %v2915 = vmax.f32 %v2909, 0.0
  %v2916 = vmax.f32 %v2912, 0.0
  %vm2917 = vcmask 64512
  %2918 = vst.msk [vmem:[%s3] sm:$0xff] %vm2917, %v2915
  %2919 = vst.msk [vmem:[%s3 + $0x8] sm:$0xff] %vm2917, %v2916
  // Predicated region
  $region14: #{tpu_custom_call.1} parent=0 // pred_check
    _
  $region15: #{tpu_custom_call.1} parent=0 // pred_check_branch
    %2921 = sbr.rel (0) target = $region17
  $region16: #{tpu_custom_call.1} parent=0 // pred_region
    _
  $region17: #{tpu_custom_call.1} parent=0 // pred_fallthru
    _
  // Predicated region
  $region18: #{tpu_custom_call.1} parent=0 // pred_check
    _
  $region19: #{tpu_custom_call.1} parent=0 // pred_check_branch
    %2923 = sbr.rel (0) target = $region21
  $region20: #{tpu_custom_call.1} parent=0 // pred_region
    _
  $region21: #{tpu_custom_call.1} parent=0 // pred_fallthru
    _

</llo_original>
